<compile_context>
chip_gen: v5e
topology: v5e:2x2
jax: 0.10.0
libtpu: 0.0.40
codegen_flags: <defaults>
</compile_context>

<pallas_src>
import math
from functools import partial

import numpy as np
import jax
import jax.numpy as jnp
from jax.experimental import pallas as pl
from jax.experimental.pallas import tpu as pltpu


def encode_block_kernel(x_ref, adj_ref, s_ref, tperm_ref, wbd_ref, bias_ref,
                        gamma_ref, beta_ref, gsum_ref, gbcast_ref, o_ref,
                        *, out_features):
    """Fused GC4D ('dynamic', neigh_norm=False) + BatchNorm2d (train stats) + tanh.

    Ref shapes:
      x_ref:     (N, T, V, Cin)          adj_ref / s_ref: (T, V, V)
      tperm_ref: (T, V, T)   tperm[t,v,j] = t_param[v,t,j]
      wbd_ref:   (V*Cin, V*Cout) bf16    block-diagonal per-node weight
      bias_ref:  (1, V*Cout)             gamma/beta_ref: (1, Cout)
      gsum_ref:  (V*Cout, Cout)          gbcast_ref:     (Cout, V*Cout)
      o_ref:     (N*T, V*Cout)           lane-dense output slab
    """
    N, T, V, Cin = x_ref.shape
    inv = 1.0 / math.sqrt(out_features)

    x = x_ref[...]                                     # (N, T, V, Cin) f32
    adj = adj_ref[...]                                 # (T, V, V)
    s_eff = s_ref[...] * adj                           # static spatial operator, adjacency-masked
    t_perm = tperm_ref[...]                            # (T, V, T)

    xm = jnp.mean(x, axis=-1)                          # (N, T, V)

    # dynamic spatial operator: s_eff + softsign((xm[n,t,v]-xm[n,t,i]) * adj[t,v,i]) / sqrt(Cout)
    d_s = (xm[:, :, :, None] - xm[:, :, None, :]) * adj[None]       # (N, T, V, V)
    a_s = s_eff[None] + (d_s / (1.0 + jnp.abs(d_s))) * inv          # (N, T, V, V)

    # dynamic temporal operator, built directly in (n, t, v, j) order:
    # t[v,t,j] + softsign(xm[n,t,v] - xm[n,j,v]) / sqrt(Cout)
    xm_nvt = jnp.swapaxes(xm, 1, 2)                                  # (N, V, T)
    d_t = xm[:, :, :, None] - xm_nvt[:, None, :, :]                  # (N, T, V, T)
    a_t = t_perm[None] + (d_t / (1.0 + jnp.abs(d_t))) * inv          # (N, T, V, T)

    # graph aggregation as VPU broadcast-MACs, batched over N (no tiny MXU dots)
    support = jnp.zeros((N, T, V, Cin), jnp.float32)
    for i in range(V):    # spatial:  sum_i a_s[n,t,v,i] * x[n,t,i,c]
        support = support + a_s[:, :, :, i:i + 1] * x[:, :, i:i + 1, :]
    for j in range(T):    # temporal: sum_j a_t[n,t,v,j] * x[n,j,v,c]
        support = support + a_t[:, :, :, j:j + 1] * x[:, j:j + 1, :, :]

    # single lane-dense block-diagonal matmul: (N*T, V*Cin) @ (V*Cin, V*Cout), bf16 in / f32 acc
    support_flat = support.reshape(N * T, V * Cin).astype(jnp.bfloat16)
    out = jnp.dot(support_flat, wbd_ref[...],
                  preferred_element_type=jnp.float32) + bias_ref[...]   # (N*T, V*Cout) f32

    # ---- BatchNorm2d (training-mode batch stats, biased var, eps=1e-5) + tanh ----
    # per-channel stats over (N, T, V): lane-dense column sums, then ONE stacked matmul folds
    # the V lane-groups, and ONE stacked matmul broadcasts scale/shift back across the groups.
    inv_cnt = 1.0 / float(N * T * V)
    col_sum = jnp.sum(out, axis=0, keepdims=True)                        # (1, V*Cout)
    col_sq = jnp.sum(out * out, axis=0, keepdims=True)                   # (1, V*Cout)
    stats = jnp.concatenate([col_sum, col_sq], axis=0)                   # (2, V*Cout)
    folded = jnp.dot(stats, gsum_ref[...],
                     preferred_element_type=jnp.float32) * inv_cnt       # (2, Cout)
    mean = folded[0:1, :]
    var = folded[1:2, :] - mean * mean          # E[x^2]-mean^2; fine at these magnitudes
    scale = gamma_ref[...] * jax.lax.rsqrt(var + 1e-5)                   # (1, Cout)
    shift = beta_ref[...] - mean * scale                                 # (1, Cout)
    scale_shift = jnp.dot(jnp.concatenate([scale, shift], axis=0),
                          gbcast_ref[...],
                          preferred_element_type=jnp.float32)            # (2, V*Cout)

    # TODO(synk): nn.Dropout applied as identity (eval semantics) and BN running stats are not updated; stochastic dropout would need pltpu.prng_seed + pltpu.prng_random_bits.
    o_ref[...] = jnp.tanh(out * scale_shift[0:1, :] + scale_shift[1:2, :]).astype(o_ref.dtype)


def prepare_encode_block_params(params):
    """One-time parameter layout prep (hoisted out of the per-call path)."""
    w = params['weight']                                   # (V, Cin, Cout)
    V, Cin, Cout = w.shape
    eye_v = np.eye(V, dtype=np.float32)
    eye_c = np.eye(Cout, dtype=np.float32)
    # block-diagonal weight: w_bd[v*Cin+j, u*Cout+c] = w[v,j,c] * (v == u), stored as bf16
    w_bd = jnp.einsum('vu,vjc->vjuc', jnp.asarray(eye_v), w)
    w_bd = w_bd.reshape(V * Cin, V * Cout).astype(jnp.bfloat16)
    return {
        's': params['s'],                                               # (T, V, V)
        't_perm': jnp.transpose(params['t'], (1, 0, 2)),                # (T, V, T)
        'w_bd': w_bd,                                                   # (V*Cin, V*Cout) bf16
        'bias_row': jnp.tile(params['bias'].reshape(1, Cout), (1, V)),  # (1, V*Cout)
        'gamma_row': params['gamma'].reshape(1, Cout),                  # (1, Cout)
        'beta_row': params['beta'].reshape(1, Cout),                    # (1, Cout)
        'g_sum': jnp.asarray(np.tile(eye_c, (V, 1))),                   # (V*Cout, Cout)
        'g_bcast': jnp.asarray(np.tile(eye_c, (1, V))),                 # (Cout, V*Cout)
    }


@jax.jit
def encode_block_forward(x, adj_mask, prep):
    """x: (N, T, V, Cin), adj_mask: (T, V, V)  ->  (N, T, V, Cout)."""
    N, T, V, Cin = x.shape
    Cout = prep['gamma_row'].shape[-1]

    vmem = pl.BlockSpec(memory_space=pltpu.MemorySpace.VMEM)
    out_flat = pl.pallas_call(
        partial(encode_block_kernel, out_features=Cout),
        out_shape=jax.ShapeDtypeStruct((N * T, V * Cout), jnp.float32),
        in_specs=[vmem] * 10,
        out_specs=vmem,
    )(x, adj_mask, prep['s'], prep['t_perm'], prep['w_bd'], prep['bias_row'],
      prep['gamma_row'], prep['beta_row'], prep['g_sum'], prep['g_bcast'])

    # free layout plumbing back to channels-last (N, T, V, Cout)
    return out_flat.reshape(N, T, V, Cout)


def reference_forward(x, adj, params):
    """Pure-JAX reference mirroring the PyTorch forward (training-mode BN, no dropout)."""
    w, s, t, b = params['weight'], params['s'], params['t'], params['bias']
    Cout = w.shape[-1]
    inv = 1.0 / math.sqrt(Cout)
    xm = x.mean(-1)                                              # (N, T, V)
    x1 = xm[:, :, None, :] - xm[:, None, :, :]                   # (N, T, T, V)
    x1 = (x1 / (1 + jnp.abs(x1))) * inv
    x2 = xm[..., :, None] - xm[..., None, :]                     # (N, T, V, V)
    x2 = x2 * adj[None]
    x2 = (x2 / (1 + jnp.abs(x2))) * inv
    tt = jnp.transpose(x1, (0, 3, 1, 2))                         # (N, V, T, T)
    s_m = s * adj
    aggreg_s = jnp.einsum('ntvi,ntic->ntvc', s_m[None] + x2, x)
    aggreg_t = jnp.einsum('nvtj,njvc->ntvc', t[None] + tt, x)
    support = aggreg_s + aggreg_t
    out = jnp.einsum('ntvj,vjc->ntvc', support, w) + b
    mean = out.mean(axis=(0, 1, 2), keepdims=True)
    var = ((out - mean) ** 2).mean(axis=(0, 1, 2), keepdims=True)
    yn = (out - mean) * jax.lax.rsqrt(var + 1e-5) * params['gamma'] + params['beta']
    return jnp.tanh(yn)


if __name__ == "__main__":
    key = jax.random.PRNGKey(0)
    # Small shapes consistent with the module: batch=2, frame_n=8, node_n=8,
    # in_features=16, out_features=32.
    N, T, V, Cin, Cout = 2, 8, 8, 16, 32
    ks = jax.random.split(key, 5)

    stdv = 1.0 / math.sqrt(Cout)
    params = {
        'weight': jax.random.uniform(ks[0], (V, Cin, Cout), jnp.float32, -stdv, stdv),
        's': jax.random.uniform(ks[1], (T, V, V), jnp.float32, -stdv, stdv),
        't': jax.random.uniform(ks[2], (V, T, T), jnp.float32, -stdv, stdv),
        'bias': jax.random.uniform(ks[3], (Cout,), jnp.float32, -stdv, stdv),
        'gamma': jnp.ones((Cout,), jnp.float32),    # BatchNorm2d default weight
        'beta': jnp.zeros((Cout,), jnp.float32),    # BatchNorm2d default bias
    }

    x = jax.random.normal(ks[4], (N, T, V, Cin), jnp.float32)

    # Deterministic binary adjacency: self + immediate neighbours, same every frame.
    idx = jnp.arange(V)
    adj2d = (jnp.abs(idx[:, None] - idx[None, :]) <= 1).astype(jnp.float32)
    adj = jnp.broadcast_to(adj2d, (T, V, V))

    # One-time parameter layout prep (outside the per-call path / jit).
    prep = prepare_encode_block_params(params)

    y = jax.block_until_ready(encode_block_forward(x, adj, prep))

    y_ref = reference_forward(x, adj, params)
    assert y.shape == (N, T, V, Cout)
    err = float(jnp.max(jnp.abs(y - y_ref)))
    # tolerance covers the bf16 block-diag matmul
    assert jnp.allclose(y, y_ref, atol=2e-2, rtol=2e-2), f"max abs err={err}"

    print("KERNEL_OK")
</pallas_src>

<mosaic_0001>
module attributes {stable_mosaic.version = 11 : i64} {
  func.func @encode_block_kernel(%arg0: memref<2x8x8x16xf32, #tpu.memory_space<vmem>>, %arg1: memref<8x8x8xf32, #tpu.memory_space<vmem>>, %arg2: memref<8x8x8xf32, #tpu.memory_space<vmem>>, %arg3: memref<8x8x8xf32, #tpu.memory_space<vmem>>, %arg4: memref<128x256xbf16, #tpu.memory_space<vmem>>, %arg5: memref<1x256xf32, #tpu.memory_space<vmem>>, %arg6: memref<1x32xf32, #tpu.memory_space<vmem>>, %arg7: memref<1x32xf32, #tpu.memory_space<vmem>>, %arg8: memref<256x32xf32, #tpu.memory_space<vmem>>, %arg9: memref<32x256xf32, #tpu.memory_space<vmem>>, %arg10: memref<16x256xf32, #tpu.memory_space<vmem>>) attributes {dimension_semantics = [], scalar_prefetch = 0 : i64, scratch_operands = 0 : i64, tpu.core_type = #tpu.core_type<tc>} {
    %c0 = arith.constant 0 : index
    %c0_0 = arith.constant 0 : index
    %c0_1 = arith.constant 0 : index
    %c0_2 = arith.constant 0 : index
    %0 = vector.load %arg0[%c0, %c0_0, %c0_1, %c0_2] : memref<2x8x8x16xf32, #tpu.memory_space<vmem>>, vector<2x8x8x16xf32>
    %c0_3 = arith.constant 0 : index
    %c0_4 = arith.constant 0 : index
    %c0_5 = arith.constant 0 : index
    %1 = vector.load %arg1[%c0_3, %c0_4, %c0_5] : memref<8x8x8xf32, #tpu.memory_space<vmem>>, vector<8x8x8xf32>
    %c0_6 = arith.constant 0 : index
    %c0_7 = arith.constant 0 : index
    %c0_8 = arith.constant 0 : index
    %2 = vector.load %arg2[%c0_6, %c0_7, %c0_8] : memref<8x8x8xf32, #tpu.memory_space<vmem>>, vector<8x8x8xf32>
    %3 = arith.mulf %2, %1 : vector<8x8x8xf32>
    %c0_9 = arith.constant 0 : index
    %c0_10 = arith.constant 0 : index
    %c0_11 = arith.constant 0 : index
    %4 = vector.load %arg3[%c0_9, %c0_10, %c0_11] : memref<8x8x8xf32, #tpu.memory_space<vmem>>, vector<8x8x8xf32>
    %cst = arith.constant dense<0.000000e+00> : vector<2x8x8xf32>
    %5 = vector.multi_reduction <add>, %0, %cst [3] : vector<2x8x8x16xf32> to vector<2x8x8xf32>
    %cst_12 = arith.constant 1.600000e+01 : f32
    %6 = vector.broadcast %cst_12 : f32 to vector<2x8x8xf32>
    %7 = arith.divf %5, %6 : vector<2x8x8xf32>
    %8 = vector.shape_cast %7 : vector<2x8x8xf32> to vector<2x8x8x1xf32>
    %9 = vector.shape_cast %7 : vector<2x8x8xf32> to vector<2x8x1x8xf32>
    %10 = vector.broadcast %8 : vector<2x8x8x1xf32> to vector<2x8x8x8xf32>
    %11 = vector.broadcast %9 : vector<2x8x1x8xf32> to vector<2x8x8x8xf32>
    %12 = arith.subf %10, %11 : vector<2x8x8x8xf32>
    %13 = vector.shape_cast %1 : vector<8x8x8xf32> to vector<1x8x8x8xf32>
    %14 = vector.broadcast %13 : vector<1x8x8x8xf32> to vector<2x8x8x8xf32>
    %15 = arith.mulf %12, %14 : vector<2x8x8x8xf32>
    %16 = vector.shape_cast %3 : vector<8x8x8xf32> to vector<1x8x8x8xf32>
    %17 = math.absf %15 : vector<2x8x8x8xf32>
    %cst_13 = arith.constant 1.000000e+00 : f32
    %18 = vector.broadcast %cst_13 : f32 to vector<2x8x8x8xf32>
    %19 = arith.addf %18, %17 : vector<2x8x8x8xf32>
    %20 = arith.divf %15, %19 : vector<2x8x8x8xf32>
    %cst_14 = arith.constant 0.176776692 : f32
    %21 = vector.broadcast %cst_14 : f32 to vector<2x8x8x8xf32>
    %22 = arith.mulf %20, %21 : vector<2x8x8x8xf32>
    %23 = vector.broadcast %16 : vector<1x8x8x8xf32> to vector<2x8x8x8xf32>
    %24 = arith.addf %23, %22 : vector<2x8x8x8xf32>
    %25 = tpu.transpose %7, [0, 2, 1] : vector<2x8x8xf32> -> vector<2x8x8xf32>
    %26 = vector.shape_cast %7 : vector<2x8x8xf32> to vector<2x8x8x1xf32>
    %27 = vector.shape_cast %25 : vector<2x8x8xf32> to vector<2x1x8x8xf32>
    %28 = vector.broadcast %26 : vector<2x8x8x1xf32> to vector<2x8x8x8xf32>
    %29 = vector.broadcast %27 : vector<2x1x8x8xf32> to vector<2x8x8x8xf32>
    %30 = arith.subf %28, %29 : vector<2x8x8x8xf32>
    %31 = vector.shape_cast %4 : vector<8x8x8xf32> to vector<1x8x8x8xf32>
    %32 = math.absf %30 : vector<2x8x8x8xf32>
    %cst_15 = arith.constant 1.000000e+00 : f32
    %33 = vector.broadcast %cst_15 : f32 to vector<2x8x8x8xf32>
    %34 = arith.addf %33, %32 : vector<2x8x8x8xf32>
    %35 = arith.divf %30, %34 : vector<2x8x8x8xf32>
    %cst_16 = arith.constant 0.176776692 : f32
    %36 = vector.broadcast %cst_16 : f32 to vector<2x8x8x8xf32>
    %37 = arith.mulf %35, %36 : vector<2x8x8x8xf32>
    %38 = vector.broadcast %31 : vector<1x8x8x8xf32> to vector<2x8x8x8xf32>
    %39 = arith.addf %38, %37 : vector<2x8x8x8xf32>
    %cst_17 = arith.constant 0.000000e+00 : f32
    %40 = vector.broadcast %cst_17 : f32 to vector<2x8x8x16xf32>
    %41 = vector.extract_strided_slice %24 {offsets = [0, 0, 0, 0], sizes = [2, 8, 8, 1], strides = [1, 1, 1, 1]} : vector<2x8x8x8xf32> to vector<2x8x8x1xf32>
    %42 = vector.extract_strided_slice %0 {offsets = [0, 0, 0, 0], sizes = [2, 8, 1, 16], strides = [1, 1, 1, 1]} : vector<2x8x8x16xf32> to vector<2x8x1x16xf32>
    %43 = vector.broadcast %41 : vector<2x8x8x1xf32> to vector<2x8x8x16xf32>
    %44 = vector.broadcast %42 : vector<2x8x1x16xf32> to vector<2x8x8x16xf32>
    %45 = arith.mulf %43, %44 : vector<2x8x8x16xf32>
    %46 = arith.addf %40, %45 : vector<2x8x8x16xf32>
    %47 = vector.extract_strided_slice %24 {offsets = [0, 0, 0, 1], sizes = [2, 8, 8, 1], strides = [1, 1, 1, 1]} : vector<2x8x8x8xf32> to vector<2x8x8x1xf32>
    %48 = vector.extract_strided_slice %0 {offsets = [0, 0, 1, 0], sizes = [2, 8, 1, 16], strides = [1, 1, 1, 1]} : vector<2x8x8x16xf32> to vector<2x8x1x16xf32>
    %49 = vector.broadcast %47 : vector<2x8x8x1xf32> to vector<2x8x8x16xf32>
    %50 = vector.broadcast %48 : vector<2x8x1x16xf32> to vector<2x8x8x16xf32>
    %51 = arith.mulf %49, %50 : vector<2x8x8x16xf32>
    %52 = arith.addf %46, %51 : vector<2x8x8x16xf32>
    %53 = vector.extract_strided_slice %24 {offsets = [0, 0, 0, 2], sizes = [2, 8, 8, 1], strides = [1, 1, 1, 1]} : vector<2x8x8x8xf32> to vector<2x8x8x1xf32>
    %54 = vector.extract_strided_slice %0 {offsets = [0, 0, 2, 0], sizes = [2, 8, 1, 16], strides = [1, 1, 1, 1]} : vector<2x8x8x16xf32> to vector<2x8x1x16xf32>
    %55 = vector.broadcast %53 : vector<2x8x8x1xf32> to vector<2x8x8x16xf32>
    %56 = vector.broadcast %54 : vector<2x8x1x16xf32> to vector<2x8x8x16xf32>
    %57 = arith.mulf %55, %56 : vector<2x8x8x16xf32>
    %58 = arith.addf %52, %57 : vector<2x8x8x16xf32>
    %59 = vector.extract_strided_slice %24 {offsets = [0, 0, 0, 3], sizes = [2, 8, 8, 1], strides = [1, 1, 1, 1]} : vector<2x8x8x8xf32> to vector<2x8x8x1xf32>
    %60 = vector.extract_strided_slice %0 {offsets = [0, 0, 3, 0], sizes = [2, 8, 1, 16], strides = [1, 1, 1, 1]} : vector<2x8x8x16xf32> to vector<2x8x1x16xf32>
    %61 = vector.broadcast %59 : vector<2x8x8x1xf32> to vector<2x8x8x16xf32>
    %62 = vector.broadcast %60 : vector<2x8x1x16xf32> to vector<2x8x8x16xf32>
    %63 = arith.mulf %61, %62 : vector<2x8x8x16xf32>
    %64 = arith.addf %58, %63 : vector<2x8x8x16xf32>
    %65 = vector.extract_strided_slice %24 {offsets = [0, 0, 0, 4], sizes = [2, 8, 8, 1], strides = [1, 1, 1, 1]} : vector<2x8x8x8xf32> to vector<2x8x8x1xf32>
    %66 = vector.extract_strided_slice %0 {offsets = [0, 0, 4, 0], sizes = [2, 8, 1, 16], strides = [1, 1, 1, 1]} : vector<2x8x8x16xf32> to vector<2x8x1x16xf32>
    %67 = vector.broadcast %65 : vector<2x8x8x1xf32> to vector<2x8x8x16xf32>
    %68 = vector.broadcast %66 : vector<2x8x1x16xf32> to vector<2x8x8x16xf32>
    %69 = arith.mulf %67, %68 : vector<2x8x8x16xf32>
    %70 = arith.addf %64, %69 : vector<2x8x8x16xf32>
    %71 = vector.extract_strided_slice %24 {offsets = [0, 0, 0, 5], sizes = [2, 8, 8, 1], strides = [1, 1, 1, 1]} : vector<2x8x8x8xf32> to vector<2x8x8x1xf32>
    %72 = vector.extract_strided_slice %0 {offsets = [0, 0, 5, 0], sizes = [2, 8, 1, 16], strides = [1, 1, 1, 1]} : vector<2x8x8x16xf32> to vector<2x8x1x16xf32>
    %73 = vector.broadcast %71 : vector<2x8x8x1xf32> to vector<2x8x8x16xf32>
    %74 = vector.broadcast %72 : vector<2x8x1x16xf32> to vector<2x8x8x16xf32>
    %75 = arith.mulf %73, %74 : vector<2x8x8x16xf32>
    %76 = arith.addf %70, %75 : vector<2x8x8x16xf32>
    %77 = vector.extract_strided_slice %24 {offsets = [0, 0, 0, 6], sizes = [2, 8, 8, 1], strides = [1, 1, 1, 1]} : vector<2x8x8x8xf32> to vector<2x8x8x1xf32>
    %78 = vector.extract_strided_slice %0 {offsets = [0, 0, 6, 0], sizes = [2, 8, 1, 16], strides = [1, 1, 1, 1]} : vector<2x8x8x16xf32> to vector<2x8x1x16xf32>
    %79 = vector.broadcast %77 : vector<2x8x8x1xf32> to vector<2x8x8x16xf32>
    %80 = vector.broadcast %78 : vector<2x8x1x16xf32> to vector<2x8x8x16xf32>
    %81 = arith.mulf %79, %80 : vector<2x8x8x16xf32>
    %82 = arith.addf %76, %81 : vector<2x8x8x16xf32>
    %83 = vector.extract_strided_slice %24 {offsets = [0, 0, 0, 7], sizes = [2, 8, 8, 1], strides = [1, 1, 1, 1]} : vector<2x8x8x8xf32> to vector<2x8x8x1xf32>
    %84 = vector.extract_strided_slice %0 {offsets = [0, 0, 7, 0], sizes = [2, 8, 1, 16], strides = [1, 1, 1, 1]} : vector<2x8x8x16xf32> to vector<2x8x1x16xf32>
    %85 = vector.broadcast %83 : vector<2x8x8x1xf32> to vector<2x8x8x16xf32>
    %86 = vector.broadcast %84 : vector<2x8x1x16xf32> to vector<2x8x8x16xf32>
    %87 = arith.mulf %85, %86 : vector<2x8x8x16xf32>
    %88 = arith.addf %82, %87 : vector<2x8x8x16xf32>
    %89 = vector.extract_strided_slice %39 {offsets = [0, 0, 0, 0], sizes = [2, 8, 8, 1], strides = [1, 1, 1, 1]} : vector<2x8x8x8xf32> to vector<2x8x8x1xf32>
    %90 = vector.extract_strided_slice %0 {offsets = [0, 0, 0, 0], sizes = [2, 1, 8, 16], strides = [1, 1, 1, 1]} : vector<2x8x8x16xf32> to vector<2x1x8x16xf32>
    %91 = vector.broadcast %89 : vector<2x8x8x1xf32> to vector<2x8x8x16xf32>
    %92 = vector.broadcast %90 : vector<2x1x8x16xf32> to vector<2x8x8x16xf32>
    %93 = arith.mulf %91, %92 : vector<2x8x8x16xf32>
    %94 = arith.addf %88, %93 : vector<2x8x8x16xf32>
    %95 = vector.extract_strided_slice %39 {offsets = [0, 0, 0, 1], sizes = [2, 8, 8, 1], strides = [1, 1, 1, 1]} : vector<2x8x8x8xf32> to vector<2x8x8x1xf32>
    %96 = vector.extract_strided_slice %0 {offsets = [0, 1, 0, 0], sizes = [2, 1, 8, 16], strides = [1, 1, 1, 1]} : vector<2x8x8x16xf32> to vector<2x1x8x16xf32>
    %97 = vector.broadcast %95 : vector<2x8x8x1xf32> to vector<2x8x8x16xf32>
    %98 = vector.broadcast %96 : vector<2x1x8x16xf32> to vector<2x8x8x16xf32>
    %99 = arith.mulf %97, %98 : vector<2x8x8x16xf32>
    %100 = arith.addf %94, %99 : vector<2x8x8x16xf32>
    %101 = vector.extract_strided_slice %39 {offsets = [0, 0, 0, 2], sizes = [2, 8, 8, 1], strides = [1, 1, 1, 1]} : vector<2x8x8x8xf32> to vector<2x8x8x1xf32>
    %102 = vector.extract_strided_slice %0 {offsets = [0, 2, 0, 0], sizes = [2, 1, 8, 16], strides = [1, 1, 1, 1]} : vector<2x8x8x16xf32> to vector<2x1x8x16xf32>
    %103 = vector.broadcast %101 : vector<2x8x8x1xf32> to vector<2x8x8x16xf32>
    %104 = vector.broadcast %102 : vector<2x1x8x16xf32> to vector<2x8x8x16xf32>
    %105 = arith.mulf %103, %104 : vector<2x8x8x16xf32>
    %106 = arith.addf %100, %105 : vector<2x8x8x16xf32>
    %107 = vector.extract_strided_slice %39 {offsets = [0, 0, 0, 3], sizes = [2, 8, 8, 1], strides = [1, 1, 1, 1]} : vector<2x8x8x8xf32> to vector<2x8x8x1xf32>
    %108 = vector.extract_strided_slice %0 {offsets = [0, 3, 0, 0], sizes = [2, 1, 8, 16], strides = [1, 1, 1, 1]} : vector<2x8x8x16xf32> to vector<2x1x8x16xf32>
    %109 = vector.broadcast %107 : vector<2x8x8x1xf32> to vector<2x8x8x16xf32>
    %110 = vector.broadcast %108 : vector<2x1x8x16xf32> to vector<2x8x8x16xf32>
    %111 = arith.mulf %109, %110 : vector<2x8x8x16xf32>
    %112 = arith.addf %106, %111 : vector<2x8x8x16xf32>
    %113 = vector.extract_strided_slice %39 {offsets = [0, 0, 0, 4], sizes = [2, 8, 8, 1], strides = [1, 1, 1, 1]} : vector<2x8x8x8xf32> to vector<2x8x8x1xf32>
    %114 = vector.extract_strided_slice %0 {offsets = [0, 4, 0, 0], sizes = [2, 1, 8, 16], strides = [1, 1, 1, 1]} : vector<2x8x8x16xf32> to vector<2x1x8x16xf32>
    %115 = vector.broadcast %113 : vector<2x8x8x1xf32> to vector<2x8x8x16xf32>
    %116 = vector.broadcast %114 : vector<2x1x8x16xf32> to vector<2x8x8x16xf32>
    %117 = arith.mulf %115, %116 : vector<2x8x8x16xf32>
    %118 = arith.addf %112, %117 : vector<2x8x8x16xf32>
    %119 = vector.extract_strided_slice %39 {offsets = [0, 0, 0, 5], sizes = [2, 8, 8, 1], strides = [1, 1, 1, 1]} : vector<2x8x8x8xf32> to vector<2x8x8x1xf32>
    %120 = vector.extract_strided_slice %0 {offsets = [0, 5, 0, 0], sizes = [2, 1, 8, 16], strides = [1, 1, 1, 1]} : vector<2x8x8x16xf32> to vector<2x1x8x16xf32>
    %121 = vector.broadcast %119 : vector<2x8x8x1xf32> to vector<2x8x8x16xf32>
    %122 = vector.broadcast %120 : vector<2x1x8x16xf32> to vector<2x8x8x16xf32>
    %123 = arith.mulf %121, %122 : vector<2x8x8x16xf32>
    %124 = arith.addf %118, %123 : vector<2x8x8x16xf32>
    %125 = vector.extract_strided_slice %39 {offsets = [0, 0, 0, 6], sizes = [2, 8, 8, 1], strides = [1, 1, 1, 1]} : vector<2x8x8x8xf32> to vector<2x8x8x1xf32>
    %126 = vector.extract_strided_slice %0 {offsets = [0, 6, 0, 0], sizes = [2, 1, 8, 16], strides = [1, 1, 1, 1]} : vector<2x8x8x16xf32> to vector<2x1x8x16xf32>
    %127 = vector.broadcast %125 : vector<2x8x8x1xf32> to vector<2x8x8x16xf32>
    %128 = vector.broadcast %126 : vector<2x1x8x16xf32> to vector<2x8x8x16xf32>
    %129 = arith.mulf %127, %128 : vector<2x8x8x16xf32>
    %130 = arith.addf %124, %129 : vector<2x8x8x16xf32>
    %131 = vector.extract_strided_slice %39 {offsets = [0, 0, 0, 7], sizes = [2, 8, 8, 1], strides = [1, 1, 1, 1]} : vector<2x8x8x8xf32> to vector<2x8x8x1xf32>
    %132 = vector.extract_strided_slice %0 {offsets = [0, 7, 0, 0], sizes = [2, 1, 8, 16], strides = [1, 1, 1, 1]} : vector<2x8x8x16xf32> to vector<2x1x8x16xf32>
    %133 = vector.broadcast %131 : vector<2x8x8x1xf32> to vector<2x8x8x16xf32>
    %134 = vector.broadcast %132 : vector<2x1x8x16xf32> to vector<2x8x8x16xf32>
    %135 = arith.mulf %133, %134 : vector<2x8x8x16xf32>
    %136 = arith.addf %130, %135 : vector<2x8x8x16xf32>
    %137 = vector.shape_cast %136 : vector<2x8x8x16xf32> to vector<16x128xf32>
    %138 = arith.truncf %137 : vector<16x128xf32> to vector<16x128xbf16>
    %c0_18 = arith.constant 0 : index
    %c0_19 = arith.constant 0 : index
    %139 = vector.load %arg4[%c0_18, %c0_19] : memref<128x256xbf16, #tpu.memory_space<vmem>>, vector<128x256xbf16>
    %cst_20 = arith.constant dense<0.000000e+00> : vector<16x256xf32>
    %140 = tpu.matmul %138, %139, %cst_20 {dimension_numbers = #tpu.dot_dimension_numbers<[1], [0], [0], [1], [0, 0, 1, 1], [], []>} : vector<16x128xbf16>, vector<128x256xbf16>, vector<16x256xf32> -> vector<16x256xf32>
    %c0_21 = arith.constant 0 : index
    %c0_22 = arith.constant 0 : index
    %141 = vector.load %arg5[%c0_21, %c0_22] : memref<1x256xf32, #tpu.memory_space<vmem>>, vector<1x256xf32>
    %142 = vector.broadcast %141 : vector<1x256xf32> to vector<16x256xf32>
    %143 = arith.addf %140, %142 : vector<16x256xf32>
    %cst_23 = arith.constant dense<0.000000e+00> : vector<256xf32>
    %144 = vector.multi_reduction <add>, %143, %cst_23 [0] : vector<16x256xf32> to vector<256xf32>
    %145 = vector.shape_cast %144 : vector<256xf32> to vector<1x256xf32>
    %146 = arith.mulf %143, %143 : vector<16x256xf32>
    %cst_24 = arith.constant dense<0.000000e+00> : vector<256xf32>
    %147 = vector.multi_reduction <add>, %146, %cst_24 [0] : vector<16x256xf32> to vector<256xf32>
    %148 = vector.shape_cast %147 : vector<256xf32> to vector<1x256xf32>
    %149 = tpu.concatenate %145, %148 in 0 : vector<1x256xf32>, vector<1x256xf32> -> vector<2x256xf32>
    %c0_25 = arith.constant 0 : index
    %c0_26 = arith.constant 0 : index
    %150 = vector.load %arg8[%c0_25, %c0_26] : memref<256x32xf32, #tpu.memory_space<vmem>>, vector<256x32xf32>
    %cst_27 = arith.constant dense<0.000000e+00> : vector<2x32xf32>
    %151 = tpu.matmul %149, %150, %cst_27 {dimension_numbers = #tpu.dot_dimension_numbers<[1], [0], [0], [1], [0, 0, 1, 1], [], []>} : vector<2x256xf32>, vector<256x32xf32>, vector<2x32xf32> -> vector<2x32xf32>
    %cst_28 = arith.constant 7.812500e-03 : f32
    %152 = vector.broadcast %cst_28 : f32 to vector<2x32xf32>
    %153 = arith.mulf %151, %152 : vector<2x32xf32>
    %154 = vector.extract_strided_slice %153 {offsets = [0, 0], sizes = [1, 32], strides = [1, 1]} : vector<2x32xf32> to vector<1x32xf32>
    %155 = vector.extract_strided_slice %153 {offsets = [1, 0], sizes = [1, 32], strides = [1, 1]} : vector<2x32xf32> to vector<1x32xf32>
    %156 = arith.mulf %154, %154 : vector<1x32xf32>
    %157 = arith.subf %155, %156 : vector<1x32xf32>
    %c0_29 = arith.constant 0 : index
    %c0_30 = arith.constant 0 : index
    %158 = vector.load %arg6[%c0_29, %c0_30] : memref<1x32xf32, #tpu.memory_space<vmem>>, vector<1x32xf32>
    %cst_31 = arith.constant 9.99999974E-6 : f32
    %159 = vector.broadcast %cst_31 : f32 to vector<1x32xf32>
    %160 = arith.addf %157, %159 : vector<1x32xf32>
    %161 = math.rsqrt %160 : vector<1x32xf32>
    %162 = arith.mulf %158, %161 : vector<1x32xf32>
    %c0_32 = arith.constant 0 : index
    %c0_33 = arith.constant 0 : index
    %163 = vector.load %arg7[%c0_32, %c0_33] : memref<1x32xf32, #tpu.memory_space<vmem>>, vector<1x32xf32>
    %164 = arith.mulf %154, %162 : vector<1x32xf32>
    %165 = arith.subf %163, %164 : vector<1x32xf32>
    %166 = tpu.concatenate %162, %165 in 0 : vector<1x32xf32>, vector<1x32xf32> -> vector<2x32xf32>
    %c0_34 = arith.constant 0 : index
    %c0_35 = arith.constant 0 : index
    %167 = vector.load %arg9[%c0_34, %c0_35] : memref<32x256xf32, #tpu.memory_space<vmem>>, vector<32x256xf32>
    %cst_36 = arith.constant dense<0.000000e+00> : vector<2x256xf32>
    %168 = tpu.matmul %166, %167, %cst_36 {dimension_numbers = #tpu.dot_dimension_numbers<[1], [0], [0], [1], [0, 0, 1, 1], [], []>} : vector<2x32xf32>, vector<32x256xf32>, vector<2x256xf32> -> vector<2x256xf32>
    %169 = vector.extract_strided_slice %168 {offsets = [0, 0], sizes = [1, 256], strides = [1, 1]} : vector<2x256xf32> to vector<1x256xf32>
    %170 = vector.broadcast %169 : vector<1x256xf32> to vector<16x256xf32>
    %171 = arith.mulf %143, %170 : vector<16x256xf32>
    %172 = vector.extract_strided_slice %168 {offsets = [1, 0], sizes = [1, 256], strides = [1, 1]} : vector<2x256xf32> to vector<1x256xf32>
    %173 = vector.broadcast %172 : vector<1x256xf32> to vector<16x256xf32>
    %174 = arith.addf %171, %173 : vector<16x256xf32>
    %175 = math.tanh %174 : vector<16x256xf32>
    %c0_37 = arith.constant 0 : index
    %c0_38 = arith.constant 0 : index
    %176 = vector.load %arg10[%c0_37, %c0_38] : memref<16x256xf32, #tpu.memory_space<vmem>>, vector<16x256xf32>
    tpu.vector_store %arg10[%c0_37, %c0_38], %175 {strides = array<i32>} : memref<16x256xf32, #tpu.memory_space<vmem>>, vector<16x256xf32>,
    return
  }
}

</mosaic_0001>

<llo_original>
// kernel: encode_block_forward.1
$region0: #{encode_block_forward.1}
  #allocation0 [shape = 'u32[]', space=smem, size = 0x4, offset = 0x4, fixed_abs, tag = 'smem constant byte address 0x4 - core index']
  #allocation1 [shape = 'u32[72,128]{1,0:T(1,128)}', space=vmem, size = 0x9000, scoped, tag = 'internal scratch']
  %s0 = inlined_call_operand.vmem [shape: f32[2,8,8,16], index: 0, kind: input, shape index: {}]
  %s1 = inlined_call_operand.vmem [shape: f32[8,8,8], index: 1, kind: input, shape index: {}]
  %s2 = inlined_call_operand.hbm [shape: f32[8,8,8], index: 2, kind: input, shape index: {}]
  %s3 = inlined_call_operand.hbm [shape: f32[8,8,8], index: 3, kind: input, shape index: {}]
  %s4 = inlined_call_operand.vmem [shape: bf16[128,256], index: 4, kind: input, shape index: {}]
  %s5 = inlined_call_operand.hbm [shape: f32[1,256], index: 5, kind: input, shape index: {}]
  %s6 = inlined_call_operand.vmem [shape: f32[1,32], index: 6, kind: input, shape index: {}]
  %s7 = inlined_call_operand.hbm [shape: f32[1,32], index: 7, kind: input, shape index: {}]
  %s8 = inlined_call_operand.vmem [shape: f32[256,32], index: 8, kind: input, shape index: {}]
  %s9 = inlined_call_operand.hbm [shape: f32[32,256], index: 9, kind: input, shape index: {}]
  %s10 = inlined_call_operand.vmem [shape: f32[16,256], index: 10, kind: output, shape index: {}]
  %s11 = sld [smem:[#allocation0]]
  $region70: #{encode_block_forward.1} parent=0
    _
  %s13 = ssub.s32 1, %s11
  %s14 = scalar_select 0, %s13, %s11
  $region1: #{encode_block_forward.1} parent=0
    #allocation2 [shape = 'u8[32768]{0}', space=vmem, size = 0x8000, scoped, tag = 'input window, operand 2, single buffered']
    #allocation3 [shape = 's32[1]{0}', space=sflag, size = 0x4, scoped, tag = 'scoped memory for encode_block_forward.1']
    #allocation4 [shape = 'u8[32768]{0}', space=vmem, size = 0x8000, scoped, tag = 'input window, operand 3, single buffered']
    #allocation5 [shape = 's32[1]{0}', space=sflag, size = 0x4, scoped, tag = 'scoped memory for encode_block_forward.1']
    #allocation6 [shape = 'u8[1024]{0}', space=vmem, size = 0x400, scoped, tag = 'input window, operand 5, single buffered']
    #allocation7 [shape = 'u8[512]{0}', space=vmem, size = 0x400, scoped, tag = 'input window, operand 7, single buffered']
    #allocation8 [shape = 's32[1]{0}', space=sflag, size = 0x4, scoped, tag = 'scoped memory for encode_block_forward.1']
    #allocation9 [shape = 'u8[32768]{0}', space=vmem, size = 0x8000, scoped, tag = 'input window, operand 9, single buffered']
    %15 = vsyncpa [#allocation3], 0
    %16 = vsyncpa [#allocation5], 0
    %17 = vsyncpa [#allocation8], 0
    // Predicated region
    $region2: #{encode_block_forward.1} parent=1 // pred_check
      _
    $region3: #{encode_block_forward.1} parent=1 // pred_check_branch
      %19 = sbr.rel (0) target = $region5
    $region4: #{encode_block_forward.1} parent=1 // pred_region
      _
    $region5: #{encode_block_forward.1} parent=1 // pred_fallthru
      _
    // Predicated region
    $region6: #{encode_block_forward.1} parent=1 // pred_check
      _
    $region7: #{encode_block_forward.1} parent=1 // pred_check_branch
      %21 = sbr.rel (0) target = $region9
    $region8: #{encode_block_forward.1} parent=1 // pred_region
      _
    $region9: #{encode_block_forward.1} parent=1 // pred_fallthru
      _
    // Predicated region
    $region10: #{encode_block_forward.1} parent=1 // pred_check
      _
    $region11: #{encode_block_forward.1} parent=1 // pred_check_branch
      %23 = sbr.rel (0) target = $region13
    $region12: #{encode_block_forward.1} parent=1 // pred_region
      %25 = vsyncadd [#allocation3], 0
      %s26 = sshll.u32 %s2, 4
      %s27 = int_to_ptr.hbm [resolvable:$true] %s26
      %s28 = sshll.u32 [#allocation2], 4
      %s29 = int_to_ptr.vmem [resolvable:$true] %s28
      %34 = dma.hbm_to_vmem [thread:$0]  %s27, 1024, %s29, [#allocation3], 128, 128, 8
    $region13: #{encode_block_forward.1} parent=1 // pred_fallthru
      _
    // Predicated region
    $region14: #{encode_block_forward.1} parent=1 // pred_check
      _
    $region15: #{encode_block_forward.1} parent=1 // pred_check_branch
      %36 = sbr.rel (0) target = $region17
    $region16: #{encode_block_forward.1} parent=1 // pred_region
      %38 = vsyncadd [#allocation5], 0
      %s39 = sshll.u32 %s3, 4
      %s40 = int_to_ptr.hbm [resolvable:$true] %s39
      %s41 = sshll.u32 [#allocation4], 4
      %s42 = int_to_ptr.vmem [resolvable:$true] %s41
      %47 = dma.hbm_to_vmem [thread:$0]  %s40, 1024, %s42, [#allocation5], 128, 128, 8
    $region17: #{encode_block_forward.1} parent=1 // pred_fallthru
      _
    // Predicated region
    $region18: #{encode_block_forward.1} parent=1 // pred_check
      _
    $region19: #{encode_block_forward.1} parent=1 // pred_check_branch
      %49 = sbr.rel (0) target = $region21
    $region20: #{encode_block_forward.1} parent=1 // pred_region
      _
    $region21: #{encode_block_forward.1} parent=1 // pred_fallthru
      _
    // Predicated region
    $region22: #{encode_block_forward.1} parent=1 // pred_check
      _
    $region23: #{encode_block_forward.1} parent=1 // pred_check_branch
      %51 = sbr.rel (0) target = $region25
    $region24: #{encode_block_forward.1} parent=1 // pred_region
      %53 = vsyncadd [#allocation5], 0
      %s55 = sshll.u32 %s5, 4
      %s56 = int_to_ptr.hbm [resolvable:$true] %s55
      %s57 = sshll.u32 [#allocation6], 4
      %s58 = int_to_ptr.vmem [resolvable:$true] %s57
      %60 = dma.hbm_to_vmem [thread:$0]  %s56, 32, %s58, [#allocation5]
    $region25: #{encode_block_forward.1} parent=1 // pred_fallthru
      _
    // Predicated region
    $region26: #{encode_block_forward.1} parent=1 // pred_check
      _
    $region27: #{encode_block_forward.1} parent=1 // pred_check_branch
      %62 = sbr.rel (0) target = $region29
    $region28: #{encode_block_forward.1} parent=1 // pred_region
      _
    $region29: #{encode_block_forward.1} parent=1 // pred_fallthru
      _
    // Predicated region
    $region30: #{encode_block_forward.1} parent=1 // pred_check
      _
    $region31: #{encode_block_forward.1} parent=1 // pred_check_branch
      %64 = sbr.rel (0) target = $region33
    $region32: #{encode_block_forward.1} parent=1 // pred_region
      %66 = vsyncadd [#allocation8], 0
      %s68 = sshll.u32 %s7, 4
      %s69 = int_to_ptr.hbm [resolvable:$true] %s68
      %s70 = sshll.u32 [#allocation7], 4
      %s71 = int_to_ptr.vmem [resolvable:$true] %s70
      %73 = dma.hbm_to_vmem [thread:$0]  %s69, 16, %s71, [#allocation8]
    $region33: #{encode_block_forward.1} parent=1 // pred_fallthru
      _
    // Predicated region
    $region34: #{encode_block_forward.1} parent=1 // pred_check
      _
    $region35: #{encode_block_forward.1} parent=1 // pred_check_branch
      %75 = sbr.rel (0) target = $region37
    $region36: #{encode_block_forward.1} parent=1 // pred_region
      _
    $region37: #{encode_block_forward.1} parent=1 // pred_fallthru
      _
    // Predicated region
    $region38: #{encode_block_forward.1} parent=1 // pred_check
      _
    $region39: #{encode_block_forward.1} parent=1 // pred_check_branch
      %77 = sbr.rel (0) target = $region41
    $region40: #{encode_block_forward.1} parent=1 // pred_region
      %79 = vsyncadd [#allocation8], 0
      %s80 = sshll.u32 %s9, 4
      %s81 = int_to_ptr.hbm [resolvable:$true] %s80
      %s82 = sshll.u32 [#allocation9], 4
      %s83 = int_to_ptr.vmem [resolvable:$true] %s82
      %88 = dma.hbm_to_vmem [thread:$0]  %s81, 1024, %s83, [#allocation8], 256, 256, 16
    $region41: #{encode_block_forward.1} parent=1 // pred_fallthru
      _
    // Predicated region
    $region42: #{encode_block_forward.1} parent=1 // pred_check
      _
    $region43: #{encode_block_forward.1} parent=1 // pred_check_branch
      %90 = sbr.rel (0) target = $region45
    $region44: #{encode_block_forward.1} parent=1 // pred_region
      %92 = dma.done [#allocation3], 1024
    $region45: #{encode_block_forward.1} parent=1 // pred_fallthru
      _
    // Predicated region
    $region46: #{encode_block_forward.1} parent=1 // pred_check
      _
    $region47: #{encode_block_forward.1} parent=1 // pred_check_branch
      %94 = sbr.rel (0) target = $region49
    $region48: #{encode_block_forward.1} parent=1 // pred_region
      %96 = dma.done [#allocation5], 1024
    $region49: #{encode_block_forward.1} parent=1 // pred_fallthru
      _
    // Predicated region
    $region50: #{encode_block_forward.1} parent=1 // pred_check
      _
    $region51: #{encode_block_forward.1} parent=1 // pred_check_branch
      %98 = sbr.rel (0) target = $region53
    $region52: #{encode_block_forward.1} parent=1 // pred_region
      %100 = dma.done [#allocation5], 32
    $region53: #{encode_block_forward.1} parent=1 // pred_fallthru
      _
    // Predicated region
    $region54: #{encode_block_forward.1} parent=1 // pred_check
      _
    $region55: #{encode_block_forward.1} parent=1 // pred_check_branch
      %102 = sbr.rel (0) target = $region57
    $region56: #{encode_block_forward.1} parent=1 // pred_region
      %104 = dma.done [#allocation8], 16
    $region57: #{encode_block_forward.1} parent=1 // pred_fallthru
      _
    // Predicated region
    $region58: #{encode_block_forward.1} parent=1 // pred_check
      _
    $region59: #{encode_block_forward.1} parent=1 // pred_check_branch
      %106 = sbr.rel (0) target = $region61
    $region60: #{encode_block_forward.1} parent=1 // pred_region
      %108 = dma.done [#allocation8], 1024
    $region61: #{encode_block_forward.1} parent=1 // pred_fallthru
      _
    %v109 = vld [vmem:[%s0] sm:$0xff]
    %v110 = vld [vmem:[%s0 + $0x8] sm:$0xff]
    %v111 = vld [vmem:[%s0 + $0x10] sm:$0xff]
    %v112 = vld [vmem:[%s0 + $0x18] sm:$0xff]
    %v113 = vld [vmem:[%s0 + $0x20] sm:$0xff]
    %v114 = vld [vmem:[%s0 + $0x28] sm:$0xff]
    %v115 = vld [vmem:[%s0 + $0x30] sm:$0xff]
    %v116 = vld [vmem:[%s0 + $0x38] sm:$0xff]
    %v117 = vld [vmem:[%s0 + $0x40] sm:$0xff]
    %v118 = vld [vmem:[%s0 + $0x48] sm:$0xff]
    %v119 = vld [vmem:[%s0 + $0x50] sm:$0xff]
    %v120 = vld [vmem:[%s0 + $0x58] sm:$0xff]
    %v121 = vld [vmem:[%s0 + $0x60] sm:$0xff]
    %v122 = vld [vmem:[%s0 + $0x68] sm:$0xff]
    %v123 = vld [vmem:[%s0 + $0x70] sm:$0xff]
    %v124 = vld [vmem:[%s0 + $0x78] sm:$0xff]
    %v125 = vld [vmem:[%s1] sm:$0xff]
    %v126 = vld [vmem:[%s1 + $0x8] sm:$0xff]
    %v127 = vld [vmem:[%s1 + $0x10] sm:$0xff]
    %v128 = vld [vmem:[%s1 + $0x18] sm:$0xff]
    %v129 = vld [vmem:[%s1 + $0x20] sm:$0xff]
    %v130 = vld [vmem:[%s1 + $0x28] sm:$0xff]
    %v131 = vld [vmem:[%s1 + $0x30] sm:$0xff]
    %v132 = vld [vmem:[%s1 + $0x38] sm:$0xff]
    %v133 = vld [vmem:[#allocation2] sm:$0xff]
    %v134 = vld [vmem:[#allocation2 + $0x8] sm:$0xff]
    %v135 = vld [vmem:[#allocation2 + $0x10] sm:$0xff]
    %v136 = vld [vmem:[#allocation2 + $0x18] sm:$0xff]
    %v137 = vld [vmem:[#allocation2 + $0x20] sm:$0xff]
    %v138 = vld [vmem:[#allocation2 + $0x28] sm:$0xff]
    %v139 = vld [vmem:[#allocation2 + $0x30] sm:$0xff]
    %v140 = vld [vmem:[#allocation2 + $0x38] sm:$0xff]
    %v141 = vmul.f32 %v133, %v125
    %v142 = vmul.f32 %v134, %v126
    %v143 = vmul.f32 %v135, %v127
    %v144 = vmul.f32 %v136, %v128
    %v145 = vmul.f32 %v137, %v129
    %v146 = vmul.f32 %v138, %v130
    %v147 = vmul.f32 %v139, %v131
    %v148 = vmul.f32 %v140, %v132
    %v149 = vld [vmem:[#allocation4] sm:$0xff]
    %v150 = vld [vmem:[#allocation4 + $0x8] sm:$0xff]
    %v151 = vld [vmem:[#allocation4 + $0x10] sm:$0xff]
    %v152 = vld [vmem:[#allocation4 + $0x18] sm:$0xff]
    %v153 = vld [vmem:[#allocation4 + $0x20] sm:$0xff]
    %v154 = vld [vmem:[#allocation4 + $0x28] sm:$0xff]
    %v155 = vld [vmem:[#allocation4 + $0x30] sm:$0xff]
    %v156 = vld [vmem:[#allocation4 + $0x38] sm:$0xff]
    %vm157 = vcmask 130048
    %v158 = vsel %vm157, %v109, 0.0
    %159 = vadd.xlane.f32.xlu0 %v158
    %v160 = vpop.xlane.xlu0 %159
    %v161 = vsel %vm157, %v110, 0.0
    %162 = vadd.xlane.f32.xlu0 %v161
    %v163 = vpop.xlane.xlu0 %162
    %v164 = vsel %vm157, %v111, 0.0
    %165 = vadd.xlane.f32.xlu0 %v164
    %v166 = vpop.xlane.xlu0 %165
    %v167 = vsel %vm157, %v112, 0.0
    %168 = vadd.xlane.f32.xlu0 %v167
    %v169 = vpop.xlane.xlu0 %168
    %v170 = vsel %vm157, %v113, 0.0
    %171 = vadd.xlane.f32.xlu0 %v170
    %v172 = vpop.xlane.xlu0 %171
    %v173 = vsel %vm157, %v114, 0.0
    %174 = vadd.xlane.f32.xlu0 %v173
    %v175 = vpop.xlane.xlu0 %174
    %v176 = vsel %vm157, %v115, 0.0
    %177 = vadd.xlane.f32.xlu0 %v176
    %v178 = vpop.xlane.xlu0 %177
    %v179 = vsel %vm157, %v116, 0.0
    %180 = vadd.xlane.f32.xlu0 %v179
    %v181 = vpop.xlane.xlu0 %180
    %v182 = vsel %vm157, %v117, 0.0
    %183 = vadd.xlane.f32.xlu0 %v182
    %v184 = vpop.xlane.xlu0 %183
    %v185 = vsel %vm157, %v118, 0.0
    %186 = vadd.xlane.f32.xlu0 %v185
    %v187 = vpop.xlane.xlu0 %186
    %v188 = vsel %vm157, %v119, 0.0
    %189 = vadd.xlane.f32.xlu0 %v188
    %v190 = vpop.xlane.xlu0 %189
    %v191 = vsel %vm157, %v120, 0.0
    %192 = vadd.xlane.f32.xlu0 %v191
    %v193 = vpop.xlane.xlu0 %192
    %v194 = vsel %vm157, %v121, 0.0
    %195 = vadd.xlane.f32.xlu0 %v194
    %v196 = vpop.xlane.xlu0 %195
    %v197 = vsel %vm157, %v122, 0.0
    %198 = vadd.xlane.f32.xlu0 %v197
    %v199 = vpop.xlane.xlu0 %198
    %v200 = vsel %vm157, %v123, 0.0
    %201 = vadd.xlane.f32.xlu0 %v200
    %v202 = vpop.xlane.xlu0 %201
    %v203 = vsel %vm157, %v124, 0.0
    %204 = vadd.xlane.f32.xlu0 %v203
    %v205 = vpop.xlane.xlu0 %204
    %v206 = vrcp.pop 16.0
    %v207 = vmul.f32 16.0, %v206
    %v208 = vsub.f32 1.0, %v207
    %v209 = vmul.f32 %v206, %v208
    %v210 = vadd.f32 %v206, %v209
    %vm211 = vweird.f32 %v206
    %v212 = vsel %vm211, %v206, %v210
    %v213 = vmul.f32 %v160, %v212
    %v214 = vmul.f32 %v163, %v212
    %v215 = vmul.f32 %v166, %v212
    %v216 = vmul.f32 %v169, %v212
    %v217 = vmul.f32 %v172, %v212
    %v218 = vmul.f32 %v175, %v212
    %v219 = vmul.f32 %v178, %v212
    %v220 = vmul.f32 %v181, %v212
    %v221 = vmul.f32 %v184, %v212
    %v222 = vmul.f32 %v187, %v212
    %v223 = vmul.f32 %v190, %v212
    %v224 = vmul.f32 %v193, %v212
    %v225 = vmul.f32 %v196, %v212
    %v226 = vmul.f32 %v199, %v212
    %v227 = vmul.f32 %v202, %v212
    %v228 = vmul.f32 %v205, %v212
    %v245 = vlaneseq
    %v246 = vand.u32 %v245, 127
    %v247 = vperm.slane %v213, %v246
    %v248 = vperm.slane %v214, %v246
    %v249 = vperm.slane %v215, %v246
    %v250 = vperm.slane %v216, %v246
    %v251 = vperm.slane %v217, %v246
    %v252 = vperm.slane %v218, %v246
    %v253 = vperm.slane %v219, %v246
    %v254 = vperm.slane %v220, %v246
    %v255 = vperm.slane %v221, %v246
    %v256 = vperm.slane %v222, %v246
    %v257 = vperm.slane %v223, %v246
    %v258 = vperm.slane %v224, %v246
    %v259 = vperm.slane %v225, %v246
    %v260 = vperm.slane %v226, %v246
    %v261 = vperm.slane %v227, %v246
    %v262 = vperm.slane %v228, %v246
    %vm263 = vcmask 1041409
    %vm264 = vcmask 1042434
    %v265 = vsel %vm264, %v247, %v247
    %vm266 = vcmask 1043459
    %v267 = vsel %vm266, %v247, %v265
    %vm268 = vcmask 1044484
    %v269 = vsel %vm268, %v247, %v267
    %vm270 = vcmask 1045509
    %v271 = vsel %vm270, %v247, %v269
    %vm272 = vcmask 1046534
    %v273 = vsel %vm272, %v247, %v271
    %vm274 = vcmask 1047559
    %v275 = vsel %vm274, %v247, %v273
    %v276 = vsel %vm264, %v248, %v248
    %v277 = vsel %vm266, %v248, %v276
    %v278 = vsel %vm268, %v248, %v277
    %v279 = vsel %vm270, %v248, %v278
    %v280 = vsel %vm272, %v248, %v279
    %v281 = vsel %vm274, %v248, %v280
    %v282 = vsel %vm264, %v249, %v249
    %v283 = vsel %vm266, %v249, %v282
    %v284 = vsel %vm268, %v249, %v283
    %v285 = vsel %vm270, %v249, %v284
    %v286 = vsel %vm272, %v249, %v285
    %v287 = vsel %vm274, %v249, %v286
    %v288 = vsel %vm264, %v250, %v250
    %v289 = vsel %vm266, %v250, %v288
    %v290 = vsel %vm268, %v250, %v289
    %v291 = vsel %vm270, %v250, %v290
    %v292 = vsel %vm272, %v250, %v291
    %v293 = vsel %vm274, %v250, %v292
    %v294 = vsel %vm264, %v251, %v251
    %v295 = vsel %vm266, %v251, %v294
    %v296 = vsel %vm268, %v251, %v295
    %v297 = vsel %vm270, %v251, %v296
    %v298 = vsel %vm272, %v251, %v297
    %v299 = vsel %vm274, %v251, %v298
    %v300 = vsel %vm264, %v252, %v252
    %v301 = vsel %vm266, %v252, %v300
    %v302 = vsel %vm268, %v252, %v301
    %v303 = vsel %vm270, %v252, %v302
    %v304 = vsel %vm272, %v252, %v303
    %v305 = vsel %vm274, %v252, %v304
    %v306 = vsel %vm264, %v253, %v253
    %v307 = vsel %vm266, %v253, %v306
    %v308 = vsel %vm268, %v253, %v307
    %v309 = vsel %vm270, %v253, %v308
    %v310 = vsel %vm272, %v253, %v309
    %v311 = vsel %vm274, %v253, %v310
    %v312 = vsel %vm264, %v254, %v254
    %v313 = vsel %vm266, %v254, %v312
    %v314 = vsel %vm268, %v254, %v313
    %v315 = vsel %vm270, %v254, %v314
    %v316 = vsel %vm272, %v254, %v315
    %v317 = vsel %vm274, %v254, %v316
    %v318 = vsel %vm264, %v255, %v255
    %v319 = vsel %vm266, %v255, %v318
    %v320 = vsel %vm268, %v255, %v319
    %v321 = vsel %vm270, %v255, %v320
    %v322 = vsel %vm272, %v255, %v321
    %v323 = vsel %vm274, %v255, %v322
    %v324 = vsel %vm264, %v256, %v256
    %v325 = vsel %vm266, %v256, %v324
    %v326 = vsel %vm268, %v256, %v325
    %v327 = vsel %vm270, %v256, %v326
    %v328 = vsel %vm272, %v256, %v327
    %v329 = vsel %vm274, %v256, %v328
    %v330 = vsel %vm264, %v257, %v257
    %v331 = vsel %vm266, %v257, %v330
    %v332 = vsel %vm268, %v257, %v331
    %v333 = vsel %vm270, %v257, %v332
    %v334 = vsel %vm272, %v257, %v333
    %v335 = vsel %vm274, %v257, %v334
    %v336 = vsel %vm264, %v258, %v258
    %v337 = vsel %vm266, %v258, %v336
    %v338 = vsel %vm268, %v258, %v337
    %v339 = vsel %vm270, %v258, %v338
    %v340 = vsel %vm272, %v258, %v339
    %v341 = vsel %vm274, %v258, %v340
    %v342 = vsel %vm264, %v259, %v259
    %v343 = vsel %vm266, %v259, %v342
    %v344 = vsel %vm268, %v259, %v343
    %v345 = vsel %vm270, %v259, %v344
    %v346 = vsel %vm272, %v259, %v345
    %v347 = vsel %vm274, %v259, %v346
    %v348 = vsel %vm264, %v260, %v260
    %v349 = vsel %vm266, %v260, %v348
    %v350 = vsel %vm268, %v260, %v349
    %v351 = vsel %vm270, %v260, %v350
    %v352 = vsel %vm272, %v260, %v351
    %v353 = vsel %vm274, %v260, %v352
    %v354 = vsel %vm264, %v261, %v261
    %v355 = vsel %vm266, %v261, %v354
    %v356 = vsel %vm268, %v261, %v355
    %v357 = vsel %vm270, %v261, %v356
    %v358 = vsel %vm272, %v261, %v357
    %v359 = vsel %vm274, %v261, %v358
    %v360 = vsel %vm264, %v262, %v262
    %v361 = vsel %vm266, %v262, %v360
    %v362 = vsel %vm268, %v262, %v361
    %v363 = vsel %vm270, %v262, %v362
    %v364 = vsel %vm272, %v262, %v363
    %v365 = vsel %vm274, %v262, %v364
    %v382 = vsub.f32 %v213, %v275
    %v383 = vsub.f32 %v214, %v281
    %v384 = vsub.f32 %v215, %v287
    %v385 = vsub.f32 %v216, %v293
    %v386 = vsub.f32 %v217, %v299
    %v387 = vsub.f32 %v218, %v305
    %v388 = vsub.f32 %v219, %v311
    %v389 = vsub.f32 %v220, %v317
    %v390 = vsub.f32 %v221, %v323
    %v391 = vsub.f32 %v222, %v329
    %v392 = vsub.f32 %v223, %v335
    %v393 = vsub.f32 %v224, %v341
    %v394 = vsub.f32 %v225, %v347
    %v395 = vsub.f32 %v226, %v353
    %v396 = vsub.f32 %v227, %v359
    %v397 = vsub.f32 %v228, %v365
    %v398 = vmul.f32 %v382, %v125
    %v399 = vmul.f32 %v383, %v126
    %v400 = vmul.f32 %v384, %v127
    %v401 = vmul.f32 %v385, %v128
    %v402 = vmul.f32 %v386, %v129
    %v403 = vmul.f32 %v387, %v130
    %v404 = vmul.f32 %v388, %v131
    %v405 = vmul.f32 %v389, %v132
    %v406 = vmul.f32 %v390, %v125
    %v407 = vmul.f32 %v391, %v126
    %v408 = vmul.f32 %v392, %v127
    %v409 = vmul.f32 %v393, %v128
    %v410 = vmul.f32 %v394, %v129
    %v411 = vmul.f32 %v395, %v130
    %v412 = vmul.f32 %v396, %v131
    %v413 = vmul.f32 %v397, %v132
    %v414 = vand.u32 2147483647, %v398
    %v415 = vand.u32 2147483647, %v399
    %v416 = vand.u32 2147483647, %v400
    %v417 = vand.u32 2147483647, %v401
    %v418 = vand.u32 2147483647, %v402
    %v419 = vand.u32 2147483647, %v403
    %v420 = vand.u32 2147483647, %v404
    %v421 = vand.u32 2147483647, %v405
    %v422 = vand.u32 2147483647, %v406
    %v423 = vand.u32 2147483647, %v407
    %v424 = vand.u32 2147483647, %v408
    %v425 = vand.u32 2147483647, %v409
    %v426 = vand.u32 2147483647, %v410
    %v427 = vand.u32 2147483647, %v411
    %v428 = vand.u32 2147483647, %v412
    %v429 = vand.u32 2147483647, %v413
    %v430 = vadd.f32 %v414, 1.0
    %v431 = vadd.f32 %v415, 1.0
    %v432 = vadd.f32 %v416, 1.0
    %v433 = vadd.f32 %v417, 1.0
    %v434 = vadd.f32 %v418, 1.0
    %v435 = vadd.f32 %v419, 1.0
    %v436 = vadd.f32 %v420, 1.0
    %v437 = vadd.f32 %v421, 1.0
    %v438 = vadd.f32 %v422, 1.0
    %v439 = vadd.f32 %v423, 1.0
    %v440 = vadd.f32 %v424, 1.0
    %v441 = vadd.f32 %v425, 1.0
    %v442 = vadd.f32 %v426, 1.0
    %v443 = vadd.f32 %v427, 1.0
    %v444 = vadd.f32 %v428, 1.0
    %v445 = vadd.f32 %v429, 1.0
    %v446 = vrcp.pop %v430
    %v447 = vmul.f32 %v430, %v446
    %v448 = vsub.f32 1.0, %v447
    %v449 = vmul.f32 %v446, %v448
    %v450 = vadd.f32 %v446, %v449
    %vm451 = vweird.f32 %v430
    %vm452 = vweird.f32 %v446
    %vm453 = vmor %vm451, %vm452
    %v454 = vsel %vm453, %v446, %v450
    %v455 = vand.u32 2147483647, %v430
    %vm456 = vcmp.eq.f32.partialorder %v455, 8.507059e+37
    %v457 = vand.u32 %v430, 2147483648
    %v458 = vor.u32 1.1754944e-38, %v457
    %v459 = vsel %vm456, %v458, %v454
    %v460 = vmul.f32 %v398, %v459
    %v461 = vrcp.pop %v431
    %v462 = vmul.f32 %v431, %v461
    %v463 = vsub.f32 1.0, %v462
    %v464 = vmul.f32 %v461, %v463
    %v465 = vadd.f32 %v461, %v464
    %vm466 = vweird.f32 %v431
    %vm467 = vweird.f32 %v461
    %vm468 = vmor %vm466, %vm467
    %v469 = vsel %vm468, %v461, %v465
    %v470 = vand.u32 2147483647, %v431
    %vm471 = vcmp.eq.f32.partialorder %v470, 8.507059e+37
    %v472 = vand.u32 %v431, 2147483648
    %v473 = vor.u32 1.1754944e-38, %v472
    %v474 = vsel %vm471, %v473, %v469
    %v475 = vmul.f32 %v399, %v474
    %v476 = vrcp.pop %v432
    %v477 = vmul.f32 %v432, %v476
    %v478 = vsub.f32 1.0, %v477
    %v479 = vmul.f32 %v476, %v478
    %v480 = vadd.f32 %v476, %v479
    %vm481 = vweird.f32 %v432
    %vm482 = vweird.f32 %v476
    %vm483 = vmor %vm481, %vm482
    %v484 = vsel %vm483, %v476, %v480
    %v485 = vand.u32 2147483647, %v432
    %vm486 = vcmp.eq.f32.partialorder %v485, 8.507059e+37
    %v487 = vand.u32 %v432, 2147483648
    %v488 = vor.u32 1.1754944e-38, %v487
    %v489 = vsel %vm486, %v488, %v484
    %v490 = vmul.f32 %v400, %v489
    %v491 = vrcp.pop %v433
    %v492 = vmul.f32 %v433, %v491
    %v493 = vsub.f32 1.0, %v492
    %v494 = vmul.f32 %v491, %v493
    %v495 = vadd.f32 %v491, %v494
    %vm496 = vweird.f32 %v433
    %vm497 = vweird.f32 %v491
    %vm498 = vmor %vm496, %vm497
    %v499 = vsel %vm498, %v491, %v495
    %v500 = vand.u32 2147483647, %v433
    %vm501 = vcmp.eq.f32.partialorder %v500, 8.507059e+37
    %v502 = vand.u32 %v433, 2147483648
    %v503 = vor.u32 1.1754944e-38, %v502
    %v504 = vsel %vm501, %v503, %v499
    %v505 = vmul.f32 %v401, %v504
    %v506 = vrcp.pop %v434
    %v507 = vmul.f32 %v434, %v506
    %v508 = vsub.f32 1.0, %v507
    %v509 = vmul.f32 %v506, %v508
    %v510 = vadd.f32 %v506, %v509
    %vm511 = vweird.f32 %v434
    %vm512 = vweird.f32 %v506
    %vm513 = vmor %vm511, %vm512
    %v514 = vsel %vm513, %v506, %v510
    %v515 = vand.u32 2147483647, %v434
    %vm516 = vcmp.eq.f32.partialorder %v515, 8.507059e+37
    %v517 = vand.u32 %v434, 2147483648
    %v518 = vor.u32 1.1754944e-38, %v517
    %v519 = vsel %vm516, %v518, %v514
    %v520 = vmul.f32 %v402, %v519
    %v521 = vrcp.pop %v435
    %v522 = vmul.f32 %v435, %v521
    %v523 = vsub.f32 1.0, %v522
    %v524 = vmul.f32 %v521, %v523
    %v525 = vadd.f32 %v521, %v524
    %vm526 = vweird.f32 %v435
    %vm527 = vweird.f32 %v521
    %vm528 = vmor %vm526, %vm527
    %v529 = vsel %vm528, %v521, %v525
    %v530 = vand.u32 2147483647, %v435
    %vm531 = vcmp.eq.f32.partialorder %v530, 8.507059e+37
    %v532 = vand.u32 %v435, 2147483648
    %v533 = vor.u32 1.1754944e-38, %v532
    %v534 = vsel %vm531, %v533, %v529
    %v535 = vmul.f32 %v403, %v534
    %v536 = vrcp.pop %v436
    %v537 = vmul.f32 %v436, %v536
    %v538 = vsub.f32 1.0, %v537
    %v539 = vmul.f32 %v536, %v538
    %v540 = vadd.f32 %v536, %v539
    %vm541 = vweird.f32 %v436
    %vm542 = vweird.f32 %v536
    %vm543 = vmor %vm541, %vm542
    %v544 = vsel %vm543, %v536, %v540
    %v545 = vand.u32 2147483647, %v436
    %vm546 = vcmp.eq.f32.partialorder %v545, 8.507059e+37
    %v547 = vand.u32 %v436, 2147483648
    %v548 = vor.u32 1.1754944e-38, %v547
    %v549 = vsel %vm546, %v548, %v544
    %v550 = vmul.f32 %v404, %v549
    %v551 = vrcp.pop %v437
    %v552 = vmul.f32 %v437, %v551
    %v553 = vsub.f32 1.0, %v552
    %v554 = vmul.f32 %v551, %v553
    %v555 = vadd.f32 %v551, %v554
    %vm556 = vweird.f32 %v437
    %vm557 = vweird.f32 %v551
    %vm558 = vmor %vm556, %vm557
    %v559 = vsel %vm558, %v551, %v555
    %v560 = vand.u32 2147483647, %v437
    %vm561 = vcmp.eq.f32.partialorder %v560, 8.507059e+37
    %v562 = vand.u32 %v437, 2147483648
    %v563 = vor.u32 1.1754944e-38, %v562
    %v564 = vsel %vm561, %v563, %v559
    %v565 = vmul.f32 %v405, %v564
    %v566 = vrcp.pop %v438
    %v567 = vmul.f32 %v438, %v566
    %v568 = vsub.f32 1.0, %v567
    %v569 = vmul.f32 %v566, %v568
    %v570 = vadd.f32 %v566, %v569
    %vm571 = vweird.f32 %v438
    %vm572 = vweird.f32 %v566
    %vm573 = vmor %vm571, %vm572
    %v574 = vsel %vm573, %v566, %v570
    %v575 = vand.u32 2147483647, %v438
    %vm576 = vcmp.eq.f32.partialorder %v575, 8.507059e+37
    %v577 = vand.u32 %v438, 2147483648
    %v578 = vor.u32 1.1754944e-38, %v577
    %v579 = vsel %vm576, %v578, %v574
    %v580 = vmul.f32 %v406, %v579
    %v581 = vrcp.pop %v439
    %v582 = vmul.f32 %v439, %v581
    %v583 = vsub.f32 1.0, %v582
    %v584 = vmul.f32 %v581, %v583
    %v585 = vadd.f32 %v581, %v584
    %vm586 = vweird.f32 %v439
    %vm587 = vweird.f32 %v581
    %vm588 = vmor %vm586, %vm587
    %v589 = vsel %vm588, %v581, %v585
    %v590 = vand.u32 2147483647, %v439
    %vm591 = vcmp.eq.f32.partialorder %v590, 8.507059e+37
    %v592 = vand.u32 %v439, 2147483648
    %v593 = vor.u32 1.1754944e-38, %v592
    %v594 = vsel %vm591, %v593, %v589
    %v595 = vmul.f32 %v407, %v594
    %v596 = vrcp.pop %v440
    %v597 = vmul.f32 %v440, %v596
    %v598 = vsub.f32 1.0, %v597
    %v599 = vmul.f32 %v596, %v598
    %v600 = vadd.f32 %v596, %v599
    %vm601 = vweird.f32 %v440
    %vm602 = vweird.f32 %v596
    %vm603 = vmor %vm601, %vm602
    %v604 = vsel %vm603, %v596, %v600
    %v605 = vand.u32 2147483647, %v440
    %vm606 = vcmp.eq.f32.partialorder %v605, 8.507059e+37
    %v607 = vand.u32 %v440, 2147483648
    %v608 = vor.u32 1.1754944e-38, %v607
    %v609 = vsel %vm606, %v608, %v604
    %v610 = vmul.f32 %v408, %v609
    %v611 = vrcp.pop %v441
    %v612 = vmul.f32 %v441, %v611
    %v613 = vsub.f32 1.0, %v612
    %v614 = vmul.f32 %v611, %v613
    %v615 = vadd.f32 %v611, %v614
    %vm616 = vweird.f32 %v441
    %vm617 = vweird.f32 %v611
    %vm618 = vmor %vm616, %vm617
    %v619 = vsel %vm618, %v611, %v615
    %v620 = vand.u32 2147483647, %v441
    %vm621 = vcmp.eq.f32.partialorder %v620, 8.507059e+37
    %v622 = vand.u32 %v441, 2147483648
    %v623 = vor.u32 1.1754944e-38, %v622
    %v624 = vsel %vm621, %v623, %v619
    %v625 = vmul.f32 %v409, %v624
    %v626 = vrcp.pop %v442
    %v627 = vmul.f32 %v442, %v626
    %v628 = vsub.f32 1.0, %v627
    %v629 = vmul.f32 %v626, %v628
    %v630 = vadd.f32 %v626, %v629
    %vm631 = vweird.f32 %v442
    %vm632 = vweird.f32 %v626
    %vm633 = vmor %vm631, %vm632
    %v634 = vsel %vm633, %v626, %v630
    %v635 = vand.u32 2147483647, %v442
    %vm636 = vcmp.eq.f32.partialorder %v635, 8.507059e+37
    %v637 = vand.u32 %v442, 2147483648
    %v638 = vor.u32 1.1754944e-38, %v637
    %v639 = vsel %vm636, %v638, %v634
    %v640 = vmul.f32 %v410, %v639
    %v641 = vrcp.pop %v443
    %v642 = vmul.f32 %v443, %v641
    %v643 = vsub.f32 1.0, %v642
    %v644 = vmul.f32 %v641, %v643
    %v645 = vadd.f32 %v641, %v644
    %vm646 = vweird.f32 %v443
    %vm647 = vweird.f32 %v641
    %vm648 = vmor %vm646, %vm647
    %v649 = vsel %vm648, %v641, %v645
    %v650 = vand.u32 2147483647, %v443
    %vm651 = vcmp.eq.f32.partialorder %v650, 8.507059e+37
    %v652 = vand.u32 %v443, 2147483648
    %v653 = vor.u32 1.1754944e-38, %v652
    %v654 = vsel %vm651, %v653, %v649
    %v655 = vmul.f32 %v411, %v654
    %v656 = vrcp.pop %v444
    %v657 = vmul.f32 %v444, %v656
    %v658 = vsub.f32 1.0, %v657
    %v659 = vmul.f32 %v656, %v658
    %v660 = vadd.f32 %v656, %v659
    %vm661 = vweird.f32 %v444
    %vm662 = vweird.f32 %v656
    %vm663 = vmor %vm661, %vm662
    %v664 = vsel %vm663, %v656, %v660
    %v665 = vand.u32 2147483647, %v444
    %vm666 = vcmp.eq.f32.partialorder %v665, 8.507059e+37
    %v667 = vand.u32 %v444, 2147483648
    %v668 = vor.u32 1.1754944e-38, %v667
    %v669 = vsel %vm666, %v668, %v664
    %v670 = vmul.f32 %v412, %v669
    %v671 = vrcp.pop %v445
    %v672 = vmul.f32 %v445, %v671
    %v673 = vsub.f32 1.0, %v672
    %v674 = vmul.f32 %v671, %v673
    %v675 = vadd.f32 %v671, %v674
    %vm676 = vweird.f32 %v445
    %vm677 = vweird.f32 %v671
    %vm678 = vmor %vm676, %vm677
    %v679 = vsel %vm678, %v671, %v675
    %v680 = vand.u32 2147483647, %v445
    %vm681 = vcmp.eq.f32.partialorder %v680, 8.507059e+37
    %v682 = vand.u32 %v445, 2147483648
    %v683 = vor.u32 1.1754944e-38, %v682
    %v684 = vsel %vm681, %v683, %v679
    %v685 = vmul.f32 %v413, %v684
    %v686 = vmul.f32 %v460, 0.17677669
    %v687 = vmul.f32 %v475, 0.17677669
    %v688 = vmul.f32 %v490, 0.17677669
    %v689 = vmul.f32 %v505, 0.17677669
    %v690 = vmul.f32 %v520, 0.17677669
    %v691 = vmul.f32 %v535, 0.17677669
    %v692 = vmul.f32 %v550, 0.17677669
    %v693 = vmul.f32 %v565, 0.17677669
    %v694 = vmul.f32 %v580, 0.17677669
    %v695 = vmul.f32 %v595, 0.17677669
    %v696 = vmul.f32 %v610, 0.17677669
    %v697 = vmul.f32 %v625, 0.17677669
    %v698 = vmul.f32 %v640, 0.17677669
    %v699 = vmul.f32 %v655, 0.17677669
    %v700 = vmul.f32 %v670, 0.17677669
    %v701 = vmul.f32 %v685, 0.17677669
    %v702 = vadd.f32 %v141, %v686
    %v703 = vadd.f32 %v142, %v687
    %v704 = vadd.f32 %v143, %v688
    %v705 = vadd.f32 %v144, %v689
    %v706 = vadd.f32 %v145, %v690
    %v707 = vadd.f32 %v146, %v691
    %v708 = vadd.f32 %v147, %v692
    %v709 = vadd.f32 %v148, %v693
    %v710 = vadd.f32 %v141, %v694
    %v711 = vadd.f32 %v142, %v695
    %v712 = vadd.f32 %v143, %v696
    %v713 = vadd.f32 %v144, %v697
    %v714 = vadd.f32 %v145, %v698
    %v715 = vadd.f32 %v146, %v699
    %v716 = vadd.f32 %v147, %v700
    %v717 = vadd.f32 %v148, %v701
    %v718 = vsel %vm263, %v248, %v247
    %v719 = vsel %vm264, %v249, %v718
    %v720 = vsel %vm266, %v250, %v719
    %v721 = vsel %vm268, %v251, %v720
    %v722 = vsel %vm270, %v252, %v721
    %v723 = vsel %vm272, %v253, %v722
    %v724 = vsel %vm274, %v254, %v723
    %v725 = vsel %vm263, %v256, %v255
    %v726 = vsel %vm264, %v257, %v725
    %v727 = vsel %vm266, %v258, %v726
    %v728 = vsel %vm268, %v259, %v727
    %v729 = vsel %vm270, %v260, %v728
    %v730 = vsel %vm272, %v261, %v729
    %v731 = vsel %vm274, %v262, %v730
    %734 = vxpose.xlu0.b32.start [1/16] %v724, 128
    %735 = vxpose.xlu0.b32.cont [2/16] 0.0, 128
    %736 = vxpose.xlu0.b32.cont [3/16] 0.0, 128
    %737 = vxpose.xlu0.b32.cont [4/16] 0.0, 128
    %738 = vxpose.xlu0.b32.cont [5/16] 0.0, 128
    %739 = vxpose.xlu0.b32.cont [6/16] 0.0, 128
    %740 = vxpose.xlu0.b32.cont [7/16] 0.0, 128
    %741 = vxpose.xlu0.b32.cont [8/16] 0.0, 128
    %742 = vxpose.xlu0.b32.cont [9/16] 0.0, 128
    %743 = vxpose.xlu0.b32.cont [10/16] 0.0, 128
    %744 = vxpose.xlu0.b32.cont [11/16] 0.0, 128
    %745 = vxpose.xlu0.b32.cont [12/16] 0.0, 128
    %746 = vxpose.xlu0.b32.cont [13/16] 0.0, 128
    %747 = vxpose.xlu0.b32.cont [14/16] 0.0, 128
    %748 = vxpose.xlu0.b32.cont [15/16] 0.0, 128
    %749 = vxpose.xlu0.b32.end [16/16] 0.0, 128
    %v750 = vpop.trf.xlu0
    %v751 = vpop.trf.xlu0
    %v752 = vpop.trf.xlu0
    %v753 = vpop.trf.xlu0
    %v754 = vpop.trf.xlu0
    %v755 = vpop.trf.xlu0
    %v756 = vpop.trf.xlu0
    %v757 = vpop.trf.xlu0
    %v758 = vpop.trf.xlu0
    %v759 = vpop.trf.xlu0
    %v760 = vpop.trf.xlu0
    %v761 = vpop.trf.xlu0
    %v762 = vpop.trf.xlu0
    %v763 = vpop.trf.xlu0
    %v764 = vpop.trf.xlu0
    %v765 = vpop.trf.xlu0
    %766 = vxpose.xlu0.b32.start [1/16] %v731, 128
    %767 = vxpose.xlu0.b32.cont [2/16] 0.0, 128
    %768 = vxpose.xlu0.b32.cont [3/16] 0.0, 128
    %769 = vxpose.xlu0.b32.cont [4/16] 0.0, 128
    %770 = vxpose.xlu0.b32.cont [5/16] 0.0, 128
    %771 = vxpose.xlu0.b32.cont [6/16] 0.0, 128
    %772 = vxpose.xlu0.b32.cont [7/16] 0.0, 128
    %773 = vxpose.xlu0.b32.cont [8/16] 0.0, 128
    %774 = vxpose.xlu0.b32.cont [9/16] 0.0, 128
    %775 = vxpose.xlu0.b32.cont [10/16] 0.0, 128
    %776 = vxpose.xlu0.b32.cont [11/16] 0.0, 128
    %777 = vxpose.xlu0.b32.cont [12/16] 0.0, 128
    %778 = vxpose.xlu0.b32.cont [13/16] 0.0, 128
    %779 = vxpose.xlu0.b32.cont [14/16] 0.0, 128
    %780 = vxpose.xlu0.b32.cont [15/16] 0.0, 128
    %781 = vxpose.xlu0.b32.end [16/16] 0.0, 128
    %v782 = vpop.trf.xlu0
    %v783 = vpop.trf.xlu0
    %v784 = vpop.trf.xlu0
    %v785 = vpop.trf.xlu0
    %v786 = vpop.trf.xlu0
    %v787 = vpop.trf.xlu0
    %v788 = vpop.trf.xlu0
    %v789 = vpop.trf.xlu0
    %v790 = vpop.trf.xlu0
    %v791 = vpop.trf.xlu0
    %v792 = vpop.trf.xlu0
    %v793 = vpop.trf.xlu0
    %v794 = vpop.trf.xlu0
    %v795 = vpop.trf.xlu0
    %v796 = vpop.trf.xlu0
    %v797 = vpop.trf.xlu0
    %v798 = vsub.f32 %v213, %v750
    %v799 = vsub.f32 %v214, %v750
    %v800 = vsub.f32 %v215, %v750
    %v801 = vsub.f32 %v216, %v750
    %v802 = vsub.f32 %v217, %v750
    %v803 = vsub.f32 %v218, %v750
    %v804 = vsub.f32 %v219, %v750
    %v805 = vsub.f32 %v220, %v750
    %v806 = vsub.f32 %v221, %v782
    %v807 = vsub.f32 %v222, %v782
    %v808 = vsub.f32 %v223, %v782
    %v809 = vsub.f32 %v224, %v782
    %v810 = vsub.f32 %v225, %v782
    %v811 = vsub.f32 %v226, %v782
    %v812 = vsub.f32 %v227, %v782
    %v813 = vsub.f32 %v228, %v782
    %v814 = vand.u32 2147483647, %v798
    %v815 = vand.u32 2147483647, %v799
    %v816 = vand.u32 2147483647, %v800
    %v817 = vand.u32 2147483647, %v801
    %v818 = vand.u32 2147483647, %v802
    %v819 = vand.u32 2147483647, %v803
    %v820 = vand.u32 2147483647, %v804
    %v821 = vand.u32 2147483647, %v805
    %v822 = vand.u32 2147483647, %v806
    %v823 = vand.u32 2147483647, %v807
    %v824 = vand.u32 2147483647, %v808
    %v825 = vand.u32 2147483647, %v809
    %v826 = vand.u32 2147483647, %v810
    %v827 = vand.u32 2147483647, %v811
    %v828 = vand.u32 2147483647, %v812
    %v829 = vand.u32 2147483647, %v813
    %v830 = vadd.f32 %v814, 1.0
    %v831 = vadd.f32 %v815, 1.0
    %v832 = vadd.f32 %v816, 1.0
    %v833 = vadd.f32 %v817, 1.0
    %v834 = vadd.f32 %v818, 1.0
    %v835 = vadd.f32 %v819, 1.0
    %v836 = vadd.f32 %v820, 1.0
    %v837 = vadd.f32 %v821, 1.0
    %v838 = vadd.f32 %v822, 1.0
    %v839 = vadd.f32 %v823, 1.0
    %v840 = vadd.f32 %v824, 1.0
    %v841 = vadd.f32 %v825, 1.0
    %v842 = vadd.f32 %v826, 1.0
    %v843 = vadd.f32 %v827, 1.0
    %v844 = vadd.f32 %v828, 1.0
    %v845 = vadd.f32 %v829, 1.0
    %v846 = vrcp.pop %v830
    %v847 = vmul.f32 %v830, %v846
    %v848 = vsub.f32 1.0, %v847
    %v849 = vmul.f32 %v846, %v848
    %v850 = vadd.f32 %v846, %v849
    %vm851 = vweird.f32 %v830
    %vm852 = vweird.f32 %v846
    %vm853 = vmor %vm851, %vm852
    %v854 = vsel %vm853, %v846, %v850
    %v855 = vand.u32 2147483647, %v830
    %vm856 = vcmp.eq.f32.partialorder %v855, 8.507059e+37
    %v857 = vand.u32 %v830, 2147483648
    %v858 = vor.u32 1.1754944e-38, %v857
    %v859 = vsel %vm856, %v858, %v854
    %v860 = vmul.f32 %v798, %v859
    %v861 = vrcp.pop %v831
    %v862 = vmul.f32 %v831, %v861
    %v863 = vsub.f32 1.0, %v862
    %v864 = vmul.f32 %v861, %v863
    %v865 = vadd.f32 %v861, %v864
    %vm866 = vweird.f32 %v831
    %vm867 = vweird.f32 %v861
    %vm868 = vmor %vm866, %vm867
    %v869 = vsel %vm868, %v861, %v865
    %v870 = vand.u32 2147483647, %v831
    %vm871 = vcmp.eq.f32.partialorder %v870, 8.507059e+37
    %v872 = vand.u32 %v831, 2147483648
    %v873 = vor.u32 1.1754944e-38, %v872
    %v874 = vsel %vm871, %v873, %v869
    %v875 = vmul.f32 %v799, %v874
    %v876 = vrcp.pop %v832
    %v877 = vmul.f32 %v832, %v876
    %v878 = vsub.f32 1.0, %v877
    %v879 = vmul.f32 %v876, %v878
    %v880 = vadd.f32 %v876, %v879
    %vm881 = vweird.f32 %v832
    %vm882 = vweird.f32 %v876
    %vm883 = vmor %vm881, %vm882
    %v884 = vsel %vm883, %v876, %v880
    %v885 = vand.u32 2147483647, %v832
    %vm886 = vcmp.eq.f32.partialorder %v885, 8.507059e+37
    %v887 = vand.u32 %v832, 2147483648
    %v888 = vor.u32 1.1754944e-38, %v887
    %v889 = vsel %vm886, %v888, %v884
    %v890 = vmul.f32 %v800, %v889
    %v891 = vrcp.pop %v833
    %v892 = vmul.f32 %v833, %v891
    %v893 = vsub.f32 1.0, %v892
    %v894 = vmul.f32 %v891, %v893
    %v895 = vadd.f32 %v891, %v894
    %vm896 = vweird.f32 %v833
    %vm897 = vweird.f32 %v891
    %vm898 = vmor %vm896, %vm897
    %v899 = vsel %vm898, %v891, %v895
    %v900 = vand.u32 2147483647, %v833
    %vm901 = vcmp.eq.f32.partialorder %v900, 8.507059e+37
    %v902 = vand.u32 %v833, 2147483648
    %v903 = vor.u32 1.1754944e-38, %v902
    %v904 = vsel %vm901, %v903, %v899
    %v905 = vmul.f32 %v801, %v904
    %v906 = vrcp.pop %v834
    %v907 = vmul.f32 %v834, %v906
    %v908 = vsub.f32 1.0, %v907
    %v909 = vmul.f32 %v906, %v908
    %v910 = vadd.f32 %v906, %v909
    %vm911 = vweird.f32 %v834
    %vm912 = vweird.f32 %v906
    %vm913 = vmor %vm911, %vm912
    %v914 = vsel %vm913, %v906, %v910
    %v915 = vand.u32 2147483647, %v834
    %vm916 = vcmp.eq.f32.partialorder %v915, 8.507059e+37
    %v917 = vand.u32 %v834, 2147483648
    %v918 = vor.u32 1.1754944e-38, %v917
    %v919 = vsel %vm916, %v918, %v914
    %v920 = vmul.f32 %v802, %v919
    %v921 = vrcp.pop %v835
    %v922 = vmul.f32 %v835, %v921
    %v923 = vsub.f32 1.0, %v922
    %v924 = vmul.f32 %v921, %v923
    %v925 = vadd.f32 %v921, %v924
    %vm926 = vweird.f32 %v835
    %vm927 = vweird.f32 %v921
    %vm928 = vmor %vm926, %vm927
    %v929 = vsel %vm928, %v921, %v925
    %v930 = vand.u32 2147483647, %v835
    %vm931 = vcmp.eq.f32.partialorder %v930, 8.507059e+37
    %v932 = vand.u32 %v835, 2147483648
    %v933 = vor.u32 1.1754944e-38, %v932
    %v934 = vsel %vm931, %v933, %v929
    %v935 = vmul.f32 %v803, %v934
    %v936 = vrcp.pop %v836
    %v937 = vmul.f32 %v836, %v936
    %v938 = vsub.f32 1.0, %v937
    %v939 = vmul.f32 %v936, %v938
    %v940 = vadd.f32 %v936, %v939
    %vm941 = vweird.f32 %v836
    %vm942 = vweird.f32 %v936
    %vm943 = vmor %vm941, %vm942
    %v944 = vsel %vm943, %v936, %v940
    %v945 = vand.u32 2147483647, %v836
    %vm946 = vcmp.eq.f32.partialorder %v945, 8.507059e+37
    %v947 = vand.u32 %v836, 2147483648
    %v948 = vor.u32 1.1754944e-38, %v947
    %v949 = vsel %vm946, %v948, %v944
    %v950 = vmul.f32 %v804, %v949
    %v951 = vrcp.pop %v837
    %v952 = vmul.f32 %v837, %v951
    %v953 = vsub.f32 1.0, %v952
    %v954 = vmul.f32 %v951, %v953
    %v955 = vadd.f32 %v951, %v954
    %vm956 = vweird.f32 %v837
    %vm957 = vweird.f32 %v951
    %vm958 = vmor %vm956, %vm957
    %v959 = vsel %vm958, %v951, %v955
    %v960 = vand.u32 2147483647, %v837
    %vm961 = vcmp.eq.f32.partialorder %v960, 8.507059e+37
    %v962 = vand.u32 %v837, 2147483648
    %v963 = vor.u32 1.1754944e-38, %v962
    %v964 = vsel %vm961, %v963, %v959
    %v965 = vmul.f32 %v805, %v964
    %v966 = vrcp.pop %v838
    %v967 = vmul.f32 %v838, %v966
    %v968 = vsub.f32 1.0, %v967
    %v969 = vmul.f32 %v966, %v968
    %v970 = vadd.f32 %v966, %v969
    %vm971 = vweird.f32 %v838
    %vm972 = vweird.f32 %v966
    %vm973 = vmor %vm971, %vm972
    %v974 = vsel %vm973, %v966, %v970
    %v975 = vand.u32 2147483647, %v838
    %vm976 = vcmp.eq.f32.partialorder %v975, 8.507059e+37
    %v977 = vand.u32 %v838, 2147483648
    %v978 = vor.u32 1.1754944e-38, %v977
    %v979 = vsel %vm976, %v978, %v974
    %v980 = vmul.f32 %v806, %v979
    %v981 = vrcp.pop %v839
    %v982 = vmul.f32 %v839, %v981
    %v983 = vsub.f32 1.0, %v982
    %v984 = vmul.f32 %v981, %v983
    %v985 = vadd.f32 %v981, %v984
    %vm986 = vweird.f32 %v839
    %vm987 = vweird.f32 %v981
    %vm988 = vmor %vm986, %vm987
    %v989 = vsel %vm988, %v981, %v985
    %v990 = vand.u32 2147483647, %v839
    %vm991 = vcmp.eq.f32.partialorder %v990, 8.507059e+37
    %v992 = vand.u32 %v839, 2147483648
    %v993 = vor.u32 1.1754944e-38, %v992
    %v994 = vsel %vm991, %v993, %v989
    %v995 = vmul.f32 %v807, %v994
    %v996 = vrcp.pop %v840
    %v997 = vmul.f32 %v840, %v996
    %v998 = vsub.f32 1.0, %v997
    %v999 = vmul.f32 %v996, %v998
    %v1000 = vadd.f32 %v996, %v999
    %vm1001 = vweird.f32 %v840
    %vm1002 = vweird.f32 %v996
    %vm1003 = vmor %vm1001, %vm1002
    %v1004 = vsel %vm1003, %v996, %v1000
    %v1005 = vand.u32 2147483647, %v840
    %vm1006 = vcmp.eq.f32.partialorder %v1005, 8.507059e+37
    %v1007 = vand.u32 %v840, 2147483648
    %v1008 = vor.u32 1.1754944e-38, %v1007
    %v1009 = vsel %vm1006, %v1008, %v1004
    %v1010 = vmul.f32 %v808, %v1009
    %v1011 = vrcp.pop %v841
    %v1012 = vmul.f32 %v841, %v1011
    %v1013 = vsub.f32 1.0, %v1012
    %v1014 = vmul.f32 %v1011, %v1013
    %v1015 = vadd.f32 %v1011, %v1014
    %vm1016 = vweird.f32 %v841
    %vm1017 = vweird.f32 %v1011
    %vm1018 = vmor %vm1016, %vm1017
    %v1019 = vsel %vm1018, %v1011, %v1015
    %v1020 = vand.u32 2147483647, %v841
    %vm1021 = vcmp.eq.f32.partialorder %v1020, 8.507059e+37
    %v1022 = vand.u32 %v841, 2147483648
    %v1023 = vor.u32 1.1754944e-38, %v1022
    %v1024 = vsel %vm1021, %v1023, %v1019
    %v1025 = vmul.f32 %v809, %v1024
    %v1026 = vrcp.pop %v842
    %v1027 = vmul.f32 %v842, %v1026
    %v1028 = vsub.f32 1.0, %v1027
    %v1029 = vmul.f32 %v1026, %v1028
    %v1030 = vadd.f32 %v1026, %v1029
    %vm1031 = vweird.f32 %v842
    %vm1032 = vweird.f32 %v1026
    %vm1033 = vmor %vm1031, %vm1032
    %v1034 = vsel %vm1033, %v1026, %v1030
    %v1035 = vand.u32 2147483647, %v842
    %vm1036 = vcmp.eq.f32.partialorder %v1035, 8.507059e+37
    %v1037 = vand.u32 %v842, 2147483648
    %v1038 = vor.u32 1.1754944e-38, %v1037
    %v1039 = vsel %vm1036, %v1038, %v1034
    %v1040 = vmul.f32 %v810, %v1039
    %v1041 = vrcp.pop %v843
    %v1042 = vmul.f32 %v843, %v1041
    %v1043 = vsub.f32 1.0, %v1042
    %v1044 = vmul.f32 %v1041, %v1043
    %v1045 = vadd.f32 %v1041, %v1044
    %vm1046 = vweird.f32 %v843
    %vm1047 = vweird.f32 %v1041
    %vm1048 = vmor %vm1046, %vm1047
    %v1049 = vsel %vm1048, %v1041, %v1045
    %v1050 = vand.u32 2147483647, %v843
    %vm1051 = vcmp.eq.f32.partialorder %v1050, 8.507059e+37
    %v1052 = vand.u32 %v843, 2147483648
    %v1053 = vor.u32 1.1754944e-38, %v1052
    %v1054 = vsel %vm1051, %v1053, %v1049
    %v1055 = vmul.f32 %v811, %v1054
    %v1056 = vrcp.pop %v844
    %v1057 = vmul.f32 %v844, %v1056
    %v1058 = vsub.f32 1.0, %v1057
    %v1059 = vmul.f32 %v1056, %v1058
    %v1060 = vadd.f32 %v1056, %v1059
    %vm1061 = vweird.f32 %v844
    %vm1062 = vweird.f32 %v1056
    %vm1063 = vmor %vm1061, %vm1062
    %v1064 = vsel %vm1063, %v1056, %v1060
    %v1065 = vand.u32 2147483647, %v844
    %vm1066 = vcmp.eq.f32.partialorder %v1065, 8.507059e+37
    %v1067 = vand.u32 %v844, 2147483648
    %v1068 = vor.u32 1.1754944e-38, %v1067
    %v1069 = vsel %vm1066, %v1068, %v1064
    %v1070 = vmul.f32 %v812, %v1069
    %v1071 = vrcp.pop %v845
    %v1072 = vmul.f32 %v845, %v1071
    %v1073 = vsub.f32 1.0, %v1072
    %v1074 = vmul.f32 %v1071, %v1073
    %v1075 = vadd.f32 %v1071, %v1074
    %vm1076 = vweird.f32 %v845
    %vm1077 = vweird.f32 %v1071
    %vm1078 = vmor %vm1076, %vm1077
    %v1079 = vsel %vm1078, %v1071, %v1075
    %v1080 = vand.u32 2147483647, %v845
    %vm1081 = vcmp.eq.f32.partialorder %v1080, 8.507059e+37
    %v1082 = vand.u32 %v845, 2147483648
    %v1083 = vor.u32 1.1754944e-38, %v1082
    %v1084 = vsel %vm1081, %v1083, %v1079
    %v1085 = vmul.f32 %v813, %v1084
    %v1086 = vmul.f32 %v860, 0.17677669
    %v1087 = vmul.f32 %v875, 0.17677669
    %v1088 = vmul.f32 %v890, 0.17677669
    %v1089 = vmul.f32 %v905, 0.17677669
    %v1090 = vmul.f32 %v920, 0.17677669
    %v1091 = vmul.f32 %v935, 0.17677669
    %v1092 = vmul.f32 %v950, 0.17677669
    %v1093 = vmul.f32 %v965, 0.17677669
    %v1094 = vmul.f32 %v980, 0.17677669
    %v1095 = vmul.f32 %v995, 0.17677669
    %v1096 = vmul.f32 %v1010, 0.17677669
    %v1097 = vmul.f32 %v1025, 0.17677669
    %v1098 = vmul.f32 %v1040, 0.17677669
    %v1099 = vmul.f32 %v1055, 0.17677669
    %v1100 = vmul.f32 %v1070, 0.17677669
    %v1101 = vmul.f32 %v1085, 0.17677669
    %v1102 = vadd.f32 %v149, %v1086
    %v1103 = vadd.f32 %v150, %v1087
    %v1104 = vadd.f32 %v151, %v1088
    %v1105 = vadd.f32 %v152, %v1089
    %v1106 = vadd.f32 %v153, %v1090
    %v1107 = vadd.f32 %v154, %v1091
    %v1108 = vadd.f32 %v155, %v1092
    %v1109 = vadd.f32 %v156, %v1093
    %v1110 = vadd.f32 %v149, %v1094
    %v1111 = vadd.f32 %v150, %v1095
    %v1112 = vadd.f32 %v151, %v1096
    %v1113 = vadd.f32 %v152, %v1097
    %v1114 = vadd.f32 %v153, %v1098
    %v1115 = vadd.f32 %v154, %v1099
    %v1116 = vadd.f32 %v155, %v1100
    %v1117 = vadd.f32 %v156, %v1101
    %1119 = vset.pattern.permute.xlu0 0
    %1120 = vperm.xlu0 %1119, %v702
    %v1121 = vpop.permute.xlu0 %1120
    %1124 = vset.pattern.permute.xlu0 0
    %1125 = vperm.xlu0 %1124, %v703
    %v1126 = vpop.permute.xlu0 %1125
    %1129 = vset.pattern.permute.xlu0 0
    %1130 = vperm.xlu0 %1129, %v704
    %v1131 = vpop.permute.xlu0 %1130
    %1134 = vset.pattern.permute.xlu0 0
    %1135 = vperm.xlu0 %1134, %v705
    %v1136 = vpop.permute.xlu0 %1135
    %1139 = vset.pattern.permute.xlu0 0
    %1140 = vperm.xlu0 %1139, %v706
    %v1141 = vpop.permute.xlu0 %1140
    %1144 = vset.pattern.permute.xlu0 0
    %1145 = vperm.xlu0 %1144, %v707
    %v1146 = vpop.permute.xlu0 %1145
    %1149 = vset.pattern.permute.xlu0 0
    %1150 = vperm.xlu0 %1149, %v708
    %v1151 = vpop.permute.xlu0 %1150
    %1154 = vset.pattern.permute.xlu0 0
    %1155 = vperm.xlu0 %1154, %v709
    %v1156 = vpop.permute.xlu0 %1155
    %1159 = vset.pattern.permute.xlu0 0
    %1160 = vperm.xlu0 %1159, %v710
    %v1161 = vpop.permute.xlu0 %1160
    %1164 = vset.pattern.permute.xlu0 0
    %1165 = vperm.xlu0 %1164, %v711
    %v1166 = vpop.permute.xlu0 %1165
    %1169 = vset.pattern.permute.xlu0 0
    %1170 = vperm.xlu0 %1169, %v712
    %v1171 = vpop.permute.xlu0 %1170
    %1174 = vset.pattern.permute.xlu0 0
    %1175 = vperm.xlu0 %1174, %v713
    %v1176 = vpop.permute.xlu0 %1175
    %1179 = vset.pattern.permute.xlu0 0
    %1180 = vperm.xlu0 %1179, %v714
    %v1181 = vpop.permute.xlu0 %1180
    %1184 = vset.pattern.permute.xlu0 0
    %1185 = vperm.xlu0 %1184, %v715
    %v1186 = vpop.permute.xlu0 %1185
    %1189 = vset.pattern.permute.xlu0 0
    %1190 = vperm.xlu0 %1189, %v716
    %v1191 = vpop.permute.xlu0 %1190
    %1194 = vset.pattern.permute.xlu0 0
    %1195 = vperm.xlu0 %1194, %v717
    %v1196 = vpop.permute.xlu0 %1195
    %v1198 = vperm.slane %v109, 0
    %v1199 = vperm.slane %v110, 0
    %v1200 = vperm.slane %v111, 0
    %v1201 = vperm.slane %v112, 0
    %v1202 = vperm.slane %v113, 0
    %v1203 = vperm.slane %v114, 0
    %v1204 = vperm.slane %v115, 0
    %v1205 = vperm.slane %v116, 0
    %v1206 = vperm.slane %v117, 0
    %v1207 = vperm.slane %v118, 0
    %v1208 = vperm.slane %v119, 0
    %v1209 = vperm.slane %v120, 0
    %v1210 = vperm.slane %v121, 0
    %v1211 = vperm.slane %v122, 0
    %v1212 = vperm.slane %v123, 0
    %v1213 = vperm.slane %v124, 0
    %v1214 = vmul.f32 %v1121, %v1198
    %v1215 = vmul.f32 %v1126, %v1199
    %v1216 = vmul.f32 %v1131, %v1200
    %v1217 = vmul.f32 %v1136, %v1201
    %v1218 = vmul.f32 %v1141, %v1202
    %v1219 = vmul.f32 %v1146, %v1203
    %v1220 = vmul.f32 %v1151, %v1204
    %v1221 = vmul.f32 %v1156, %v1205
    %v1222 = vmul.f32 %v1161, %v1206
    %v1223 = vmul.f32 %v1166, %v1207
    %v1224 = vmul.f32 %v1171, %v1208
    %v1225 = vmul.f32 %v1176, %v1209
    %v1226 = vmul.f32 %v1181, %v1210
    %v1227 = vmul.f32 %v1186, %v1211
    %v1228 = vmul.f32 %v1191, %v1212
    %v1229 = vmul.f32 %v1196, %v1213
    %v1230 = vadd.f32 %v1214, 0.0
    %v1231 = vadd.f32 %v1215, 0.0
    %v1232 = vadd.f32 %v1216, 0.0
    %v1233 = vadd.f32 %v1217, 0.0
    %v1234 = vadd.f32 %v1218, 0.0
    %v1235 = vadd.f32 %v1219, 0.0
    %v1236 = vadd.f32 %v1220, 0.0
    %v1237 = vadd.f32 %v1221, 0.0
    %v1238 = vadd.f32 %v1222, 0.0
    %v1239 = vadd.f32 %v1223, 0.0
    %v1240 = vadd.f32 %v1224, 0.0
    %v1241 = vadd.f32 %v1225, 0.0
    %v1242 = vadd.f32 %v1226, 0.0
    %v1243 = vadd.f32 %v1227, 0.0
    %v1244 = vadd.f32 %v1228, 0.0
    %v1245 = vadd.f32 %v1229, 0.0
    %1246 = vset.pattern.permute.xlu0 1
    %1247 = vperm.xlu0 %1246, %v702
    %v1248 = vpop.permute.xlu0 %1247
    %1250 = vset.pattern.permute.xlu0 1
    %1251 = vperm.xlu0 %1250, %v703
    %v1252 = vpop.permute.xlu0 %1251
    %1254 = vset.pattern.permute.xlu0 1
    %1255 = vperm.xlu0 %1254, %v704
    %v1256 = vpop.permute.xlu0 %1255
    %1258 = vset.pattern.permute.xlu0 1
    %1259 = vperm.xlu0 %1258, %v705
    %v1260 = vpop.permute.xlu0 %1259
    %1262 = vset.pattern.permute.xlu0 1
    %1263 = vperm.xlu0 %1262, %v706
    %v1264 = vpop.permute.xlu0 %1263
    %1266 = vset.pattern.permute.xlu0 1
    %1267 = vperm.xlu0 %1266, %v707
    %v1268 = vpop.permute.xlu0 %1267
    %1270 = vset.pattern.permute.xlu0 1
    %1271 = vperm.xlu0 %1270, %v708
    %v1272 = vpop.permute.xlu0 %1271
    %1274 = vset.pattern.permute.xlu0 1
    %1275 = vperm.xlu0 %1274, %v709
    %v1276 = vpop.permute.xlu0 %1275
    %1278 = vset.pattern.permute.xlu0 1
    %1279 = vperm.xlu0 %1278, %v710
    %v1280 = vpop.permute.xlu0 %1279
    %1282 = vset.pattern.permute.xlu0 1
    %1283 = vperm.xlu0 %1282, %v711
    %v1284 = vpop.permute.xlu0 %1283
    %1286 = vset.pattern.permute.xlu0 1
    %1287 = vperm.xlu0 %1286, %v712
    %v1288 = vpop.permute.xlu0 %1287
    %1290 = vset.pattern.permute.xlu0 1
    %1291 = vperm.xlu0 %1290, %v713
    %v1292 = vpop.permute.xlu0 %1291
    %1294 = vset.pattern.permute.xlu0 1
    %1295 = vperm.xlu0 %1294, %v714
    %v1296 = vpop.permute.xlu0 %1295
    %1298 = vset.pattern.permute.xlu0 1
    %1299 = vperm.xlu0 %1298, %v715
    %v1300 = vpop.permute.xlu0 %1299
    %1302 = vset.pattern.permute.xlu0 1
    %1303 = vperm.xlu0 %1302, %v716
    %v1304 = vpop.permute.xlu0 %1303
    %1306 = vset.pattern.permute.xlu0 1
    %1307 = vperm.xlu0 %1306, %v717
    %v1308 = vpop.permute.xlu0 %1307
    %v1310 = vperm.slane %v109, 1
    %v1311 = vperm.slane %v110, 1
    %v1312 = vperm.slane %v111, 1
    %v1313 = vperm.slane %v112, 1
    %v1314 = vperm.slane %v113, 1
    %v1315 = vperm.slane %v114, 1
    %v1316 = vperm.slane %v115, 1
    %v1317 = vperm.slane %v116, 1
    %v1318 = vperm.slane %v117, 1
    %v1319 = vperm.slane %v118, 1
    %v1320 = vperm.slane %v119, 1
    %v1321 = vperm.slane %v120, 1
    %v1322 = vperm.slane %v121, 1
    %v1323 = vperm.slane %v122, 1
    %v1324 = vperm.slane %v123, 1
    %v1325 = vperm.slane %v124, 1
    %v1326 = vmul.f32 %v1248, %v1310
    %v1327 = vmul.f32 %v1252, %v1311
    %v1328 = vmul.f32 %v1256, %v1312
    %v1329 = vmul.f32 %v1260, %v1313
    %v1330 = vmul.f32 %v1264, %v1314
    %v1331 = vmul.f32 %v1268, %v1315
    %v1332 = vmul.f32 %v1272, %v1316
    %v1333 = vmul.f32 %v1276, %v1317
    %v1334 = vmul.f32 %v1280, %v1318
    %v1335 = vmul.f32 %v1284, %v1319
    %v1336 = vmul.f32 %v1288, %v1320
    %v1337 = vmul.f32 %v1292, %v1321
    %v1338 = vmul.f32 %v1296, %v1322
    %v1339 = vmul.f32 %v1300, %v1323
    %v1340 = vmul.f32 %v1304, %v1324
    %v1341 = vmul.f32 %v1308, %v1325
    %v1342 = vadd.f32 %v1230, %v1326
    %v1343 = vadd.f32 %v1231, %v1327
    %v1344 = vadd.f32 %v1232, %v1328
    %v1345 = vadd.f32 %v1233, %v1329
    %v1346 = vadd.f32 %v1234, %v1330
    %v1347 = vadd.f32 %v1235, %v1331
    %v1348 = vadd.f32 %v1236, %v1332
    %v1349 = vadd.f32 %v1237, %v1333
    %v1350 = vadd.f32 %v1238, %v1334
    %v1351 = vadd.f32 %v1239, %v1335
    %v1352 = vadd.f32 %v1240, %v1336
    %v1353 = vadd.f32 %v1241, %v1337
    %v1354 = vadd.f32 %v1242, %v1338
    %v1355 = vadd.f32 %v1243, %v1339
    %v1356 = vadd.f32 %v1244, %v1340
    %v1357 = vadd.f32 %v1245, %v1341
    %1358 = vset.pattern.permute.xlu0 2
    %1359 = vperm.xlu0 %1358, %v702
    %v1360 = vpop.permute.xlu0 %1359
    %1362 = vset.pattern.permute.xlu0 2
    %1363 = vperm.xlu0 %1362, %v703
    %v1364 = vpop.permute.xlu0 %1363
    %1366 = vset.pattern.permute.xlu0 2
    %1367 = vperm.xlu0 %1366, %v704
    %v1368 = vpop.permute.xlu0 %1367
    %1370 = vset.pattern.permute.xlu0 2
    %1371 = vperm.xlu0 %1370, %v705
    %v1372 = vpop.permute.xlu0 %1371
    %1374 = vset.pattern.permute.xlu0 2
    %1375 = vperm.xlu0 %1374, %v706
    %v1376 = vpop.permute.xlu0 %1375
    %1378 = vset.pattern.permute.xlu0 2
    %1379 = vperm.xlu0 %1378, %v707
    %v1380 = vpop.permute.xlu0 %1379
    %1382 = vset.pattern.permute.xlu0 2
    %1383 = vperm.xlu0 %1382, %v708
    %v1384 = vpop.permute.xlu0 %1383
    %1386 = vset.pattern.permute.xlu0 2
    %1387 = vperm.xlu0 %1386, %v709
    %v1388 = vpop.permute.xlu0 %1387
    %1390 = vset.pattern.permute.xlu0 2
    %1391 = vperm.xlu0 %1390, %v710
    %v1392 = vpop.permute.xlu0 %1391
    %1394 = vset.pattern.permute.xlu0 2
    %1395 = vperm.xlu0 %1394, %v711
    %v1396 = vpop.permute.xlu0 %1395
    %1398 = vset.pattern.permute.xlu0 2
    %1399 = vperm.xlu0 %1398, %v712
    %v1400 = vpop.permute.xlu0 %1399
    %1402 = vset.pattern.permute.xlu0 2
    %1403 = vperm.xlu0 %1402, %v713
    %v1404 = vpop.permute.xlu0 %1403
    %1406 = vset.pattern.permute.xlu0 2
    %1407 = vperm.xlu0 %1406, %v714
    %v1408 = vpop.permute.xlu0 %1407
    %1410 = vset.pattern.permute.xlu0 2
    %1411 = vperm.xlu0 %1410, %v715
    %v1412 = vpop.permute.xlu0 %1411
    %1414 = vset.pattern.permute.xlu0 2
    %1415 = vperm.xlu0 %1414, %v716
    %v1416 = vpop.permute.xlu0 %1415
    %1418 = vset.pattern.permute.xlu0 2
    %1419 = vperm.xlu0 %1418, %v717
    %v1420 = vpop.permute.xlu0 %1419
    %v1422 = vperm.slane %v109, 2
    %v1423 = vperm.slane %v110, 2
    %v1424 = vperm.slane %v111, 2
    %v1425 = vperm.slane %v112, 2
    %v1426 = vperm.slane %v113, 2
    %v1427 = vperm.slane %v114, 2
    %v1428 = vperm.slane %v115, 2
    %v1429 = vperm.slane %v116, 2
    %v1430 = vperm.slane %v117, 2
    %v1431 = vperm.slane %v118, 2
    %v1432 = vperm.slane %v119, 2
    %v1433 = vperm.slane %v120, 2
    %v1434 = vperm.slane %v121, 2
    %v1435 = vperm.slane %v122, 2
    %v1436 = vperm.slane %v123, 2
    %v1437 = vperm.slane %v124, 2
    %v1438 = vmul.f32 %v1360, %v1422
    %v1439 = vmul.f32 %v1364, %v1423
    %v1440 = vmul.f32 %v1368, %v1424
    %v1441 = vmul.f32 %v1372, %v1425
    %v1442 = vmul.f32 %v1376, %v1426
    %v1443 = vmul.f32 %v1380, %v1427
    %v1444 = vmul.f32 %v1384, %v1428
    %v1445 = vmul.f32 %v1388, %v1429
    %v1446 = vmul.f32 %v1392, %v1430
    %v1447 = vmul.f32 %v1396, %v1431
    %v1448 = vmul.f32 %v1400, %v1432
    %v1449 = vmul.f32 %v1404, %v1433
    %v1450 = vmul.f32 %v1408, %v1434
    %v1451 = vmul.f32 %v1412, %v1435
    %v1452 = vmul.f32 %v1416, %v1436
    %v1453 = vmul.f32 %v1420, %v1437
    %v1454 = vadd.f32 %v1342, %v1438
    %v1455 = vadd.f32 %v1343, %v1439
    %v1456 = vadd.f32 %v1344, %v1440
    %v1457 = vadd.f32 %v1345, %v1441
    %v1458 = vadd.f32 %v1346, %v1442
    %v1459 = vadd.f32 %v1347, %v1443
    %v1460 = vadd.f32 %v1348, %v1444
    %v1461 = vadd.f32 %v1349, %v1445
    %v1462 = vadd.f32 %v1350, %v1446
    %v1463 = vadd.f32 %v1351, %v1447
    %v1464 = vadd.f32 %v1352, %v1448
    %v1465 = vadd.f32 %v1353, %v1449
    %v1466 = vadd.f32 %v1354, %v1450
    %v1467 = vadd.f32 %v1355, %v1451
    %v1468 = vadd.f32 %v1356, %v1452
    %v1469 = vadd.f32 %v1357, %v1453
    %1470 = vset.pattern.permute.xlu0 3
    %1471 = vperm.xlu0 %1470, %v702
    %v1472 = vpop.permute.xlu0 %1471
    %1474 = vset.pattern.permute.xlu0 3
    %1475 = vperm.xlu0 %1474, %v703
    %v1476 = vpop.permute.xlu0 %1475
    %1478 = vset.pattern.permute.xlu0 3
    %1479 = vperm.xlu0 %1478, %v704
    %v1480 = vpop.permute.xlu0 %1479
    %1482 = vset.pattern.permute.xlu0 3
    %1483 = vperm.xlu0 %1482, %v705
    %v1484 = vpop.permute.xlu0 %1483
    %1486 = vset.pattern.permute.xlu0 3
    %1487 = vperm.xlu0 %1486, %v706
    %v1488 = vpop.permute.xlu0 %1487
    %1490 = vset.pattern.permute.xlu0 3
    %1491 = vperm.xlu0 %1490, %v707
    %v1492 = vpop.permute.xlu0 %1491
    %1494 = vset.pattern.permute.xlu0 3
    %1495 = vperm.xlu0 %1494, %v708
    %v1496 = vpop.permute.xlu0 %1495
    %1498 = vset.pattern.permute.xlu0 3
    %1499 = vperm.xlu0 %1498, %v709
    %v1500 = vpop.permute.xlu0 %1499
    %1502 = vset.pattern.permute.xlu0 3
    %1503 = vperm.xlu0 %1502, %v710
    %v1504 = vpop.permute.xlu0 %1503
    %1506 = vset.pattern.permute.xlu0 3
    %1507 = vperm.xlu0 %1506, %v711
    %v1508 = vpop.permute.xlu0 %1507
    %1510 = vset.pattern.permute.xlu0 3
    %1511 = vperm.xlu0 %1510, %v712
    %v1512 = vpop.permute.xlu0 %1511
    %1514 = vset.pattern.permute.xlu0 3
    %1515 = vperm.xlu0 %1514, %v713
    %v1516 = vpop.permute.xlu0 %1515
    %1518 = vset.pattern.permute.xlu0 3
    %1519 = vperm.xlu0 %1518, %v714
    %v1520 = vpop.permute.xlu0 %1519
    %1522 = vset.pattern.permute.xlu0 3
    %1523 = vperm.xlu0 %1522, %v715
    %v1524 = vpop.permute.xlu0 %1523
    %1526 = vset.pattern.permute.xlu0 3
    %1527 = vperm.xlu0 %1526, %v716
    %v1528 = vpop.permute.xlu0 %1527
    %1530 = vset.pattern.permute.xlu0 3
    %1531 = vperm.xlu0 %1530, %v717
    %v1532 = vpop.permute.xlu0 %1531
    %v1534 = vperm.slane %v109, 3
    %v1535 = vperm.slane %v110, 3
    %v1536 = vperm.slane %v111, 3
    %v1537 = vperm.slane %v112, 3
    %v1538 = vperm.slane %v113, 3
    %v1539 = vperm.slane %v114, 3
    %v1540 = vperm.slane %v115, 3
    %v1541 = vperm.slane %v116, 3
    %v1542 = vperm.slane %v117, 3
    %v1543 = vperm.slane %v118, 3
    %v1544 = vperm.slane %v119, 3
    %v1545 = vperm.slane %v120, 3
    %v1546 = vperm.slane %v121, 3
    %v1547 = vperm.slane %v122, 3
    %v1548 = vperm.slane %v123, 3
    %v1549 = vperm.slane %v124, 3
    %v1550 = vmul.f32 %v1472, %v1534
    %v1551 = vmul.f32 %v1476, %v1535
    %v1552 = vmul.f32 %v1480, %v1536
    %v1553 = vmul.f32 %v1484, %v1537
    %v1554 = vmul.f32 %v1488, %v1538
    %v1555 = vmul.f32 %v1492, %v1539
    %v1556 = vmul.f32 %v1496, %v1540
    %v1557 = vmul.f32 %v1500, %v1541
    %v1558 = vmul.f32 %v1504, %v1542
    %v1559 = vmul.f32 %v1508, %v1543
    %v1560 = vmul.f32 %v1512, %v1544
    %v1561 = vmul.f32 %v1516, %v1545
    %v1562 = vmul.f32 %v1520, %v1546
    %v1563 = vmul.f32 %v1524, %v1547
    %v1564 = vmul.f32 %v1528, %v1548
    %v1565 = vmul.f32 %v1532, %v1549
    %v1566 = vadd.f32 %v1454, %v1550
    %v1567 = vadd.f32 %v1455, %v1551
    %v1568 = vadd.f32 %v1456, %v1552
    %v1569 = vadd.f32 %v1457, %v1553
    %v1570 = vadd.f32 %v1458, %v1554
    %v1571 = vadd.f32 %v1459, %v1555
    %v1572 = vadd.f32 %v1460, %v1556
    %v1573 = vadd.f32 %v1461, %v1557
    %v1574 = vadd.f32 %v1462, %v1558
    %v1575 = vadd.f32 %v1463, %v1559
    %v1576 = vadd.f32 %v1464, %v1560
    %v1577 = vadd.f32 %v1465, %v1561
    %v1578 = vadd.f32 %v1466, %v1562
    %v1579 = vadd.f32 %v1467, %v1563
    %v1580 = vadd.f32 %v1468, %v1564
    %v1581 = vadd.f32 %v1469, %v1565
    %1582 = vset.pattern.permute.xlu0 4
    %1583 = vperm.xlu0 %1582, %v702
    %v1584 = vpop.permute.xlu0 %1583
    %1586 = vset.pattern.permute.xlu0 4
    %1587 = vperm.xlu0 %1586, %v703
    %v1588 = vpop.permute.xlu0 %1587
    %1590 = vset.pattern.permute.xlu0 4
    %1591 = vperm.xlu0 %1590, %v704
    %v1592 = vpop.permute.xlu0 %1591
    %1594 = vset.pattern.permute.xlu0 4
    %1595 = vperm.xlu0 %1594, %v705
    %v1596 = vpop.permute.xlu0 %1595
    %1598 = vset.pattern.permute.xlu0 4
    %1599 = vperm.xlu0 %1598, %v706
    %v1600 = vpop.permute.xlu0 %1599
    %1602 = vset.pattern.permute.xlu0 4
    %1603 = vperm.xlu0 %1602, %v707
    %v1604 = vpop.permute.xlu0 %1603
    %1606 = vset.pattern.permute.xlu0 4
    %1607 = vperm.xlu0 %1606, %v708
    %v1608 = vpop.permute.xlu0 %1607
    %1610 = vset.pattern.permute.xlu0 4
    %1611 = vperm.xlu0 %1610, %v709
    %v1612 = vpop.permute.xlu0 %1611
    %1614 = vset.pattern.permute.xlu0 4
    %1615 = vperm.xlu0 %1614, %v710
    %v1616 = vpop.permute.xlu0 %1615
    %1618 = vset.pattern.permute.xlu0 4
    %1619 = vperm.xlu0 %1618, %v711
    %v1620 = vpop.permute.xlu0 %1619
    %1622 = vset.pattern.permute.xlu0 4
    %1623 = vperm.xlu0 %1622, %v712
    %v1624 = vpop.permute.xlu0 %1623
    %1626 = vset.pattern.permute.xlu0 4
    %1627 = vperm.xlu0 %1626, %v713
    %v1628 = vpop.permute.xlu0 %1627
    %1630 = vset.pattern.permute.xlu0 4
    %1631 = vperm.xlu0 %1630, %v714
    %v1632 = vpop.permute.xlu0 %1631
    %1634 = vset.pattern.permute.xlu0 4
    %1635 = vperm.xlu0 %1634, %v715
    %v1636 = vpop.permute.xlu0 %1635
    %1638 = vset.pattern.permute.xlu0 4
    %1639 = vperm.xlu0 %1638, %v716
    %v1640 = vpop.permute.xlu0 %1639
    %1642 = vset.pattern.permute.xlu0 4
    %1643 = vperm.xlu0 %1642, %v717
    %v1644 = vpop.permute.xlu0 %1643
    %v1646 = vperm.slane %v109, 4
    %v1647 = vperm.slane %v110, 4
    %v1648 = vperm.slane %v111, 4
    %v1649 = vperm.slane %v112, 4
    %v1650 = vperm.slane %v113, 4
    %v1651 = vperm.slane %v114, 4
    %v1652 = vperm.slane %v115, 4
    %v1653 = vperm.slane %v116, 4
    %v1654 = vperm.slane %v117, 4
    %v1655 = vperm.slane %v118, 4
    %v1656 = vperm.slane %v119, 4
    %v1657 = vperm.slane %v120, 4
    %v1658 = vperm.slane %v121, 4
    %v1659 = vperm.slane %v122, 4
    %v1660 = vperm.slane %v123, 4
    %v1661 = vperm.slane %v124, 4
    %v1662 = vmul.f32 %v1584, %v1646
    %v1663 = vmul.f32 %v1588, %v1647
    %v1664 = vmul.f32 %v1592, %v1648
    %v1665 = vmul.f32 %v1596, %v1649
    %v1666 = vmul.f32 %v1600, %v1650
    %v1667 = vmul.f32 %v1604, %v1651
    %v1668 = vmul.f32 %v1608, %v1652
    %v1669 = vmul.f32 %v1612, %v1653
    %v1670 = vmul.f32 %v1616, %v1654
    %v1671 = vmul.f32 %v1620, %v1655
    %v1672 = vmul.f32 %v1624, %v1656
    %v1673 = vmul.f32 %v1628, %v1657
    %v1674 = vmul.f32 %v1632, %v1658
    %v1675 = vmul.f32 %v1636, %v1659
    %v1676 = vmul.f32 %v1640, %v1660
    %v1677 = vmul.f32 %v1644, %v1661
    %v1678 = vadd.f32 %v1566, %v1662
    %v1679 = vadd.f32 %v1567, %v1663
    %v1680 = vadd.f32 %v1568, %v1664
    %v1681 = vadd.f32 %v1569, %v1665
    %v1682 = vadd.f32 %v1570, %v1666
    %v1683 = vadd.f32 %v1571, %v1667
    %v1684 = vadd.f32 %v1572, %v1668
    %v1685 = vadd.f32 %v1573, %v1669
    %v1686 = vadd.f32 %v1574, %v1670
    %v1687 = vadd.f32 %v1575, %v1671
    %v1688 = vadd.f32 %v1576, %v1672
    %v1689 = vadd.f32 %v1577, %v1673
    %v1690 = vadd.f32 %v1578, %v1674
    %v1691 = vadd.f32 %v1579, %v1675
    %v1692 = vadd.f32 %v1580, %v1676
    %v1693 = vadd.f32 %v1581, %v1677
    %1694 = vset.pattern.permute.xlu0 5
    %1695 = vperm.xlu0 %1694, %v702
    %v1696 = vpop.permute.xlu0 %1695
    %1698 = vset.pattern.permute.xlu0 5
    %1699 = vperm.xlu0 %1698, %v703
    %v1700 = vpop.permute.xlu0 %1699
    %1702 = vset.pattern.permute.xlu0 5
    %1703 = vperm.xlu0 %1702, %v704
    %v1704 = vpop.permute.xlu0 %1703
    %1706 = vset.pattern.permute.xlu0 5
    %1707 = vperm.xlu0 %1706, %v705
    %v1708 = vpop.permute.xlu0 %1707
    %1710 = vset.pattern.permute.xlu0 5
    %1711 = vperm.xlu0 %1710, %v706
    %v1712 = vpop.permute.xlu0 %1711
    %1714 = vset.pattern.permute.xlu0 5
    %1715 = vperm.xlu0 %1714, %v707
    %v1716 = vpop.permute.xlu0 %1715
    %1718 = vset.pattern.permute.xlu0 5
    %1719 = vperm.xlu0 %1718, %v708
    %v1720 = vpop.permute.xlu0 %1719
    %1722 = vset.pattern.permute.xlu0 5
    %1723 = vperm.xlu0 %1722, %v709
    %v1724 = vpop.permute.xlu0 %1723
    %1726 = vset.pattern.permute.xlu0 5
    %1727 = vperm.xlu0 %1726, %v710
    %v1728 = vpop.permute.xlu0 %1727
    %1730 = vset.pattern.permute.xlu0 5
    %1731 = vperm.xlu0 %1730, %v711
    %v1732 = vpop.permute.xlu0 %1731
    %1734 = vset.pattern.permute.xlu0 5
    %1735 = vperm.xlu0 %1734, %v712
    %v1736 = vpop.permute.xlu0 %1735
    %1738 = vset.pattern.permute.xlu0 5
    %1739 = vperm.xlu0 %1738, %v713
    %v1740 = vpop.permute.xlu0 %1739
    %1742 = vset.pattern.permute.xlu0 5
    %1743 = vperm.xlu0 %1742, %v714
    %v1744 = vpop.permute.xlu0 %1743
    %1746 = vset.pattern.permute.xlu0 5
    %1747 = vperm.xlu0 %1746, %v715
    %v1748 = vpop.permute.xlu0 %1747
    %1750 = vset.pattern.permute.xlu0 5
    %1751 = vperm.xlu0 %1750, %v716
    %v1752 = vpop.permute.xlu0 %1751
    %1754 = vset.pattern.permute.xlu0 5
    %1755 = vperm.xlu0 %1754, %v717
    %v1756 = vpop.permute.xlu0 %1755
    %v1758 = vperm.slane %v109, 5
    %v1759 = vperm.slane %v110, 5
    %v1760 = vperm.slane %v111, 5
    %v1761 = vperm.slane %v112, 5
    %v1762 = vperm.slane %v113, 5
    %v1763 = vperm.slane %v114, 5
    %v1764 = vperm.slane %v115, 5
    %v1765 = vperm.slane %v116, 5
    %v1766 = vperm.slane %v117, 5
    %v1767 = vperm.slane %v118, 5
    %v1768 = vperm.slane %v119, 5
    %v1769 = vperm.slane %v120, 5
    %v1770 = vperm.slane %v121, 5
    %v1771 = vperm.slane %v122, 5
    %v1772 = vperm.slane %v123, 5
    %v1773 = vperm.slane %v124, 5
    %v1774 = vmul.f32 %v1696, %v1758
    %v1775 = vmul.f32 %v1700, %v1759
    %v1776 = vmul.f32 %v1704, %v1760
    %v1777 = vmul.f32 %v1708, %v1761
    %v1778 = vmul.f32 %v1712, %v1762
    %v1779 = vmul.f32 %v1716, %v1763
    %v1780 = vmul.f32 %v1720, %v1764
    %v1781 = vmul.f32 %v1724, %v1765
    %v1782 = vmul.f32 %v1728, %v1766
    %v1783 = vmul.f32 %v1732, %v1767
    %v1784 = vmul.f32 %v1736, %v1768
    %v1785 = vmul.f32 %v1740, %v1769
    %v1786 = vmul.f32 %v1744, %v1770
    %v1787 = vmul.f32 %v1748, %v1771
    %v1788 = vmul.f32 %v1752, %v1772
    %v1789 = vmul.f32 %v1756, %v1773
    %v1790 = vadd.f32 %v1678, %v1774
    %v1791 = vadd.f32 %v1679, %v1775
    %v1792 = vadd.f32 %v1680, %v1776
    %v1793 = vadd.f32 %v1681, %v1777
    %v1794 = vadd.f32 %v1682, %v1778
    %v1795 = vadd.f32 %v1683, %v1779
    %v1796 = vadd.f32 %v1684, %v1780
    %v1797 = vadd.f32 %v1685, %v1781
    %v1798 = vadd.f32 %v1686, %v1782
    %v1799 = vadd.f32 %v1687, %v1783
    %v1800 = vadd.f32 %v1688, %v1784
    %v1801 = vadd.f32 %v1689, %v1785
    %v1802 = vadd.f32 %v1690, %v1786
    %v1803 = vadd.f32 %v1691, %v1787
    %v1804 = vadd.f32 %v1692, %v1788
    %v1805 = vadd.f32 %v1693, %v1789
    %1806 = vset.pattern.permute.xlu0 6
    %1807 = vperm.xlu0 %1806, %v702
    %v1808 = vpop.permute.xlu0 %1807
    %1810 = vset.pattern.permute.xlu0 6
    %1811 = vperm.xlu0 %1810, %v703
    %v1812 = vpop.permute.xlu0 %1811
    %1814 = vset.pattern.permute.xlu0 6
    %1815 = vperm.xlu0 %1814, %v704
    %v1816 = vpop.permute.xlu0 %1815
    %1818 = vset.pattern.permute.xlu0 6
    %1819 = vperm.xlu0 %1818, %v705
    %v1820 = vpop.permute.xlu0 %1819
    %1822 = vset.pattern.permute.xlu0 6
    %1823 = vperm.xlu0 %1822, %v706
    %v1824 = vpop.permute.xlu0 %1823
    %1826 = vset.pattern.permute.xlu0 6
    %1827 = vperm.xlu0 %1826, %v707
    %v1828 = vpop.permute.xlu0 %1827
    %1830 = vset.pattern.permute.xlu0 6
    %1831 = vperm.xlu0 %1830, %v708
    %v1832 = vpop.permute.xlu0 %1831
    %1834 = vset.pattern.permute.xlu0 6
    %1835 = vperm.xlu0 %1834, %v709
    %v1836 = vpop.permute.xlu0 %1835
    %1838 = vset.pattern.permute.xlu0 6
    %1839 = vperm.xlu0 %1838, %v710
    %v1840 = vpop.permute.xlu0 %1839
    %1842 = vset.pattern.permute.xlu0 6
    %1843 = vperm.xlu0 %1842, %v711
    %v1844 = vpop.permute.xlu0 %1843
    %1846 = vset.pattern.permute.xlu0 6
    %1847 = vperm.xlu0 %1846, %v712
    %v1848 = vpop.permute.xlu0 %1847
    %1850 = vset.pattern.permute.xlu0 6
    %1851 = vperm.xlu0 %1850, %v713
    %v1852 = vpop.permute.xlu0 %1851
    %1854 = vset.pattern.permute.xlu0 6
    %1855 = vperm.xlu0 %1854, %v714
    %v1856 = vpop.permute.xlu0 %1855
    %1858 = vset.pattern.permute.xlu0 6
    %1859 = vperm.xlu0 %1858, %v715
    %v1860 = vpop.permute.xlu0 %1859
    %1862 = vset.pattern.permute.xlu0 6
    %1863 = vperm.xlu0 %1862, %v716
    %v1864 = vpop.permute.xlu0 %1863
    %1866 = vset.pattern.permute.xlu0 6
    %1867 = vperm.xlu0 %1866, %v717
    %v1868 = vpop.permute.xlu0 %1867
    %v1870 = vperm.slane %v109, 6
    %v1871 = vperm.slane %v110, 6
    %v1872 = vperm.slane %v111, 6
    %v1873 = vperm.slane %v112, 6
    %v1874 = vperm.slane %v113, 6
    %v1875 = vperm.slane %v114, 6
    %v1876 = vperm.slane %v115, 6
    %v1877 = vperm.slane %v116, 6
    %v1878 = vperm.slane %v117, 6
    %v1879 = vperm.slane %v118, 6
    %v1880 = vperm.slane %v119, 6
    %v1881 = vperm.slane %v120, 6
    %v1882 = vperm.slane %v121, 6
    %v1883 = vperm.slane %v122, 6
    %v1884 = vperm.slane %v123, 6
    %v1885 = vperm.slane %v124, 6
    %v1886 = vmul.f32 %v1808, %v1870
    %v1887 = vmul.f32 %v1812, %v1871
    %v1888 = vmul.f32 %v1816, %v1872
    %v1889 = vmul.f32 %v1820, %v1873
    %v1890 = vmul.f32 %v1824, %v1874
    %v1891 = vmul.f32 %v1828, %v1875
    %v1892 = vmul.f32 %v1832, %v1876
    %v1893 = vmul.f32 %v1836, %v1877
    %v1894 = vmul.f32 %v1840, %v1878
    %v1895 = vmul.f32 %v1844, %v1879
    %v1896 = vmul.f32 %v1848, %v1880
    %v1897 = vmul.f32 %v1852, %v1881
    %v1898 = vmul.f32 %v1856, %v1882
    %v1899 = vmul.f32 %v1860, %v1883
    %v1900 = vmul.f32 %v1864, %v1884
    %v1901 = vmul.f32 %v1868, %v1885
    %v1902 = vadd.f32 %v1790, %v1886
    %v1903 = vadd.f32 %v1791, %v1887
    %v1904 = vadd.f32 %v1792, %v1888
    %v1905 = vadd.f32 %v1793, %v1889
    %v1906 = vadd.f32 %v1794, %v1890
    %v1907 = vadd.f32 %v1795, %v1891
    %v1908 = vadd.f32 %v1796, %v1892
    %v1909 = vadd.f32 %v1797, %v1893
    %v1910 = vadd.f32 %v1798, %v1894
    %v1911 = vadd.f32 %v1799, %v1895
    %v1912 = vadd.f32 %v1800, %v1896
    %v1913 = vadd.f32 %v1801, %v1897
    %v1914 = vadd.f32 %v1802, %v1898
    %v1915 = vadd.f32 %v1803, %v1899
    %v1916 = vadd.f32 %v1804, %v1900
    %v1917 = vadd.f32 %v1805, %v1901
    %1918 = vset.pattern.permute.xlu0 7
    %1919 = vperm.xlu0 %1918, %v702
    %v1920 = vpop.permute.xlu0 %1919
    %1922 = vset.pattern.permute.xlu0 7
    %1923 = vperm.xlu0 %1922, %v703
    %v1924 = vpop.permute.xlu0 %1923
    %1926 = vset.pattern.permute.xlu0 7
    %1927 = vperm.xlu0 %1926, %v704
    %v1928 = vpop.permute.xlu0 %1927
    %1930 = vset.pattern.permute.xlu0 7
    %1931 = vperm.xlu0 %1930, %v705
    %v1932 = vpop.permute.xlu0 %1931
    %1934 = vset.pattern.permute.xlu0 7
    %1935 = vperm.xlu0 %1934, %v706
    %v1936 = vpop.permute.xlu0 %1935
    %1938 = vset.pattern.permute.xlu0 7
    %1939 = vperm.xlu0 %1938, %v707
    %v1940 = vpop.permute.xlu0 %1939
    %1942 = vset.pattern.permute.xlu0 7
    %1943 = vperm.xlu0 %1942, %v708
    %v1944 = vpop.permute.xlu0 %1943
    %1946 = vset.pattern.permute.xlu0 7
    %1947 = vperm.xlu0 %1946, %v709
    %v1948 = vpop.permute.xlu0 %1947
    %1950 = vset.pattern.permute.xlu0 7
    %1951 = vperm.xlu0 %1950, %v710
    %v1952 = vpop.permute.xlu0 %1951
    %1954 = vset.pattern.permute.xlu0 7
    %1955 = vperm.xlu0 %1954, %v711
    %v1956 = vpop.permute.xlu0 %1955
    %1958 = vset.pattern.permute.xlu0 7
    %1959 = vperm.xlu0 %1958, %v712
    %v1960 = vpop.permute.xlu0 %1959
    %1962 = vset.pattern.permute.xlu0 7
    %1963 = vperm.xlu0 %1962, %v713
    %v1964 = vpop.permute.xlu0 %1963
    %1966 = vset.pattern.permute.xlu0 7
    %1967 = vperm.xlu0 %1966, %v714
    %v1968 = vpop.permute.xlu0 %1967
    %1970 = vset.pattern.permute.xlu0 7
    %1971 = vperm.xlu0 %1970, %v715
    %v1972 = vpop.permute.xlu0 %1971
    %1974 = vset.pattern.permute.xlu0 7
    %1975 = vperm.xlu0 %1974, %v716
    %v1976 = vpop.permute.xlu0 %1975
    %1978 = vset.pattern.permute.xlu0 7
    %1979 = vperm.xlu0 %1978, %v717
    %v1980 = vpop.permute.xlu0 %1979
    %v1982 = vperm.slane %v109, 7
    %v1983 = vperm.slane %v110, 7
    %v1984 = vperm.slane %v111, 7
    %v1985 = vperm.slane %v112, 7
    %v1986 = vperm.slane %v113, 7
    %v1987 = vperm.slane %v114, 7
    %v1988 = vperm.slane %v115, 7
    %v1989 = vperm.slane %v116, 7
    %v1990 = vperm.slane %v117, 7
    %v1991 = vperm.slane %v118, 7
    %v1992 = vperm.slane %v119, 7
    %v1993 = vperm.slane %v120, 7
    %v1994 = vperm.slane %v121, 7
    %v1995 = vperm.slane %v122, 7
    %v1996 = vperm.slane %v123, 7
    %v1997 = vperm.slane %v124, 7
    %v1998 = vmul.f32 %v1920, %v1982
    %v1999 = vmul.f32 %v1924, %v1983
    %v2000 = vmul.f32 %v1928, %v1984
    %v2001 = vmul.f32 %v1932, %v1985
    %v2002 = vmul.f32 %v1936, %v1986
    %v2003 = vmul.f32 %v1940, %v1987
    %v2004 = vmul.f32 %v1944, %v1988
    %v2005 = vmul.f32 %v1948, %v1989
    %v2006 = vmul.f32 %v1952, %v1990
    %v2007 = vmul.f32 %v1956, %v1991
    %v2008 = vmul.f32 %v1960, %v1992
    %v2009 = vmul.f32 %v1964, %v1993
    %v2010 = vmul.f32 %v1968, %v1994
    %v2011 = vmul.f32 %v1972, %v1995
    %v2012 = vmul.f32 %v1976, %v1996
    %v2013 = vmul.f32 %v1980, %v1997
    %v2014 = vadd.f32 %v1902, %v1998
    %v2015 = vadd.f32 %v1903, %v1999
    %v2016 = vadd.f32 %v1904, %v2000
    %v2017 = vadd.f32 %v1905, %v2001
    %v2018 = vadd.f32 %v1906, %v2002
    %v2019 = vadd.f32 %v1907, %v2003
    %v2020 = vadd.f32 %v1908, %v2004
    %v2021 = vadd.f32 %v1909, %v2005
    %v2022 = vadd.f32 %v1910, %v2006
    %v2023 = vadd.f32 %v1911, %v2007
    %v2024 = vadd.f32 %v1912, %v2008
    %v2025 = vadd.f32 %v1913, %v2009
    %v2026 = vadd.f32 %v1914, %v2010
    %v2027 = vadd.f32 %v1915, %v2011
    %v2028 = vadd.f32 %v1916, %v2012
    %v2029 = vadd.f32 %v1917, %v2013
    %2031 = vset.pattern.permute.xlu0 0
    %2032 = vperm.xlu0 %2031, %v1102
    %v2033 = vpop.permute.xlu0 %2032
    %2036 = vset.pattern.permute.xlu0 0
    %2037 = vperm.xlu0 %2036, %v1103
    %v2038 = vpop.permute.xlu0 %2037
    %2041 = vset.pattern.permute.xlu0 0
    %2042 = vperm.xlu0 %2041, %v1104
    %v2043 = vpop.permute.xlu0 %2042
    %2046 = vset.pattern.permute.xlu0 0
    %2047 = vperm.xlu0 %2046, %v1105
    %v2048 = vpop.permute.xlu0 %2047
    %2051 = vset.pattern.permute.xlu0 0
    %2052 = vperm.xlu0 %2051, %v1106
    %v2053 = vpop.permute.xlu0 %2052
    %2056 = vset.pattern.permute.xlu0 0
    %2057 = vperm.xlu0 %2056, %v1107
    %v2058 = vpop.permute.xlu0 %2057
    %2061 = vset.pattern.permute.xlu0 0
    %2062 = vperm.xlu0 %2061, %v1108
    %v2063 = vpop.permute.xlu0 %2062
    %2066 = vset.pattern.permute.xlu0 0
    %2067 = vperm.xlu0 %2066, %v1109
    %v2068 = vpop.permute.xlu0 %2067
    %2071 = vset.pattern.permute.xlu0 0
    %2072 = vperm.xlu0 %2071, %v1110
    %v2073 = vpop.permute.xlu0 %2072
    %2076 = vset.pattern.permute.xlu0 0
    %2077 = vperm.xlu0 %2076, %v1111
    %v2078 = vpop.permute.xlu0 %2077
    %2081 = vset.pattern.permute.xlu0 0
    %2082 = vperm.xlu0 %2081, %v1112
    %v2083 = vpop.permute.xlu0 %2082
    %2086 = vset.pattern.permute.xlu0 0
    %2087 = vperm.xlu0 %2086, %v1113
    %v2088 = vpop.permute.xlu0 %2087
    %2091 = vset.pattern.permute.xlu0 0
    %2092 = vperm.xlu0 %2091, %v1114
    %v2093 = vpop.permute.xlu0 %2092
    %2096 = vset.pattern.permute.xlu0 0
    %2097 = vperm.xlu0 %2096, %v1115
    %v2098 = vpop.permute.xlu0 %2097
    %2101 = vset.pattern.permute.xlu0 0
    %2102 = vperm.xlu0 %2101, %v1116
    %v2103 = vpop.permute.xlu0 %2102
    %2106 = vset.pattern.permute.xlu0 0
    %2107 = vperm.xlu0 %2106, %v1117
    %v2108 = vpop.permute.xlu0 %2107
    %v2110 = vmul.f32 %v2033, %v109
    %v2111 = vmul.f32 %v2038, %v109
    %v2112 = vmul.f32 %v2043, %v109
    %v2113 = vmul.f32 %v2048, %v109
    %v2114 = vmul.f32 %v2053, %v109
    %v2115 = vmul.f32 %v2058, %v109
    %v2116 = vmul.f32 %v2063, %v109
    %v2117 = vmul.f32 %v2068, %v109
    %v2118 = vmul.f32 %v2073, %v117
    %v2119 = vmul.f32 %v2078, %v117
    %v2120 = vmul.f32 %v2083, %v117
    %v2121 = vmul.f32 %v2088, %v117
    %v2122 = vmul.f32 %v2093, %v117
    %v2123 = vmul.f32 %v2098, %v117
    %v2124 = vmul.f32 %v2103, %v117
    %v2125 = vmul.f32 %v2108, %v117
    %v2126 = vadd.f32 %v2014, %v2110
    %v2127 = vadd.f32 %v2015, %v2111
    %v2128 = vadd.f32 %v2016, %v2112
    %v2129 = vadd.f32 %v2017, %v2113
    %v2130 = vadd.f32 %v2018, %v2114
    %v2131 = vadd.f32 %v2019, %v2115
    %v2132 = vadd.f32 %v2020, %v2116
    %v2133 = vadd.f32 %v2021, %v2117
    %v2134 = vadd.f32 %v2022, %v2118
    %v2135 = vadd.f32 %v2023, %v2119
    %v2136 = vadd.f32 %v2024, %v2120
    %v2137 = vadd.f32 %v2025, %v2121
    %v2138 = vadd.f32 %v2026, %v2122
    %v2139 = vadd.f32 %v2027, %v2123
    %v2140 = vadd.f32 %v2028, %v2124
    %v2141 = vadd.f32 %v2029, %v2125
    %2142 = vset.pattern.permute.xlu0 1
    %2143 = vperm.xlu0 %2142, %v1102
    %v2144 = vpop.permute.xlu0 %2143
    %2146 = vset.pattern.permute.xlu0 1
    %2147 = vperm.xlu0 %2146, %v1103
    %v2148 = vpop.permute.xlu0 %2147
    %2150 = vset.pattern.permute.xlu0 1
    %2151 = vperm.xlu0 %2150, %v1104
    %v2152 = vpop.permute.xlu0 %2151
    %2154 = vset.pattern.permute.xlu0 1
    %2155 = vperm.xlu0 %2154, %v1105
    %v2156 = vpop.permute.xlu0 %2155
    %2158 = vset.pattern.permute.xlu0 1
    %2159 = vperm.xlu0 %2158, %v1106
    %v2160 = vpop.permute.xlu0 %2159
    %2162 = vset.pattern.permute.xlu0 1
    %2163 = vperm.xlu0 %2162, %v1107
    %v2164 = vpop.permute.xlu0 %2163
    %2166 = vset.pattern.permute.xlu0 1
    %2167 = vperm.xlu0 %2166, %v1108
    %v2168 = vpop.permute.xlu0 %2167
    %2170 = vset.pattern.permute.xlu0 1
    %2171 = vperm.xlu0 %2170, %v1109
    %v2172 = vpop.permute.xlu0 %2171
    %2174 = vset.pattern.permute.xlu0 1
    %2175 = vperm.xlu0 %2174, %v1110
    %v2176 = vpop.permute.xlu0 %2175
    %2178 = vset.pattern.permute.xlu0 1
    %2179 = vperm.xlu0 %2178, %v1111
    %v2180 = vpop.permute.xlu0 %2179
    %2182 = vset.pattern.permute.xlu0 1
    %2183 = vperm.xlu0 %2182, %v1112
    %v2184 = vpop.permute.xlu0 %2183
    %2186 = vset.pattern.permute.xlu0 1
    %2187 = vperm.xlu0 %2186, %v1113
    %v2188 = vpop.permute.xlu0 %2187
    %2190 = vset.pattern.permute.xlu0 1
    %2191 = vperm.xlu0 %2190, %v1114
    %v2192 = vpop.permute.xlu0 %2191
    %2194 = vset.pattern.permute.xlu0 1
    %2195 = vperm.xlu0 %2194, %v1115
    %v2196 = vpop.permute.xlu0 %2195
    %2198 = vset.pattern.permute.xlu0 1
    %2199 = vperm.xlu0 %2198, %v1116
    %v2200 = vpop.permute.xlu0 %2199
    %2202 = vset.pattern.permute.xlu0 1
    %2203 = vperm.xlu0 %2202, %v1117
    %v2204 = vpop.permute.xlu0 %2203
    %v2206 = vmul.f32 %v2144, %v110
    %v2207 = vmul.f32 %v2148, %v110
    %v2208 = vmul.f32 %v2152, %v110
    %v2209 = vmul.f32 %v2156, %v110
    %v2210 = vmul.f32 %v2160, %v110
    %v2211 = vmul.f32 %v2164, %v110
    %v2212 = vmul.f32 %v2168, %v110
    %v2213 = vmul.f32 %v2172, %v110
    %v2214 = vmul.f32 %v2176, %v118
    %v2215 = vmul.f32 %v2180, %v118
    %v2216 = vmul.f32 %v2184, %v118
    %v2217 = vmul.f32 %v2188, %v118
    %v2218 = vmul.f32 %v2192, %v118
    %v2219 = vmul.f32 %v2196, %v118
    %v2220 = vmul.f32 %v2200, %v118
    %v2221 = vmul.f32 %v2204, %v118
    %v2222 = vadd.f32 %v2126, %v2206
    %v2223 = vadd.f32 %v2127, %v2207
    %v2224 = vadd.f32 %v2128, %v2208
    %v2225 = vadd.f32 %v2129, %v2209
    %v2226 = vadd.f32 %v2130, %v2210
    %v2227 = vadd.f32 %v2131, %v2211
    %v2228 = vadd.f32 %v2132, %v2212
    %v2229 = vadd.f32 %v2133, %v2213
    %v2230 = vadd.f32 %v2134, %v2214
    %v2231 = vadd.f32 %v2135, %v2215
    %v2232 = vadd.f32 %v2136, %v2216
    %v2233 = vadd.f32 %v2137, %v2217
    %v2234 = vadd.f32 %v2138, %v2218
    %v2235 = vadd.f32 %v2139, %v2219
    %v2236 = vadd.f32 %v2140, %v2220
    %v2237 = vadd.f32 %v2141, %v2221
    %2238 = vset.pattern.permute.xlu0 2
    %2239 = vperm.xlu0 %2238, %v1102
    %v2240 = vpop.permute.xlu0 %2239
    %2242 = vset.pattern.permute.xlu0 2
    %2243 = vperm.xlu0 %2242, %v1103
    %v2244 = vpop.permute.xlu0 %2243
    %2246 = vset.pattern.permute.xlu0 2
    %2247 = vperm.xlu0 %2246, %v1104
    %v2248 = vpop.permute.xlu0 %2247
    %2250 = vset.pattern.permute.xlu0 2
    %2251 = vperm.xlu0 %2250, %v1105
    %v2252 = vpop.permute.xlu0 %2251
    %2254 = vset.pattern.permute.xlu0 2
    %2255 = vperm.xlu0 %2254, %v1106
    %v2256 = vpop.permute.xlu0 %2255
    %2258 = vset.pattern.permute.xlu0 2
    %2259 = vperm.xlu0 %2258, %v1107
    %v2260 = vpop.permute.xlu0 %2259
    %2262 = vset.pattern.permute.xlu0 2
    %2263 = vperm.xlu0 %2262, %v1108
    %v2264 = vpop.permute.xlu0 %2263
    %2266 = vset.pattern.permute.xlu0 2
    %2267 = vperm.xlu0 %2266, %v1109
    %v2268 = vpop.permute.xlu0 %2267
    %2270 = vset.pattern.permute.xlu0 2
    %2271 = vperm.xlu0 %2270, %v1110
    %v2272 = vpop.permute.xlu0 %2271
    %2274 = vset.pattern.permute.xlu0 2
    %2275 = vperm.xlu0 %2274, %v1111
    %v2276 = vpop.permute.xlu0 %2275
    %2278 = vset.pattern.permute.xlu0 2
    %2279 = vperm.xlu0 %2278, %v1112
    %v2280 = vpop.permute.xlu0 %2279
    %2282 = vset.pattern.permute.xlu0 2
    %2283 = vperm.xlu0 %2282, %v1113
    %v2284 = vpop.permute.xlu0 %2283
    %2286 = vset.pattern.permute.xlu0 2
    %2287 = vperm.xlu0 %2286, %v1114
    %v2288 = vpop.permute.xlu0 %2287
    %2290 = vset.pattern.permute.xlu0 2
    %2291 = vperm.xlu0 %2290, %v1115
    %v2292 = vpop.permute.xlu0 %2291
    %2294 = vset.pattern.permute.xlu0 2
    %2295 = vperm.xlu0 %2294, %v1116
    %v2296 = vpop.permute.xlu0 %2295
    %2298 = vset.pattern.permute.xlu0 2
    %2299 = vperm.xlu0 %2298, %v1117
    %v2300 = vpop.permute.xlu0 %2299
    %v2302 = vmul.f32 %v2240, %v111
    %v2303 = vmul.f32 %v2244, %v111
    %v2304 = vmul.f32 %v2248, %v111
    %v2305 = vmul.f32 %v2252, %v111
    %v2306 = vmul.f32 %v2256, %v111
    %v2307 = vmul.f32 %v2260, %v111
    %v2308 = vmul.f32 %v2264, %v111
    %v2309 = vmul.f32 %v2268, %v111
    %v2310 = vmul.f32 %v2272, %v119
    %v2311 = vmul.f32 %v2276, %v119
    %v2312 = vmul.f32 %v2280, %v119
    %v2313 = vmul.f32 %v2284, %v119
    %v2314 = vmul.f32 %v2288, %v119
    %v2315 = vmul.f32 %v2292, %v119
    %v2316 = vmul.f32 %v2296, %v119
    %v2317 = vmul.f32 %v2300, %v119
    %v2318 = vadd.f32 %v2222, %v2302
    %v2319 = vadd.f32 %v2223, %v2303
    %v2320 = vadd.f32 %v2224, %v2304
    %v2321 = vadd.f32 %v2225, %v2305
    %v2322 = vadd.f32 %v2226, %v2306
    %v2323 = vadd.f32 %v2227, %v2307
    %v2324 = vadd.f32 %v2228, %v2308
    %v2325 = vadd.f32 %v2229, %v2309
    %v2326 = vadd.f32 %v2230, %v2310
    %v2327 = vadd.f32 %v2231, %v2311
    %v2328 = vadd.f32 %v2232, %v2312
    %v2329 = vadd.f32 %v2233, %v2313
    %v2330 = vadd.f32 %v2234, %v2314
    %v2331 = vadd.f32 %v2235, %v2315
    %v2332 = vadd.f32 %v2236, %v2316
    %v2333 = vadd.f32 %v2237, %v2317
    %2334 = vset.pattern.permute.xlu0 3
    %2335 = vperm.xlu0 %2334, %v1102
    %v2336 = vpop.permute.xlu0 %2335
    %2338 = vset.pattern.permute.xlu0 3
    %2339 = vperm.xlu0 %2338, %v1103
    %v2340 = vpop.permute.xlu0 %2339
    %2342 = vset.pattern.permute.xlu0 3
    %2343 = vperm.xlu0 %2342, %v1104
    %v2344 = vpop.permute.xlu0 %2343
    %2346 = vset.pattern.permute.xlu0 3
    %2347 = vperm.xlu0 %2346, %v1105
    %v2348 = vpop.permute.xlu0 %2347
    %2350 = vset.pattern.permute.xlu0 3
    %2351 = vperm.xlu0 %2350, %v1106
    %v2352 = vpop.permute.xlu0 %2351
    %2354 = vset.pattern.permute.xlu0 3
    %2355 = vperm.xlu0 %2354, %v1107
    %v2356 = vpop.permute.xlu0 %2355
    %2358 = vset.pattern.permute.xlu0 3
    %2359 = vperm.xlu0 %2358, %v1108
    %v2360 = vpop.permute.xlu0 %2359
    %2362 = vset.pattern.permute.xlu0 3
    %2363 = vperm.xlu0 %2362, %v1109
    %v2364 = vpop.permute.xlu0 %2363
    %2366 = vset.pattern.permute.xlu0 3
    %2367 = vperm.xlu0 %2366, %v1110
    %v2368 = vpop.permute.xlu0 %2367
    %2370 = vset.pattern.permute.xlu0 3
    %2371 = vperm.xlu0 %2370, %v1111
    %v2372 = vpop.permute.xlu0 %2371
    %2374 = vset.pattern.permute.xlu0 3
    %2375 = vperm.xlu0 %2374, %v1112
    %v2376 = vpop.permute.xlu0 %2375
    %2378 = vset.pattern.permute.xlu0 3
    %2379 = vperm.xlu0 %2378, %v1113
    %v2380 = vpop.permute.xlu0 %2379
    %2382 = vset.pattern.permute.xlu0 3
    %2383 = vperm.xlu0 %2382, %v1114
    %v2384 = vpop.permute.xlu0 %2383
    %2386 = vset.pattern.permute.xlu0 3
    %2387 = vperm.xlu0 %2386, %v1115
    %v2388 = vpop.permute.xlu0 %2387
    %2390 = vset.pattern.permute.xlu0 3
    %2391 = vperm.xlu0 %2390, %v1116
    %v2392 = vpop.permute.xlu0 %2391
    %2394 = vset.pattern.permute.xlu0 3
    %2395 = vperm.xlu0 %2394, %v1117
    %v2396 = vpop.permute.xlu0 %2395
    %v2398 = vmul.f32 %v2336, %v112
    %v2399 = vmul.f32 %v2340, %v112
    %v2400 = vmul.f32 %v2344, %v112
    %v2401 = vmul.f32 %v2348, %v112
    %v2402 = vmul.f32 %v2352, %v112
    %v2403 = vmul.f32 %v2356, %v112
    %v2404 = vmul.f32 %v2360, %v112
    %v2405 = vmul.f32 %v2364, %v112
    %v2406 = vmul.f32 %v2368, %v120
    %v2407 = vmul.f32 %v2372, %v120
    %v2408 = vmul.f32 %v2376, %v120
    %v2409 = vmul.f32 %v2380, %v120
    %v2410 = vmul.f32 %v2384, %v120
    %v2411 = vmul.f32 %v2388, %v120
    %v2412 = vmul.f32 %v2392, %v120
    %v2413 = vmul.f32 %v2396, %v120
    %v2414 = vadd.f32 %v2318, %v2398
    %v2415 = vadd.f32 %v2319, %v2399
    %v2416 = vadd.f32 %v2320, %v2400
    %v2417 = vadd.f32 %v2321, %v2401
    %v2418 = vadd.f32 %v2322, %v2402
    %v2419 = vadd.f32 %v2323, %v2403
    %v2420 = vadd.f32 %v2324, %v2404
    %v2421 = vadd.f32 %v2325, %v2405
    %v2422 = vadd.f32 %v2326, %v2406
    %v2423 = vadd.f32 %v2327, %v2407
    %v2424 = vadd.f32 %v2328, %v2408
    %v2425 = vadd.f32 %v2329, %v2409
    %v2426 = vadd.f32 %v2330, %v2410
    %v2427 = vadd.f32 %v2331, %v2411
    %v2428 = vadd.f32 %v2332, %v2412
    %v2429 = vadd.f32 %v2333, %v2413
    %2430 = vset.pattern.permute.xlu0 4
    %2431 = vperm.xlu0 %2430, %v1102
    %v2432 = vpop.permute.xlu0 %2431
    %2434 = vset.pattern.permute.xlu0 4
    %2435 = vperm.xlu0 %2434, %v1103
    %v2436 = vpop.permute.xlu0 %2435
    %2438 = vset.pattern.permute.xlu0 4
    %2439 = vperm.xlu0 %2438, %v1104
    %v2440 = vpop.permute.xlu0 %2439
    %2442 = vset.pattern.permute.xlu0 4
    %2443 = vperm.xlu0 %2442, %v1105
    %v2444 = vpop.permute.xlu0 %2443
    %2446 = vset.pattern.permute.xlu0 4
    %2447 = vperm.xlu0 %2446, %v1106
    %v2448 = vpop.permute.xlu0 %2447
    %2450 = vset.pattern.permute.xlu0 4
    %2451 = vperm.xlu0 %2450, %v1107
    %v2452 = vpop.permute.xlu0 %2451
    %2454 = vset.pattern.permute.xlu0 4
    %2455 = vperm.xlu0 %2454, %v1108
    %v2456 = vpop.permute.xlu0 %2455
    %2458 = vset.pattern.permute.xlu0 4
    %2459 = vperm.xlu0 %2458, %v1109
    %v2460 = vpop.permute.xlu0 %2459
    %2462 = vset.pattern.permute.xlu0 4
    %2463 = vperm.xlu0 %2462, %v1110
    %v2464 = vpop.permute.xlu0 %2463
    %2466 = vset.pattern.permute.xlu0 4
    %2467 = vperm.xlu0 %2466, %v1111
    %v2468 = vpop.permute.xlu0 %2467
    %2470 = vset.pattern.permute.xlu0 4
    %2471 = vperm.xlu0 %2470, %v1112
    %v2472 = vpop.permute.xlu0 %2471
    %2474 = vset.pattern.permute.xlu0 4
    %2475 = vperm.xlu0 %2474, %v1113
    %v2476 = vpop.permute.xlu0 %2475
    %2478 = vset.pattern.permute.xlu0 4
    %2479 = vperm.xlu0 %2478, %v1114
    %v2480 = vpop.permute.xlu0 %2479
    %2482 = vset.pattern.permute.xlu0 4
    %2483 = vperm.xlu0 %2482, %v1115
    %v2484 = vpop.permute.xlu0 %2483
    %2486 = vset.pattern.permute.xlu0 4
    %2487 = vperm.xlu0 %2486, %v1116
    %v2488 = vpop.permute.xlu0 %2487
    %2490 = vset.pattern.permute.xlu0 4
    %2491 = vperm.xlu0 %2490, %v1117
    %v2492 = vpop.permute.xlu0 %2491
    %v2494 = vmul.f32 %v2432, %v113
    %v2495 = vmul.f32 %v2436, %v113
    %v2496 = vmul.f32 %v2440, %v113
    %v2497 = vmul.f32 %v2444, %v113
    %v2498 = vmul.f32 %v2448, %v113
    %v2499 = vmul.f32 %v2452, %v113
    %v2500 = vmul.f32 %v2456, %v113
    %v2501 = vmul.f32 %v2460, %v113
    %v2502 = vmul.f32 %v2464, %v121
    %v2503 = vmul.f32 %v2468, %v121
    %v2504 = vmul.f32 %v2472, %v121
    %v2505 = vmul.f32 %v2476, %v121
    %v2506 = vmul.f32 %v2480, %v121
    %v2507 = vmul.f32 %v2484, %v121
    %v2508 = vmul.f32 %v2488, %v121
    %v2509 = vmul.f32 %v2492, %v121
    %v2510 = vadd.f32 %v2414, %v2494
    %v2511 = vadd.f32 %v2415, %v2495
    %v2512 = vadd.f32 %v2416, %v2496
    %v2513 = vadd.f32 %v2417, %v2497
    %v2514 = vadd.f32 %v2418, %v2498
    %v2515 = vadd.f32 %v2419, %v2499
    %v2516 = vadd.f32 %v2420, %v2500
    %v2517 = vadd.f32 %v2421, %v2501
    %v2518 = vadd.f32 %v2422, %v2502
    %v2519 = vadd.f32 %v2423, %v2503
    %v2520 = vadd.f32 %v2424, %v2504
    %v2521 = vadd.f32 %v2425, %v2505
    %v2522 = vadd.f32 %v2426, %v2506
    %v2523 = vadd.f32 %v2427, %v2507
    %v2524 = vadd.f32 %v2428, %v2508
    %v2525 = vadd.f32 %v2429, %v2509
    %2526 = vset.pattern.permute.xlu0 5
    %2527 = vperm.xlu0 %2526, %v1102
    %v2528 = vpop.permute.xlu0 %2527
    %2530 = vset.pattern.permute.xlu0 5
    %2531 = vperm.xlu0 %2530, %v1103
    %v2532 = vpop.permute.xlu0 %2531
    %2534 = vset.pattern.permute.xlu0 5
    %2535 = vperm.xlu0 %2534, %v1104
    %v2536 = vpop.permute.xlu0 %2535
    %2538 = vset.pattern.permute.xlu0 5
    %2539 = vperm.xlu0 %2538, %v1105
    %v2540 = vpop.permute.xlu0 %2539
    %2542 = vset.pattern.permute.xlu0 5
    %2543 = vperm.xlu0 %2542, %v1106
    %v2544 = vpop.permute.xlu0 %2543
    %2546 = vset.pattern.permute.xlu0 5
    %2547 = vperm.xlu0 %2546, %v1107
    %v2548 = vpop.permute.xlu0 %2547
    %2550 = vset.pattern.permute.xlu0 5
    %2551 = vperm.xlu0 %2550, %v1108
    %v2552 = vpop.permute.xlu0 %2551
    %2554 = vset.pattern.permute.xlu0 5
    %2555 = vperm.xlu0 %2554, %v1109
    %v2556 = vpop.permute.xlu0 %2555
    %2558 = vset.pattern.permute.xlu0 5
    %2559 = vperm.xlu0 %2558, %v1110
    %v2560 = vpop.permute.xlu0 %2559
    %2562 = vset.pattern.permute.xlu0 5
    %2563 = vperm.xlu0 %2562, %v1111
    %v2564 = vpop.permute.xlu0 %2563
    %2566 = vset.pattern.permute.xlu0 5
    %2567 = vperm.xlu0 %2566, %v1112
    %v2568 = vpop.permute.xlu0 %2567
    %2570 = vset.pattern.permute.xlu0 5
    %2571 = vperm.xlu0 %2570, %v1113
    %v2572 = vpop.permute.xlu0 %2571
    %2574 = vset.pattern.permute.xlu0 5
    %2575 = vperm.xlu0 %2574, %v1114
    %v2576 = vpop.permute.xlu0 %2575
    %2578 = vset.pattern.permute.xlu0 5
    %2579 = vperm.xlu0 %2578, %v1115
    %v2580 = vpop.permute.xlu0 %2579
    %2582 = vset.pattern.permute.xlu0 5
    %2583 = vperm.xlu0 %2582, %v1116
    %v2584 = vpop.permute.xlu0 %2583
    %2586 = vset.pattern.permute.xlu0 5
    %2587 = vperm.xlu0 %2586, %v1117
    %v2588 = vpop.permute.xlu0 %2587
    %v2590 = vmul.f32 %v2528, %v114
    %v2591 = vmul.f32 %v2532, %v114
    %v2592 = vmul.f32 %v2536, %v114
    %v2593 = vmul.f32 %v2540, %v114
    %v2594 = vmul.f32 %v2544, %v114
    %v2595 = vmul.f32 %v2548, %v114
    %v2596 = vmul.f32 %v2552, %v114
    %v2597 = vmul.f32 %v2556, %v114
    %v2598 = vmul.f32 %v2560, %v122
    %v2599 = vmul.f32 %v2564, %v122
    %v2600 = vmul.f32 %v2568, %v122
    %v2601 = vmul.f32 %v2572, %v122
    %v2602 = vmul.f32 %v2576, %v122
    %v2603 = vmul.f32 %v2580, %v122
    %v2604 = vmul.f32 %v2584, %v122
    %v2605 = vmul.f32 %v2588, %v122
    %v2606 = vadd.f32 %v2510, %v2590
    %v2607 = vadd.f32 %v2511, %v2591
    %v2608 = vadd.f32 %v2512, %v2592
    %v2609 = vadd.f32 %v2513, %v2593
    %v2610 = vadd.f32 %v2514, %v2594
    %v2611 = vadd.f32 %v2515, %v2595
    %v2612 = vadd.f32 %v2516, %v2596
    %v2613 = vadd.f32 %v2517, %v2597
    %v2614 = vadd.f32 %v2518, %v2598
    %v2615 = vadd.f32 %v2519, %v2599
    %v2616 = vadd.f32 %v2520, %v2600
    %v2617 = vadd.f32 %v2521, %v2601
    %v2618 = vadd.f32 %v2522, %v2602
    %v2619 = vadd.f32 %v2523, %v2603
    %v2620 = vadd.f32 %v2524, %v2604
    %v2621 = vadd.f32 %v2525, %v2605
    %2622 = vset.pattern.permute.xlu0 6
    %2623 = vperm.xlu0 %2622, %v1102
    %v2624 = vpop.permute.xlu0 %2623
    %2626 = vset.pattern.permute.xlu0 6
    %2627 = vperm.xlu0 %2626, %v1103
    %v2628 = vpop.permute.xlu0 %2627
    %2630 = vset.pattern.permute.xlu0 6
    %2631 = vperm.xlu0 %2630, %v1104
    %v2632 = vpop.permute.xlu0 %2631
    %2634 = vset.pattern.permute.xlu0 6
    %2635 = vperm.xlu0 %2634, %v1105
    %v2636 = vpop.permute.xlu0 %2635
    %2638 = vset.pattern.permute.xlu0 6
    %2639 = vperm.xlu0 %2638, %v1106
    %v2640 = vpop.permute.xlu0 %2639
    %2642 = vset.pattern.permute.xlu0 6
    %2643 = vperm.xlu0 %2642, %v1107
    %v2644 = vpop.permute.xlu0 %2643
    %2646 = vset.pattern.permute.xlu0 6
    %2647 = vperm.xlu0 %2646, %v1108
    %v2648 = vpop.permute.xlu0 %2647
    %2650 = vset.pattern.permute.xlu0 6
    %2651 = vperm.xlu0 %2650, %v1109
    %v2652 = vpop.permute.xlu0 %2651
    %2654 = vset.pattern.permute.xlu0 6
    %2655 = vperm.xlu0 %2654, %v1110
    %v2656 = vpop.permute.xlu0 %2655
    %2658 = vset.pattern.permute.xlu0 6
    %2659 = vperm.xlu0 %2658, %v1111
    %v2660 = vpop.permute.xlu0 %2659
    %2662 = vset.pattern.permute.xlu0 6
    %2663 = vperm.xlu0 %2662, %v1112
    %v2664 = vpop.permute.xlu0 %2663
    %2666 = vset.pattern.permute.xlu0 6
    %2667 = vperm.xlu0 %2666, %v1113
    %v2668 = vpop.permute.xlu0 %2667
    %2670 = vset.pattern.permute.xlu0 6
    %2671 = vperm.xlu0 %2670, %v1114
    %v2672 = vpop.permute.xlu0 %2671
    %2674 = vset.pattern.permute.xlu0 6
    %2675 = vperm.xlu0 %2674, %v1115
    %v2676 = vpop.permute.xlu0 %2675
    %2678 = vset.pattern.permute.xlu0 6
    %2679 = vperm.xlu0 %2678, %v1116
    %v2680 = vpop.permute.xlu0 %2679
    %2682 = vset.pattern.permute.xlu0 6
    %2683 = vperm.xlu0 %2682, %v1117
    %v2684 = vpop.permute.xlu0 %2683
    %v2686 = vmul.f32 %v2624, %v115
    %v2687 = vmul.f32 %v2628, %v115
    %v2688 = vmul.f32 %v2632, %v115
    %v2689 = vmul.f32 %v2636, %v115
    %v2690 = vmul.f32 %v2640, %v115
    %v2691 = vmul.f32 %v2644, %v115
    %v2692 = vmul.f32 %v2648, %v115
    %v2693 = vmul.f32 %v2652, %v115
    %v2694 = vmul.f32 %v2656, %v123
    %v2695 = vmul.f32 %v2660, %v123
    %v2696 = vmul.f32 %v2664, %v123
    %v2697 = vmul.f32 %v2668, %v123
    %v2698 = vmul.f32 %v2672, %v123
    %v2699 = vmul.f32 %v2676, %v123
    %v2700 = vmul.f32 %v2680, %v123
    %v2701 = vmul.f32 %v2684, %v123
    %v2702 = vadd.f32 %v2606, %v2686
    %v2703 = vadd.f32 %v2607, %v2687
    %v2704 = vadd.f32 %v2608, %v2688
    %v2705 = vadd.f32 %v2609, %v2689
    %v2706 = vadd.f32 %v2610, %v2690
    %v2707 = vadd.f32 %v2611, %v2691
    %v2708 = vadd.f32 %v2612, %v2692
    %v2709 = vadd.f32 %v2613, %v2693
    %v2710 = vadd.f32 %v2614, %v2694
    %v2711 = vadd.f32 %v2615, %v2695
    %v2712 = vadd.f32 %v2616, %v2696
    %v2713 = vadd.f32 %v2617, %v2697
    %v2714 = vadd.f32 %v2618, %v2698
    %v2715 = vadd.f32 %v2619, %v2699
    %v2716 = vadd.f32 %v2620, %v2700
    %v2717 = vadd.f32 %v2621, %v2701
    %2718 = vset.pattern.permute.xlu0 7
    %2719 = vperm.xlu0 %2718, %v1102
    %v2720 = vpop.permute.xlu0 %2719
    %2722 = vset.pattern.permute.xlu0 7
    %2723 = vperm.xlu0 %2722, %v1103
    %v2724 = vpop.permute.xlu0 %2723
    %2726 = vset.pattern.permute.xlu0 7
    %2727 = vperm.xlu0 %2726, %v1104
    %v2728 = vpop.permute.xlu0 %2727
    %2730 = vset.pattern.permute.xlu0 7
    %2731 = vperm.xlu0 %2730, %v1105
    %v2732 = vpop.permute.xlu0 %2731
    %2734 = vset.pattern.permute.xlu0 7
    %2735 = vperm.xlu0 %2734, %v1106
    %v2736 = vpop.permute.xlu0 %2735
    %2738 = vset.pattern.permute.xlu0 7
    %2739 = vperm.xlu0 %2738, %v1107
    %v2740 = vpop.permute.xlu0 %2739
    %2742 = vset.pattern.permute.xlu0 7
    %2743 = vperm.xlu0 %2742, %v1108
    %v2744 = vpop.permute.xlu0 %2743
    %2746 = vset.pattern.permute.xlu0 7
    %2747 = vperm.xlu0 %2746, %v1109
    %v2748 = vpop.permute.xlu0 %2747
    %2750 = vset.pattern.permute.xlu0 7
    %2751 = vperm.xlu0 %2750, %v1110
    %v2752 = vpop.permute.xlu0 %2751
    %2754 = vset.pattern.permute.xlu0 7
    %2755 = vperm.xlu0 %2754, %v1111
    %v2756 = vpop.permute.xlu0 %2755
    %2758 = vset.pattern.permute.xlu0 7
    %2759 = vperm.xlu0 %2758, %v1112
    %v2760 = vpop.permute.xlu0 %2759
    %2762 = vset.pattern.permute.xlu0 7
    %2763 = vperm.xlu0 %2762, %v1113
    %v2764 = vpop.permute.xlu0 %2763
    %2766 = vset.pattern.permute.xlu0 7
    %2767 = vperm.xlu0 %2766, %v1114
    %v2768 = vpop.permute.xlu0 %2767
    %2770 = vset.pattern.permute.xlu0 7
    %2771 = vperm.xlu0 %2770, %v1115
    %v2772 = vpop.permute.xlu0 %2771
    %2774 = vset.pattern.permute.xlu0 7
    %2775 = vperm.xlu0 %2774, %v1116
    %v2776 = vpop.permute.xlu0 %2775
    %2778 = vset.pattern.permute.xlu0 7
    %2779 = vperm.xlu0 %2778, %v1117
    %v2780 = vpop.permute.xlu0 %2779
    %v2782 = vmul.f32 %v2720, %v116
    %v2783 = vmul.f32 %v2724, %v116
    %v2784 = vmul.f32 %v2728, %v116
    %v2785 = vmul.f32 %v2732, %v116
    %v2786 = vmul.f32 %v2736, %v116
    %v2787 = vmul.f32 %v2740, %v116
    %v2788 = vmul.f32 %v2744, %v116
    %v2789 = vmul.f32 %v2748, %v116
    %v2790 = vmul.f32 %v2752, %v124
    %v2791 = vmul.f32 %v2756, %v124
    %v2792 = vmul.f32 %v2760, %v124
    %v2793 = vmul.f32 %v2764, %v124
    %v2794 = vmul.f32 %v2768, %v124
    %v2795 = vmul.f32 %v2772, %v124
    %v2796 = vmul.f32 %v2776, %v124
    %v2797 = vmul.f32 %v2780, %v124
    %v2798 = vadd.f32 %v2702, %v2782
    %v2799 = vadd.f32 %v2703, %v2783
    %v2800 = vadd.f32 %v2704, %v2784
    %v2801 = vadd.f32 %v2705, %v2785
    %v2802 = vadd.f32 %v2706, %v2786
    %v2803 = vadd.f32 %v2707, %v2787
    %v2804 = vadd.f32 %v2708, %v2788
    %v2805 = vadd.f32 %v2709, %v2789
    %v2806 = vadd.f32 %v2710, %v2790
    %v2807 = vadd.f32 %v2711, %v2791
    %v2808 = vadd.f32 %v2712, %v2792
    %v2809 = vadd.f32 %v2713, %v2793
    %v2810 = vadd.f32 %v2714, %v2794
    %v2811 = vadd.f32 %v2715, %v2795
    %v2812 = vadd.f32 %v2716, %v2796
    %v2813 = vadd.f32 %v2717, %v2797
    %v2814 = vrot.slane %v2800, 4
    %vm2815 = vcmask 1047556
    %v2816 = vsel %vm2815, %v2814, %v2798
    %v2817 = vrot.slane %v2798, 4
    %v2818 = vsel %vm2815, %v2800, %v2817
    %v2820 = vunpack.c.l.s4 1983009808
    %v2821 = vunpack.c.0.s8 %v2820
    %v2822 = vperm.slane %v2816, %v2821
    %v2824 = vunpack.c.l.s4 1983009808
    %v2825 = vunpack.c.0.s8 %v2824
    %v2826 = vperm.slane %v2818, %v2825
    %v2827 = vrot.slane %v2801, 4
    %v2828 = vsel %vm2815, %v2827, %v2799
    %v2829 = vrot.slane %v2799, 4
    %v2830 = vsel %vm2815, %v2801, %v2829
    %v2832 = vunpack.c.l.s4 1983009808
    %v2833 = vunpack.c.0.s8 %v2832
    %v2834 = vperm.slane %v2828, %v2833
    %v2836 = vunpack.c.l.s4 1983009808
    %v2837 = vunpack.c.0.s8 %v2836
    %v2838 = vperm.slane %v2830, %v2837
    %v2839 = vrot.slane %v2804, 4
    %v2840 = vsel %vm2815, %v2839, %v2802
    %v2841 = vrot.slane %v2802, 4
    %v2842 = vsel %vm2815, %v2804, %v2841
    %v2844 = vunpack.c.l.s4 1983009808
    %v2845 = vunpack.c.0.s8 %v2844
    %v2846 = vperm.slane %v2840, %v2845
    %v2848 = vunpack.c.l.s4 1983009808
    %v2849 = vunpack.c.0.s8 %v2848
    %v2850 = vperm.slane %v2842, %v2849
    %v2851 = vrot.slane %v2805, 4
    %v2852 = vsel %vm2815, %v2851, %v2803
    %v2853 = vrot.slane %v2803, 4
    %v2854 = vsel %vm2815, %v2805, %v2853
    %v2856 = vunpack.c.l.s4 1983009808
    %v2857 = vunpack.c.0.s8 %v2856
    %v2858 = vperm.slane %v2852, %v2857
    %v2860 = vunpack.c.l.s4 1983009808
    %v2861 = vunpack.c.0.s8 %v2860
    %v2862 = vperm.slane %v2854, %v2861
    %v2863 = vrot.slane %v2834, 4
    %v2864 = vsel %vm2815, %v2863, %v2822
    %v2865 = vrot.slane %v2822, 4
    %v2866 = vsel %vm2815, %v2834, %v2865
    %v2868 = vunpack.c.l.s4 1934713408
    %v2869 = vunpack.c.0.s8 %v2868
    %v2870 = vperm.slane %v2864, %v2869
    %v2872 = vunpack.c.l.s4 1934713408
    %v2873 = vunpack.c.0.s8 %v2872
    %v2874 = vperm.slane %v2866, %v2873
    %v2875 = vrot.slane %v2838, 4
    %v2876 = vsel %vm2815, %v2875, %v2826
    %v2877 = vrot.slane %v2826, 4
    %v2878 = vsel %vm2815, %v2838, %v2877
    %v2880 = vunpack.c.l.s4 1934713408
    %v2881 = vunpack.c.0.s8 %v2880
    %v2882 = vperm.slane %v2876, %v2881
    %v2884 = vunpack.c.l.s4 1934713408
    %v2885 = vunpack.c.0.s8 %v2884
    %v2886 = vperm.slane %v2878, %v2885
    %v2887 = vrot.slane %v2858, 4
    %v2888 = vsel %vm2815, %v2887, %v2846
    %v2889 = vrot.slane %v2846, 4
    %v2890 = vsel %vm2815, %v2858, %v2889
    %v2892 = vunpack.c.l.s4 1934713408
    %v2893 = vunpack.c.0.s8 %v2892
    %v2894 = vperm.slane %v2888, %v2893
    %v2896 = vunpack.c.l.s4 1934713408
    %v2897 = vunpack.c.0.s8 %v2896
    %v2898 = vperm.slane %v2890, %v2897
    %v2899 = vrot.slane %v2862, 4
    %v2900 = vsel %vm2815, %v2899, %v2850
    %v2901 = vrot.slane %v2850, 4
    %v2902 = vsel %vm2815, %v2862, %v2901
    %v2904 = vunpack.c.l.s4 1934713408
    %v2905 = vunpack.c.0.s8 %v2904
    %v2906 = vperm.slane %v2900, %v2905
    %v2908 = vunpack.c.l.s4 1934713408
    %v2909 = vunpack.c.0.s8 %v2908
    %v2910 = vperm.slane %v2902, %v2909
    %v2911 = vrot.slane %v2894, 4
    %v2912 = vsel %vm2815, %v2911, %v2870
    %v2913 = vrot.slane %v2870, 4
    %v2914 = vsel %vm2815, %v2894, %v2913
    %v2915 = vrot.slane %v2898, 4
    %v2916 = vsel %vm2815, %v2915, %v2874
    %v2917 = vrot.slane %v2874, 4
    %v2918 = vsel %vm2815, %v2898, %v2917
    %v2919 = vrot.slane %v2906, 4
    %v2920 = vsel %vm2815, %v2919, %v2882
    %v2921 = vrot.slane %v2882, 4
    %v2922 = vsel %vm2815, %v2906, %v2921
    %v2923 = vrot.slane %v2910, 4
    %v2924 = vsel %vm2815, %v2923, %v2886
    %v2925 = vrot.slane %v2886, 4
    %v2926 = vsel %vm2815, %v2910, %v2925
    %v2927 = vrot.slane %v2808, 4
    %v2928 = vsel %vm2815, %v2927, %v2806
    %v2929 = vrot.slane %v2806, 4
    %v2930 = vsel %vm2815, %v2808, %v2929
    %v2932 = vunpack.c.l.s4 1983009808
    %v2933 = vunpack.c.0.s8 %v2932
    %v2934 = vperm.slane %v2928, %v2933
    %v2936 = vunpack.c.l.s4 1983009808
    %v2937 = vunpack.c.0.s8 %v2936
    %v2938 = vperm.slane %v2930, %v2937
    %v2939 = vrot.slane %v2809, 4
    %v2940 = vsel %vm2815, %v2939, %v2807
    %v2941 = vrot.slane %v2807, 4
    %v2942 = vsel %vm2815, %v2809, %v2941
    %v2944 = vunpack.c.l.s4 1983009808
    %v2945 = vunpack.c.0.s8 %v2944
    %v2946 = vperm.slane %v2940, %v2945
    %v2948 = vunpack.c.l.s4 1983009808
    %v2949 = vunpack.c.0.s8 %v2948
    %v2950 = vperm.slane %v2942, %v2949
    %v2951 = vrot.slane %v2812, 4
    %v2952 = vsel %vm2815, %v2951, %v2810
    %v2953 = vrot.slane %v2810, 4
    %v2954 = vsel %vm2815, %v2812, %v2953
    %v2956 = vunpack.c.l.s4 1983009808
    %v2957 = vunpack.c.0.s8 %v2956
    %v2958 = vperm.slane %v2952, %v2957
    %v2960 = vunpack.c.l.s4 1983009808
    %v2961 = vunpack.c.0.s8 %v2960
    %v2962 = vperm.slane %v2954, %v2961
    %v2963 = vrot.slane %v2813, 4
    %v2964 = vsel %vm2815, %v2963, %v2811
    %v2965 = vrot.slane %v2811, 4
    %v2966 = vsel %vm2815, %v2813, %v2965
    %v2968 = vunpack.c.l.s4 1983009808
    %v2969 = vunpack.c.0.s8 %v2968
    %v2970 = vperm.slane %v2964, %v2969
    %v2972 = vunpack.c.l.s4 1983009808
    %v2973 = vunpack.c.0.s8 %v2972
    %v2974 = vperm.slane %v2966, %v2973
    %v2975 = vrot.slane %v2946, 4
    %v2976 = vsel %vm2815, %v2975, %v2934
    %v2977 = vrot.slane %v2934, 4
    %v2978 = vsel %vm2815, %v2946, %v2977
    %v2980 = vunpack.c.l.s4 1934713408
    %v2981 = vunpack.c.0.s8 %v2980
    %v2982 = vperm.slane %v2976, %v2981
    %v2984 = vunpack.c.l.s4 1934713408
    %v2985 = vunpack.c.0.s8 %v2984
    %v2986 = vperm.slane %v2978, %v2985
    %v2987 = vrot.slane %v2950, 4
    %v2988 = vsel %vm2815, %v2987, %v2938
    %v2989 = vrot.slane %v2938, 4
    %v2990 = vsel %vm2815, %v2950, %v2989
    %v2992 = vunpack.c.l.s4 1934713408
    %v2993 = vunpack.c.0.s8 %v2992
    %v2994 = vperm.slane %v2988, %v2993
    %v2996 = vunpack.c.l.s4 1934713408
    %v2997 = vunpack.c.0.s8 %v2996
    %v2998 = vperm.slane %v2990, %v2997
    %v2999 = vrot.slane %v2970, 4
    %v3000 = vsel %vm2815, %v2999, %v2958
    %v3001 = vrot.slane %v2958, 4
    %v3002 = vsel %vm2815, %v2970, %v3001
    %v3004 = vunpack.c.l.s4 1934713408
    %v3005 = vunpack.c.0.s8 %v3004
    %v3006 = vperm.slane %v3000, %v3005
    %v3008 = vunpack.c.l.s4 1934713408
    %v3009 = vunpack.c.0.s8 %v3008
    %v3010 = vperm.slane %v3002, %v3009
    %v3011 = vrot.slane %v2974, 4
    %v3012 = vsel %vm2815, %v3011, %v2962
    %v3013 = vrot.slane %v2962, 4
    %v3014 = vsel %vm2815, %v2974, %v3013
    %v3016 = vunpack.c.l.s4 1934713408
    %v3017 = vunpack.c.0.s8 %v3016
    %v3018 = vperm.slane %v3012, %v3017
    %v3020 = vunpack.c.l.s4 1934713408
    %v3021 = vunpack.c.0.s8 %v3020
    %v3022 = vperm.slane %v3014, %v3021
    %v3023 = vrot.slane %v3006, 4
    %v3024 = vsel %vm2815, %v3023, %v2982
    %v3025 = vrot.slane %v2982, 4
    %v3026 = vsel %vm2815, %v3006, %v3025
    %v3027 = vrot.slane %v3010, 4
    %v3028 = vsel %vm2815, %v3027, %v2986
    %v3029 = vrot.slane %v2986, 4
    %v3030 = vsel %vm2815, %v3010, %v3029
    %v3031 = vrot.slane %v3018, 4
    %v3032 = vsel %vm2815, %v3031, %v2994
    %v3033 = vrot.slane %v2994, 4
    %v3034 = vsel %vm2815, %v3018, %v3033
    %v3035 = vrot.slane %v3022, 4
    %v3036 = vsel %vm2815, %v3035, %v2998
    %v3037 = vrot.slane %v2998, 4
    %v3038 = vsel %vm2815, %v3022, %v3037
    %3041 = vrot.lane.b32.xlu0 %v2914, 16
    %v3042 = vpop.permute.xlu0 %3041
    %3043 = vrot.lane.b32.xlu0 %v3026, 16
    %v3044 = vpop.permute.xlu0 %3043
    %3049 = vrot.lane.b32.xlu0 %v2916, 32
    %v3050 = vpop.permute.xlu0 %3049
    %3051 = vrot.lane.b32.xlu0 %v3028, 32
    %v3052 = vpop.permute.xlu0 %3051
    %3057 = vrot.lane.b32.xlu0 %v2918, 48
    %v3058 = vpop.permute.xlu0 %3057
    %3059 = vrot.lane.b32.xlu0 %v3030, 48
    %v3060 = vpop.permute.xlu0 %3059
    %3065 = vrot.lane.b32.xlu0 %v2920, 64
    %v3066 = vpop.permute.xlu0 %3065
    %3067 = vrot.lane.b32.xlu0 %v3032, 64
    %v3068 = vpop.permute.xlu0 %3067
    %3073 = vrot.lane.b32.xlu0 %v2922, 80
    %v3074 = vpop.permute.xlu0 %3073
    %3075 = vrot.lane.b32.xlu0 %v3034, 80
    %v3076 = vpop.permute.xlu0 %3075
    %3081 = vrot.lane.b32.xlu0 %v2924, 96
    %v3082 = vpop.permute.xlu0 %3081
    %3083 = vrot.lane.b32.xlu0 %v3036, 96
    %v3084 = vpop.permute.xlu0 %3083
    %3089 = vrot.lane.b32.xlu0 %v2926, 112
    %v3090 = vpop.permute.xlu0 %3089
    %3091 = vrot.lane.b32.xlu0 %v3038, 112
    %v3092 = vpop.permute.xlu0 %3091
    %v3095 = vsel %vm157, %v2912, %v3042
    %v3096 = vsel %vm157, %v3024, %v3044
    %vm3097 = vcmask 261120
    %v3098 = vsel %vm3097, %v3095, %v3050
    %v3099 = vsel %vm3097, %v3096, %v3052
    %vm3100 = vcmask 392192
    %v3101 = vsel %vm3100, %v3098, %v3058
    %v3102 = vsel %vm3100, %v3099, %v3060
    %vm3103 = vcmask 523264
    %v3104 = vsel %vm3103, %v3101, %v3066
    %v3105 = vsel %vm3103, %v3102, %v3068
    %vm3106 = vcmask 654336
    %v3107 = vsel %vm3106, %v3104, %v3074
    %v3108 = vsel %vm3106, %v3105, %v3076
    %vm3109 = vcmask 785408
    %v3110 = vsel %vm3109, %v3107, %v3082
    %v3111 = vsel %vm3109, %v3108, %v3084
    %vm3112 = vcmask 916480
    %v3113 = vsel %vm3112, %v3110, %v3090
    %v3114 = vsel %vm3112, %v3111, %v3092
    %v3115 = vpack.c.bf16 %v3114, %v3113
    %v3116 = vld [vmem:[%s4] sm:$0xff]
    %v3117 = vld [vmem:[%s4 + $0x8] sm:$0xff]
    %v3118 = vld [vmem:[%s4 + $0x10] sm:$0xff]
    %v3119 = vld [vmem:[%s4 + $0x18] sm:$0xff]
    %v3120 = vld [vmem:[%s4 + $0x20] sm:$0xff]
    %v3121 = vld [vmem:[%s4 + $0x28] sm:$0xff]
    %v3122 = vld [vmem:[%s4 + $0x30] sm:$0xff]
    %v3123 = vld [vmem:[%s4 + $0x38] sm:$0xff]
    %v3124 = vld [vmem:[%s4 + $0x40] sm:$0xff]
    %v3125 = vld [vmem:[%s4 + $0x48] sm:$0xff]
    %v3126 = vld [vmem:[%s4 + $0x50] sm:$0xff]
    %v3127 = vld [vmem:[%s4 + $0x58] sm:$0xff]
    %v3128 = vld [vmem:[%s4 + $0x60] sm:$0xff]
    %v3129 = vld [vmem:[%s4 + $0x68] sm:$0xff]
    %v3130 = vld [vmem:[%s4 + $0x70] sm:$0xff]
    %v3131 = vld [vmem:[%s4 + $0x78] sm:$0xff]
    %v3132 = vld [vmem:[#allocation6] sm:$0x3]
    %v3134 = vperm.slane %v3132, 0
    %v3135 = vperm.slane %v3132, 1
    %v3154 = vunpack.c.l.b16 %v3116
    %v3155 = vunpack.c.h.b16 %v3116
    %v3156 = vunpack.c.l.b16 %v3117
    %v3157 = vunpack.c.h.b16 %v3117
    %v3158 = vunpack.c.l.b16 %v3118
    %v3159 = vunpack.c.h.b16 %v3118
    %v3160 = vunpack.c.l.b16 %v3119
    %v3161 = vunpack.c.h.b16 %v3119
    %v3162 = vunpack.c.l.b16 %v3120
    %v3163 = vunpack.c.h.b16 %v3120
    %v3164 = vunpack.c.l.b16 %v3121
    %v3165 = vunpack.c.h.b16 %v3121
    %v3166 = vunpack.c.l.b16 %v3122
    %v3167 = vunpack.c.h.b16 %v3122
    %v3168 = vunpack.c.l.b16 %v3123
    %v3169 = vunpack.c.h.b16 %v3123
    %v3170 = vunpack.c.l.b16 %v3124
    %v3171 = vunpack.c.h.b16 %v3124
    %v3172 = vunpack.c.l.b16 %v3125
    %v3173 = vunpack.c.h.b16 %v3125
    %v3174 = vunpack.c.l.b16 %v3126
    %v3175 = vunpack.c.h.b16 %v3126
    %v3176 = vunpack.c.l.b16 %v3127
    %v3177 = vunpack.c.h.b16 %v3127
    %v3178 = vunpack.c.l.b16 %v3128
    %v3179 = vunpack.c.h.b16 %v3128
    %v3180 = vunpack.c.l.b16 %v3129
    %v3181 = vunpack.c.h.b16 %v3129
    %v3182 = vunpack.c.l.b16 %v3130
    %v3183 = vunpack.c.h.b16 %v3130
    %v3184 = vunpack.c.l.b16 %v3131
    %v3185 = vunpack.c.h.b16 %v3131
    %v3186 = vpack.c.b16 %v3156, %v3154
    %v3187 = vpack.c.b16 %v3157, %v3155
    %v3188 = vpack.c.b16 %v3160, %v3158
    %v3189 = vpack.c.b16 %v3161, %v3159
    %v3190 = vpack.c.b16 %v3164, %v3162
    %v3191 = vpack.c.b16 %v3165, %v3163
    %v3192 = vpack.c.b16 %v3168, %v3166
    %v3193 = vpack.c.b16 %v3169, %v3167
    %v3194 = vpack.c.b16 %v3172, %v3170
    %v3195 = vpack.c.b16 %v3173, %v3171
    %v3196 = vpack.c.b16 %v3176, %v3174
    %v3197 = vpack.c.b16 %v3177, %v3175
    %v3198 = vpack.c.b16 %v3180, %v3178
    %v3199 = vpack.c.b16 %v3181, %v3179
    %v3200 = vpack.c.b16 %v3184, %v3182
    %v3201 = vpack.c.b16 %v3185, %v3183
    %3218 = vmatpush.bf16.msra.mxu0 %v3200
    %3219 = vmatpush.bf16.msra.mxu0 %v3198
    %3220 = vmatpush.bf16.msra.mxu0 %v3196
    %3221 = vmatpush.bf16.msra.mxu0 %v3194
    %3222 = vmatpush.bf16.msra.mxu0 %v3192
    %3223 = vmatpush.bf16.msra.mxu0 %v3190
    %3224 = vmatpush.bf16.msra.mxu0 %v3188
    %3225 = vmatpush.bf16.msra.mxu0 %v3186
    %3226 = vmatmul.bf16.gmra.mxu0 %v3115
    %v3227 = vpop.f32.mrf.mxu0
    %v3228 = vadd.f32 %v3134, %v3227
    %v3229 = vpop.f32.mrf.mxu0
    %v3230 = vadd.f32 %v3134, %v3229
    %3231 = vdwg.mxu0
    %3232 = vmatpush.bf16.msra.mxu0 %v3201
    %3233 = vmatpush.bf16.msra.mxu0 %v3199
    %3234 = vmatpush.bf16.msra.mxu0 %v3197
    %3235 = vmatpush.bf16.msra.mxu0 %v3195
    %3236 = vmatpush.bf16.msra.mxu0 %v3193
    %3237 = vmatpush.bf16.msra.mxu0 %v3191
    %3238 = vmatpush.bf16.msra.mxu0 %v3189
    %3239 = vmatpush.bf16.msra.mxu0 %v3187
    %3240 = vmatmul.bf16.gmra.mxu0 %v3115
    %v3241 = vpop.f32.mrf.mxu0
    %v3242 = vadd.f32 %v3135, %v3241
    %v3243 = vpop.f32.mrf.mxu0
    %v3244 = vadd.f32 %v3135, %v3243
    %3245 = vdwg.mxu0
    %v3246 = vadd.f32 %v3228, %v3230
    %v3247 = vrot.slane %v3246, 4
    %v3248 = vadd.f32 %v3246, %v3247
    %v3249 = vrot.slane %v3248, 2
    %v3250 = vadd.f32 %v3248, %v3249
    %v3251 = vrot.slane %v3250, 1
    %v3252 = vadd.f32 %v3250, %v3251
    %v3253 = vadd.f32 %v3242, %v3244
    %v3254 = vrot.slane %v3253, 4
    %v3255 = vadd.f32 %v3253, %v3254
    %v3256 = vrot.slane %v3255, 2
    %v3257 = vadd.f32 %v3255, %v3256
    %v3258 = vrot.slane %v3257, 1
    %v3259 = vadd.f32 %v3257, %v3258
    %v3260 = vmul.f32 %v3228, %v3228
    %v3261 = vmul.f32 %v3242, %v3242
    %v3262 = vmul.f32 %v3230, %v3230
    %v3263 = vmul.f32 %v3244, %v3244
    %v3264 = vadd.f32 %v3260, %v3262
    %v3265 = vrot.slane %v3264, 4
    %v3266 = vadd.f32 %v3264, %v3265
    %v3267 = vrot.slane %v3266, 2
    %v3268 = vadd.f32 %v3266, %v3267
    %v3269 = vrot.slane %v3268, 1
    %v3270 = vadd.f32 %v3268, %v3269
    %v3271 = vadd.f32 %v3261, %v3263
    %v3272 = vrot.slane %v3271, 4
    %v3273 = vadd.f32 %v3271, %v3272
    %v3274 = vrot.slane %v3273, 2
    %v3275 = vadd.f32 %v3273, %v3274
    %v3276 = vrot.slane %v3275, 1
    %v3277 = vadd.f32 %v3275, %v3276
    %vm3278 = vcmask 1040384
    %v3279 = vsel %vm3278, %v3252, %v3270
    %v3280 = vsel %vm3278, %v3259, %v3277
    %v3281 = vld [vmem:[%s8] sm:$0xff]
    %v3282 = vld [vmem:[%s8 + $0x8] sm:$0xff]
    %v3283 = vld [vmem:[%s8 + $0x10] sm:$0xff]
    %v3284 = vld [vmem:[%s8 + $0x18] sm:$0xff]
    %v3285 = vld [vmem:[%s8 + $0x20] sm:$0xff]
    %v3286 = vld [vmem:[%s8 + $0x28] sm:$0xff]
    %v3287 = vld [vmem:[%s8 + $0x30] sm:$0xff]
    %v3288 = vld [vmem:[%s8 + $0x38] sm:$0xff]
    %v3289 = vld [vmem:[%s8 + $0x40] sm:$0xff]
    %v3290 = vld [vmem:[%s8 + $0x48] sm:$0xff]
    %v3291 = vld [vmem:[%s8 + $0x50] sm:$0xff]
    %v3292 = vld [vmem:[%s8 + $0x58] sm:$0xff]
    %v3293 = vld [vmem:[%s8 + $0x60] sm:$0xff]
    %v3294 = vld [vmem:[%s8 + $0x68] sm:$0xff]
    %v3295 = vld [vmem:[%s8 + $0x70] sm:$0xff]
    %v3296 = vld [vmem:[%s8 + $0x78] sm:$0xff]
    %v3297 = vld [vmem:[%s8 + $0x80] sm:$0xff]
    %v3298 = vld [vmem:[%s8 + $0x88] sm:$0xff]
    %v3299 = vld [vmem:[%s8 + $0x90] sm:$0xff]
    %v3300 = vld [vmem:[%s8 + $0x98] sm:$0xff]
    %v3301 = vld [vmem:[%s8 + $0xa0] sm:$0xff]
    %v3302 = vld [vmem:[%s8 + $0xa8] sm:$0xff]
    %v3303 = vld [vmem:[%s8 + $0xb0] sm:$0xff]
    %v3304 = vld [vmem:[%s8 + $0xb8] sm:$0xff]
    %v3305 = vld [vmem:[%s8 + $0xc0] sm:$0xff]
    %v3306 = vld [vmem:[%s8 + $0xc8] sm:$0xff]
    %v3307 = vld [vmem:[%s8 + $0xd0] sm:$0xff]
    %v3308 = vld [vmem:[%s8 + $0xd8] sm:$0xff]
    %v3309 = vld [vmem:[%s8 + $0xe0] sm:$0xff]
    %v3310 = vld [vmem:[%s8 + $0xe8] sm:$0xff]
    %v3311 = vld [vmem:[%s8 + $0xf0] sm:$0xff]
    %v3312 = vld [vmem:[%s8 + $0xf8] sm:$0xff]
    %3313 = vmatpush.msra.mxu0 %v3296
    %3314 = vmatpush.msra.mxu0 %v3295
    %3315 = vmatpush.msra.mxu0 %v3294
    %3316 = vmatpush.msra.mxu0 %v3293
    %3317 = vmatpush.msra.mxu0 %v3292
    %3318 = vmatpush.msra.mxu0 %v3291
    %3319 = vmatpush.msra.mxu0 %v3290
    %3320 = vmatpush.msra.mxu0 %v3289
    %3321 = vmatpush.msra.mxu0 %v3288
    %3322 = vmatpush.msra.mxu0 %v3287
    %3323 = vmatpush.msra.mxu0 %v3286
    %3324 = vmatpush.msra.mxu0 %v3285
    %3325 = vmatpush.msra.mxu0 %v3284
    %3326 = vmatpush.msra.mxu0 %v3283
    %3327 = vmatpush.msra.mxu0 %v3282
    %3328 = vmatpush.msra.mxu0 %v3281
    %3329 = vmatmul.f32.gmra.mxu0 %v3279
    %v3330 = vpop.f32.mrf.mxu0
    %v3331 = vadd.f32 0.0, %v3330
    %3332 = vdwg.mxu0
    %3333 = vmatpush.msra.mxu0 %v3312
    %3334 = vmatpush.msra.mxu0 %v3311
    %3335 = vmatpush.msra.mxu0 %v3310
    %3336 = vmatpush.msra.mxu0 %v3309
    %3337 = vmatpush.msra.mxu0 %v3308
    %3338 = vmatpush.msra.mxu0 %v3307
    %3339 = vmatpush.msra.mxu0 %v3306
    %3340 = vmatpush.msra.mxu0 %v3305
    %3341 = vmatpush.msra.mxu0 %v3304
    %3342 = vmatpush.msra.mxu0 %v3303
    %3343 = vmatpush.msra.mxu0 %v3302
    %3344 = vmatpush.msra.mxu0 %v3301
    %3345 = vmatpush.msra.mxu0 %v3300
    %3346 = vmatpush.msra.mxu0 %v3299
    %3347 = vmatpush.msra.mxu0 %v3298
    %3348 = vmatpush.msra.mxu0 %v3297
    %3349 = vmatmul.f32.gmra.mxu0 %v3280
    %v3350 = vpop.f32.mrf.mxu0
    %v3351 = vadd.f32 %v3331, %v3350
    %3352 = vdwg.mxu0
    %v3353 = vmul.f32 %v3351, 0.0078125
    %v3354 = vmul.f32 %v3353, %v3353
    %v3356 = vrot.slane %v3354, 7
    %v3358 = vsub.f32 %v3353, %v3356
    %v3359 = vld [vmem:[%s6] sm:$0x1]
    %v3360 = vadd.f32 %v3358, 1e-05
    %v3361 = vrsqrt.pop %v3360
    %v3362 = vmul.f32 %v3361, %v3360
    %v3363 = vmul.f32 %v3362, %v3361
    %v3364 = vmul.f32 0.5, %v3363
    %v3365 = vsub.f32 1.5, %v3364
    %v3366 = vmul.f32 %v3361, %v3365
    %vm3367 = vweird.f32 %v3360
    %vm3368 = vweird.f32 %v3361
    %vm3369 = vmor %vm3367, %vm3368
    %v3370 = vsel %vm3369, %v3361, %v3366
    %3372 = vst [vmem:[#allocation1] sm:$0xff] %v3370
    %s3373 = scalar_lea.vmem [#allocation1], 1
    %v3374 = vld [vmem:[%s3373] ss:$9 sm:$0xff]
    %v3376 = vmul.f32 %v3359, %v3374
    %v3377 = vld [vmem:[#allocation7] sm:$0x1]
    %v3378 = vmul.f32 %v3353, %v3376
    %v3379 = vsub.f32 %v3377, %v3378
    %v3381 = vperm.slane %v3379, 0
    %v3383 = vsel %vm3278, %v3376, %v3381
    %v3384 = vld [vmem:[#allocation9] sm:$0xff]
    %v3385 = vld [vmem:[#allocation9 + $0x8] sm:$0xff]
    %v3386 = vld [vmem:[#allocation9 + $0x10] sm:$0xff]
    %v3387 = vld [vmem:[#allocation9 + $0x18] sm:$0xff]
    %v3388 = vld [vmem:[#allocation9 + $0x20] sm:$0xff]
    %v3389 = vld [vmem:[#allocation9 + $0x28] sm:$0xff]
    %v3390 = vld [vmem:[#allocation9 + $0x30] sm:$0xff]
    %v3391 = vld [vmem:[#allocation9 + $0x38] sm:$0xff]
    %v3393 = vsel %vm3097, %v3383, 0
    %3395 = vmatpush.msra.mxu0 0.0
    %3396 = vmatpush.msra.mxu0 0.0
    %3397 = vmatpush.msra.mxu0 0.0
    %3398 = vmatpush.msra.mxu0 0.0
    %3399 = vmatpush.msra.mxu0 0.0
    %3400 = vmatpush.msra.mxu0 0.0
    %3401 = vmatpush.msra.mxu0 0.0
    %3402 = vmatpush.msra.mxu0 0.0
    %3403 = vmatpush.msra.mxu0 0.0
    %3404 = vmatpush.msra.mxu0 0.0
    %3405 = vmatpush.msra.mxu0 0.0
    %3406 = vmatpush.msra.mxu0 0.0
    %3407 = vmatpush.msra.mxu0 %v3390
    %3408 = vmatpush.msra.mxu0 %v3388
    %3409 = vmatpush.msra.mxu0 %v3386
    %3410 = vmatpush.msra.mxu0 %v3384
    %3411 = vmatmul.f32.gmra.mxu0 %v3393
    %v3412 = vpop.f32.mrf.mxu0
    %v3413 = vadd.f32 0.0, %v3412
    %3414 = vdwg.mxu0
    %3415 = vmatpush.msra.mxu0 0.0
    %3416 = vmatpush.msra.mxu0 0.0
    %3417 = vmatpush.msra.mxu0 0.0
    %3418 = vmatpush.msra.mxu0 0.0
    %3419 = vmatpush.msra.mxu0 0.0
    %3420 = vmatpush.msra.mxu0 0.0
    %3421 = vmatpush.msra.mxu0 0.0
    %3422 = vmatpush.msra.mxu0 0.0
    %3423 = vmatpush.msra.mxu0 0.0
    %3424 = vmatpush.msra.mxu0 0.0
    %3425 = vmatpush.msra.mxu0 0.0
    %3426 = vmatpush.msra.mxu0 0.0
    %3427 = vmatpush.msra.mxu0 %v3391
    %3428 = vmatpush.msra.mxu0 %v3389
    %3429 = vmatpush.msra.mxu0 %v3387
    %3430 = vmatpush.msra.mxu0 %v3385
    %3431 = vmatmul.f32.gmra.mxu0 %v3393
    %v3432 = vpop.f32.mrf.mxu0
    %v3433 = vadd.f32 0.0, %v3432
    %3434 = vdwg.mxu0
    %v3435 = vperm.slane %v3413, 0
    %v3436 = vperm.slane %v3433, 0
    %v3437 = vmul.f32 %v3228, %v3435
    %v3438 = vmul.f32 %v3242, %v3436
    %v3439 = vmul.f32 %v3230, %v3435
    %v3440 = vmul.f32 %v3244, %v3436
    %v3441 = vperm.slane %v3413, 1
    %v3442 = vperm.slane %v3433, 1
    %v3443 = vadd.f32 %v3437, %v3441
    %v3444 = vadd.f32 %v3438, %v3442
    %v3445 = vadd.f32 %v3439, %v3441
    %v3446 = vadd.f32 %v3440, %v3442
    %v3447 = vtanh.pop %v3443
    %v3448 = vtanh.pop %v3444
    %v3449 = vtanh.pop %v3445
    %v3450 = vtanh.pop %v3446
    %3451 = vst [vmem:[%s10] sm:$0xff] %v3447
    %3452 = vst [vmem:[%s10 + $0x8] sm:$0xff] %v3448
    %3453 = vst [vmem:[%s10 + $0x10] sm:$0xff] %v3449
    %3454 = vst [vmem:[%s10 + $0x18] sm:$0xff] %v3450
    // Predicated region
    $region62: #{encode_block_forward.1} parent=1 // pred_check
      _
    $region63: #{encode_block_forward.1} parent=1 // pred_check_branch
      %3456 = sbr.rel (0) target = $region65
    $region64: #{encode_block_forward.1} parent=1 // pred_region
      _
    $region65: #{encode_block_forward.1} parent=1 // pred_fallthru
      _
    // Predicated region
    $region66: #{encode_block_forward.1} parent=1 // pred_check
      _
    $region67: #{encode_block_forward.1} parent=1 // pred_check_branch
      %3458 = sbr.rel (0) target = $region69
    $region68: #{encode_block_forward.1} parent=1 // pred_region
      _
    $region69: #{encode_block_forward.1} parent=1 // pred_fallthru
      _
    %3459 = vsyncpa [#allocation3], 1
    %3460 = vsyncpa [#allocation5], 1
    %3461 = vsyncpa [#allocation8], 1

</llo_original>
